<compile_context>
chip_gen: v5e
topology: v5e:2x2
jax: 0.10.0
libtpu: 0.0.40
codegen_flags: <defaults>
</compile_context>

<pallas_src>
import functools

import jax
import jax.numpy as jnp
from jax.experimental import pallas as pl
from jax.experimental.pallas import tpu as pltpu

SELU_ALPHA = 1.6732632423543772
SELU_SCALE = 1.0507009873554805


def _round_up(x, m):
    return ((x + m - 1) // m) * m


def _selu(x):
    # SELU exactly as torch.nn.functional.selu.  Overflow-safe: for x >= 0 the
    # exp branch is clamped away by the min with 0.
    return SELU_SCALE * (
        jnp.maximum(x, 0.0) + jnp.minimum(SELU_ALPHA * (jnp.exp(x) - 1.0), 0.0)
    )


def width_mlp_kernel(x_ref, w1_ref, b1_ref, w2_ref, b2_ref, w3_ref, b3_ref, o_ref):
    x = x_ref[...]                                                      # (TB, S_pad)
    h1 = jnp.dot(x, w1_ref[...], preferred_element_type=jnp.float32)   # (TB, H_pad)
    h1 = _selu(h1 + b1_ref[...])
    h2 = jnp.dot(h1, w2_ref[...], preferred_element_type=jnp.float32)  # (TB, H_pad)
    h2 = _selu(h2 + b2_ref[...])
    h3 = jnp.dot(h2, w3_ref[...], preferred_element_type=jnp.float32)  # (TB, S_pad)
    h3 = h3 + b3_ref[...]
    o_ref[...] = jax.nn.sigmoid(h3).astype(o_ref.dtype)


@functools.partial(jax.jit, static_argnames=("num_strokes",))
def width_mlp_forward(widths, padded_params, *, num_strokes):
    """widths: (batch, num_strokes) float32. padded_params: lane-aligned params."""
    w1 = padded_params["w1"]
    b1 = padded_params["b1"]
    w2 = padded_params["w2"]
    b2 = padded_params["b2"]
    w3 = padded_params["w3"]
    b3 = padded_params["b3"]

    batch = widths.shape[0]
    s_pad = w1.shape[0]           # padded num_strokes (lane-aligned, >= 128)

    # Batch tile: fill the MXU M dimension when batch is large, but never
    # below the 8-sublane minimum; pad batch up to a tile multiple.
    tb = min(256, _round_up(batch, 8))
    b_pad = _round_up(batch, tb)

    x = widths
    if (b_pad, s_pad) != widths.shape:
        x = jnp.zeros((b_pad, s_pad), widths.dtype)
        x = x.at[:batch, :num_strokes].set(widths)

    def resident(arr):
        # Full-array block with a constant block index -> DMA'd once, stays
        # resident in VMEM across the whole grid.
        return pl.BlockSpec(arr.shape, lambda i: (0, 0))

    out = pl.pallas_call(
        width_mlp_kernel,
        out_shape=jax.ShapeDtypeStruct((b_pad, s_pad), jnp.float32),
        grid_spec=pltpu.PrefetchScalarGridSpec(
            num_scalar_prefetch=0,
            grid=(b_pad // tb,),
            in_specs=[
                pl.BlockSpec((tb, s_pad), lambda i: (i, 0)),   # x tile (pipelined)
                resident(w1), resident(b1),
                resident(w2), resident(b2),
                resident(w3), resident(b3),
            ],
            out_specs=pl.BlockSpec((tb, s_pad), lambda i: (i, 0)),
        ),
        compiler_params=pltpu.CompilerParams(
            dimension_semantics=("parallel",),        # shards across v7x's 2 TCs
            vmem_limit_bytes=32 << 20,                # within v7x 64 MiB physical
        ),
    )(x, w1, b1, w2, b2, w3, b3)

    return out[:batch, :num_strokes]


def init_params(key, num_strokes, outdim=1000):
    """Deterministic synthetic parameters (not a checkpoint load)."""
    k1, k2, k3, k4, k5, k6 = jax.random.split(key, 6)
    scale1 = 1.0 / jnp.sqrt(num_strokes)
    scale2 = 1.0 / jnp.sqrt(outdim)
    return {
        # weights stored as (in_features, out_features)
        "w1": jax.random.uniform(k1, (num_strokes, outdim), jnp.float32,
                                 -scale1, scale1),
        "b1": jax.random.uniform(k2, (1, outdim), jnp.float32, -scale1, scale1),
        "w2": jax.random.uniform(k3, (outdim, outdim), jnp.float32,
                                 -scale2, scale2),
        "b2": jax.random.uniform(k4, (1, outdim), jnp.float32, -scale2, scale2),
        "w3": jax.random.uniform(k5, (outdim, num_strokes), jnp.float32,
                                 -scale2, scale2),
        "b3": jax.random.uniform(k6, (1, num_strokes), jnp.float32,
                                 -scale2, scale2),
    }


def pad_params(params, num_strokes, outdim=1000):
    """One-time zero-padding of params to lane-aligned shapes.

    num_strokes -> ceil128 (>= 128), hidden 1000 -> 1024.  Zero padding is
    exact for this network: SELU(0) = 0, and padded output columns are sliced
    off after the kernel.
    """
    s_pad = _round_up(max(num_strokes, 128), 128)
    h_pad = _round_up(outdim, 128)

    def pad2(a, rows, cols):
        out = jnp.zeros((rows, cols), a.dtype)
        return out.at[: a.shape[0], : a.shape[1]].set(a)

    return {
        "w1": pad2(params["w1"], s_pad, h_pad),
        "b1": pad2(params["b1"], 1, h_pad),
        "w2": pad2(params["w2"], h_pad, h_pad),
        "b2": pad2(params["b2"], 1, h_pad),
        "w3": pad2(params["w3"], h_pad, s_pad),
        "b3": pad2(params["b3"], 1, s_pad),
    }


def reference_forward(widths, params):
    h1 = jax.nn.selu(widths @ params["w1"] + params["b1"])
    h2 = jax.nn.selu(h1 @ params["w2"] + params["b2"])
    return jax.nn.sigmoid(h2 @ params["w3"] + params["b3"])


if __name__ == "__main__":
    num_strokes = 8      # small, consistent with the module's num_strokes arg
    batch = 2
    key = jax.random.PRNGKey(0)
    pkey, xkey = jax.random.split(key)

    params = init_params(pkey, num_strokes)
    padded = pad_params(params, num_strokes)          # done once, not per call
    widths = jax.random.uniform(xkey, (batch, num_strokes), jnp.float32)

    out = width_mlp_forward(widths, padded, num_strokes=num_strokes)
    out = jax.block_until_ready(out)

    ref = reference_forward(widths, params)
    assert out.shape == (batch, num_strokes)
    # Tolerance accounts for possible MXU f32 pass-count differences between
    # the Pallas kernel and the XLA reference over a 1000-wide contraction.
    assert jnp.allclose(out, ref, atol=2e-3, rtol=2e-3), "mismatch vs JAX reference"
    print("KERNEL_OK")
</pallas_src>

<mosaic_0001>
module attributes {stable_mosaic.version = 11 : i64} {
  func.func @width_mlp_kernel(%arg0: i32, %arg1: memref<8x128xf32, #tpu.memory_space<vmem>>, %arg2: memref<128x1024xf32, #tpu.memory_space<vmem>>, %arg3: memref<1x1024xf32, #tpu.memory_space<vmem>>, %arg4: memref<1024x1024xf32, #tpu.memory_space<vmem>>, %arg5: memref<1x1024xf32, #tpu.memory_space<vmem>>, %arg6: memref<1024x128xf32, #tpu.memory_space<vmem>>, %arg7: memref<1x128xf32, #tpu.memory_space<vmem>>, %arg8: memref<8x128xf32, #tpu.memory_space<vmem>>) attributes {dimension_semantics = [#tpu.dimension_semantics<parallel>], iteration_bounds = array<i64: 1>, scalar_prefetch = 0 : i64, scratch_operands = 0 : i64, tpu.core_type = #tpu.core_type<tc>, window_params = [{transform_indices = @transform_0, window_bounds = array<i64: 8, 128>}, {pipeline_mode = #tpu.pipeline_mode<synchronous>, transform_indices = @transform_1, window_bounds = array<i64: 128, 1024>}, {pipeline_mode = #tpu.pipeline_mode<synchronous>, transform_indices = @transform_2, window_bounds = array<i64: 1, 1024>}, {pipeline_mode = #tpu.pipeline_mode<synchronous>, transform_indices = @transform_3, window_bounds = array<i64: 1024, 1024>}, {pipeline_mode = #tpu.pipeline_mode<synchronous>, transform_indices = @transform_4, window_bounds = array<i64: 1, 1024>}, {pipeline_mode = #tpu.pipeline_mode<synchronous>, transform_indices = @transform_5, window_bounds = array<i64: 1024, 128>}, {pipeline_mode = #tpu.pipeline_mode<synchronous>, transform_indices = @transform_6, window_bounds = array<i64: 1, 128>}, {transform_indices = @transform_7, window_bounds = array<i64: 8, 128>}]} {
    %c0 = arith.constant 0 : index
    %c0_0 = arith.constant 0 : index
    %0 = vector.load %arg1[%c0, %c0_0] : memref<8x128xf32, #tpu.memory_space<vmem>>, vector<8x128xf32>
    %c0_1 = arith.constant 0 : index
    %c0_2 = arith.constant 0 : index
    %1 = vector.load %arg2[%c0_1, %c0_2] : memref<128x1024xf32, #tpu.memory_space<vmem>>, vector<128x1024xf32>
    %cst = arith.constant dense<0.000000e+00> : vector<8x1024xf32>
    %2 = tpu.matmul %0, %1, %cst {dimension_numbers = #tpu.dot_dimension_numbers<[1], [0], [0], [1], [0, 0, 1, 1], [], []>} : vector<8x128xf32>, vector<128x1024xf32>, vector<8x1024xf32> -> vector<8x1024xf32>
    %c0_3 = arith.constant 0 : index
    %c0_4 = arith.constant 0 : index
    %3 = vector.load %arg3[%c0_3, %c0_4] : memref<1x1024xf32, #tpu.memory_space<vmem>>, vector<1x1024xf32>
    %4 = vector.broadcast %3 : vector<1x1024xf32> to vector<8x1024xf32>
    %5 = arith.addf %2, %4 : vector<8x1024xf32>
    %cst_5 = arith.constant 0.000000e+00 : f32
    %6 = vector.broadcast %cst_5 : f32 to vector<8x1024xf32>
    %7 = arith.maximumf %5, %6 : vector<8x1024xf32>
    %8 = math.exp %5 : vector<8x1024xf32>
    %cst_6 = arith.constant 1.000000e+00 : f32
    %9 = vector.broadcast %cst_6 : f32 to vector<8x1024xf32>
    %10 = arith.subf %8, %9 : vector<8x1024xf32>
    %cst_7 = arith.constant 1.67326319 : f32
    %11 = vector.broadcast %cst_7 : f32 to vector<8x1024xf32>
    %12 = arith.mulf %11, %10 : vector<8x1024xf32>
    %cst_8 = arith.constant 0.000000e+00 : f32
    %13 = vector.broadcast %cst_8 : f32 to vector<8x1024xf32>
    %14 = arith.minimumf %12, %13 : vector<8x1024xf32>
    %15 = arith.addf %7, %14 : vector<8x1024xf32>
    %cst_9 = arith.constant 1.05070102 : f32
    %16 = vector.broadcast %cst_9 : f32 to vector<8x1024xf32>
    %17 = arith.mulf %16, %15 : vector<8x1024xf32>
    %c0_10 = arith.constant 0 : index
    %c0_11 = arith.constant 0 : index
    %18 = vector.load %arg4[%c0_10, %c0_11] : memref<1024x1024xf32, #tpu.memory_space<vmem>>, vector<1024x1024xf32>
    %cst_12 = arith.constant dense<0.000000e+00> : vector<8x1024xf32>
    %19 = tpu.matmul %17, %18, %cst_12 {dimension_numbers = #tpu.dot_dimension_numbers<[1], [0], [0], [1], [0, 0, 1, 1], [], []>} : vector<8x1024xf32>, vector<1024x1024xf32>, vector<8x1024xf32> -> vector<8x1024xf32>
    %c0_13 = arith.constant 0 : index
    %c0_14 = arith.constant 0 : index
    %20 = vector.load %arg5[%c0_13, %c0_14] : memref<1x1024xf32, #tpu.memory_space<vmem>>, vector<1x1024xf32>
    %21 = vector.broadcast %20 : vector<1x1024xf32> to vector<8x1024xf32>
    %22 = arith.addf %19, %21 : vector<8x1024xf32>
    %cst_15 = arith.constant 0.000000e+00 : f32
    %23 = vector.broadcast %cst_15 : f32 to vector<8x1024xf32>
    %24 = arith.maximumf %22, %23 : vector<8x1024xf32>
    %25 = math.exp %22 : vector<8x1024xf32>
    %cst_16 = arith.constant 1.000000e+00 : f32
    %26 = vector.broadcast %cst_16 : f32 to vector<8x1024xf32>
    %27 = arith.subf %25, %26 : vector<8x1024xf32>
    %cst_17 = arith.constant 1.67326319 : f32
    %28 = vector.broadcast %cst_17 : f32 to vector<8x1024xf32>
    %29 = arith.mulf %28, %27 : vector<8x1024xf32>
    %cst_18 = arith.constant 0.000000e+00 : f32
    %30 = vector.broadcast %cst_18 : f32 to vector<8x1024xf32>
    %31 = arith.minimumf %29, %30 : vector<8x1024xf32>
    %32 = arith.addf %24, %31 : vector<8x1024xf32>
    %cst_19 = arith.constant 1.05070102 : f32
    %33 = vector.broadcast %cst_19 : f32 to vector<8x1024xf32>
    %34 = arith.mulf %33, %32 : vector<8x1024xf32>
    %c0_20 = arith.constant 0 : index
    %c0_21 = arith.constant 0 : index
    %35 = vector.load %arg6[%c0_20, %c0_21] : memref<1024x128xf32, #tpu.memory_space<vmem>>, vector<1024x128xf32>
    %cst_22 = arith.constant dense<0.000000e+00> : vector<8x128xf32>
    %36 = tpu.matmul %34, %35, %cst_22 {dimension_numbers = #tpu.dot_dimension_numbers<[1], [0], [0], [1], [0, 0, 1, 1], [], []>} : vector<8x1024xf32>, vector<1024x128xf32>, vector<8x128xf32> -> vector<8x128xf32>
    %c0_23 = arith.constant 0 : index
    %c0_24 = arith.constant 0 : index
    %37 = vector.load %arg7[%c0_23, %c0_24] : memref<1x128xf32, #tpu.memory_space<vmem>>, vector<1x128xf32>
    %38 = vector.broadcast %37 : vector<1x128xf32> to vector<8x128xf32>
    %39 = arith.addf %36, %38 : vector<8x128xf32>
    %40 = arith.negf %39 : vector<8x128xf32>
    %41 = math.exp %40 : vector<8x128xf32>
    %cst_25 = arith.constant 1.000000e+00 : f32
    %42 = vector.broadcast %cst_25 : f32 to vector<8x128xf32>
    %43 = arith.addf %42, %41 : vector<8x128xf32>
    %44 = arith.divf %42, %43 : vector<8x128xf32>
    %c0_26 = arith.constant 0 : index
    %c0_27 = arith.constant 0 : index
    %45 = vector.load %arg8[%c0_26, %c0_27] : memref<8x128xf32, #tpu.memory_space<vmem>>, vector<8x128xf32>
    tpu.vector_store %arg8[%c0_26, %c0_27], %44 {strides = array<i32>} : memref<8x128xf32, #tpu.memory_space<vmem>>, vector<8x128xf32>,
    return
  }
  func.func @transform_0(%arg0: i32) -> (i32, i32) {
    %c0_i32 = arith.constant 0 : i32
    %c0_i32_0 = arith.constant 0 : i32
    return %arg0, %c0_i32 : i32, i32
  }
  func.func @transform_1(%arg0: i32) -> (i32, i32) {
    %c0_i32 = arith.constant 0 : i32
    %c0_i32_0 = arith.constant 0 : i32
    %c0_i32_1 = arith.constant 0 : i32
    return %c0_i32, %c0_i32_0 : i32, i32
  }
  func.func @transform_2(%arg0: i32) -> (i32, i32) {
    %c0_i32 = arith.constant 0 : i32
    %c0_i32_0 = arith.constant 0 : i32
    %c0_i32_1 = arith.constant 0 : i32
    return %c0_i32, %c0_i32_0 : i32, i32
  }
  func.func @transform_3(%arg0: i32) -> (i32, i32) {
    %c0_i32 = arith.constant 0 : i32
    %c0_i32_0 = arith.constant 0 : i32
    %c0_i32_1 = arith.constant 0 : i32
    return %c0_i32, %c0_i32_0 : i32, i32
  }
  func.func @transform_4(%arg0: i32) -> (i32, i32) {
    %c0_i32 = arith.constant 0 : i32
    %c0_i32_0 = arith.constant 0 : i32
    %c0_i32_1 = arith.constant 0 : i32
    return %c0_i32, %c0_i32_0 : i32, i32
  }
  func.func @transform_5(%arg0: i32) -> (i32, i32) {
    %c0_i32 = arith.constant 0 : i32
    %c0_i32_0 = arith.constant 0 : i32
    %c0_i32_1 = arith.constant 0 : i32
    return %c0_i32, %c0_i32_0 : i32, i32
  }
  func.func @transform_6(%arg0: i32) -> (i32, i32) {
    %c0_i32 = arith.constant 0 : i32
    %c0_i32_0 = arith.constant 0 : i32
    %c0_i32_1 = arith.constant 0 : i32
    return %c0_i32, %c0_i32_0 : i32, i32
  }
  func.func @transform_7(%arg0: i32) -> (i32, i32) {
    %c0_i32 = arith.constant 0 : i32
    %c0_i32_0 = arith.constant 0 : i32
    return %arg0, %c0_i32 : i32, i32
  }
}

</mosaic_0001>

<llo_original>
// kernel: width_mlp_forward.1
$region0: #{width_mlp_forward.1}
  #allocation0 [shape = 'u32[]', space=smem, size = 0x4, offset = 0x4, fixed_abs, tag = 'smem constant byte address 0x4 - core index']
  #allocation1 [shape = 'u32[72,128]{1,0:T(1,128)}', space=vmem, size = 0x9000, scoped, tag = 'internal scratch']
  %s0 = inlined_call_operand.vmem [shape: f32[8,128], index: 0, kind: input, shape index: {}]
  %s1 = inlined_call_operand.hbm [shape: f32[128,1024], index: 1, kind: input, shape index: {}]
  %s2 = inlined_call_operand.hbm [shape: f32[1,1024], index: 2, kind: input, shape index: {}]
  %s3 = inlined_call_operand.hbm [shape: f32[1024,1024], index: 3, kind: input, shape index: {}]
  %s4 = inlined_call_operand.hbm [shape: f32[1,1024], index: 4, kind: input, shape index: {}]
  %s5 = inlined_call_operand.hbm [shape: f32[1024,128], index: 5, kind: input, shape index: {}]
  %s6 = inlined_call_operand.hbm [shape: f32[1,128], index: 6, kind: input, shape index: {}]
  %s7 = inlined_call_operand.vmem [shape: f32[8,128], index: 7, kind: output, shape index: {}]
  %s8 = sld [smem:[#allocation0]]
  $region62: #{width_mlp_forward.1} parent=0
    _
  %s10 = ssub.s32 1, %s8
  %s11 = scalar_select 0, %s10, %s8
  $region1: #{width_mlp_forward.1} parent=0
    #allocation2 [shape = 'u8[524288]{0}', space=vmem, size = 0x80000, scoped, tag = 'input window, operand 1, single buffered']
    #allocation3 [shape = 's32[1]{0}', space=sflag, size = 0x4, scoped, tag = 'scoped memory for width_mlp_forward.1']
    #allocation4 [shape = 'u8[4096]{0}', space=vmem, size = 0x1000, scoped, tag = 'input window, operand 2, single buffered']
    #allocation5 [shape = 's32[1]{0}', space=sflag, size = 0x4, scoped, tag = 'scoped memory for width_mlp_forward.1']
    #allocation6 [shape = 'u8[4194304]{0}', space=vmem, size = 0x400000, scoped, tag = 'input window, operand 3, single buffered']
    #allocation7 [shape = 'u8[4096]{0}', space=vmem, size = 0x1000, scoped, tag = 'input window, operand 4, single buffered']
    #allocation8 [shape = 's32[1]{0}', space=sflag, size = 0x4, scoped, tag = 'scoped memory for width_mlp_forward.1']
    #allocation9 [shape = 'u8[524288]{0}', space=vmem, size = 0x80000, scoped, tag = 'input window, operand 5, single buffered']
    #allocation10 [shape = 'u8[512]{0}', space=vmem, size = 0x400, scoped, tag = 'input window, operand 6, single buffered']
    #allocation11 [shape = 's32[1]{0}', space=sflag, size = 0x4, scoped, tag = 'scoped memory for width_mlp_forward.1']
    %12 = vsyncpa [#allocation3], 0
    %13 = vsyncpa [#allocation5], 0
    %14 = vsyncpa [#allocation8], 0
    %15 = vsyncpa [#allocation11], 0
    // Predicated region
    $region2: #{width_mlp_forward.1} parent=1 // pred_check
      _
    $region3: #{width_mlp_forward.1} parent=1 // pred_check_branch
      %17 = sbr.rel (0) target = $region5
    $region4: #{width_mlp_forward.1} parent=1 // pred_region
      _
    $region5: #{width_mlp_forward.1} parent=1 // pred_fallthru
      _
    // Predicated region
    $region6: #{width_mlp_forward.1} parent=1 // pred_check
      _
    $region7: #{width_mlp_forward.1} parent=1 // pred_check_branch
      %19 = sbr.rel (0) target = $region9
    $region8: #{width_mlp_forward.1} parent=1 // pred_region
      %21 = vsyncadd [#allocation3], 0
      %s22 = sshll.u32 %s1, 4
      %s23 = int_to_ptr.hbm [resolvable:$true] %s22
      %s24 = sshll.u32 [#allocation2], 4
      %s25 = int_to_ptr.vmem [resolvable:$true] %s24
      %30 = dma.hbm_to_vmem [thread:$0]  %s23, 16384, %s25, [#allocation3], 1024, 1024, 64
    $region9: #{width_mlp_forward.1} parent=1 // pred_fallthru
      _
    // Predicated region
    $region10: #{width_mlp_forward.1} parent=1 // pred_check
      _
    $region11: #{width_mlp_forward.1} parent=1 // pred_check_branch
      %32 = sbr.rel (0) target = $region13
    $region12: #{width_mlp_forward.1} parent=1 // pred_region
      %34 = vsyncadd [#allocation5], 0
      %s36 = sshll.u32 %s2, 4
      %s37 = int_to_ptr.hbm [resolvable:$true] %s36
      %s38 = sshll.u32 [#allocation4], 4
      %s39 = int_to_ptr.vmem [resolvable:$true] %s38
      %41 = dma.hbm_to_vmem [thread:$0]  %s37, 128, %s39, [#allocation5]
    $region13: #{width_mlp_forward.1} parent=1 // pred_fallthru
      _
    // Predicated region
    $region14: #{width_mlp_forward.1} parent=1 // pred_check
      _
    $region15: #{width_mlp_forward.1} parent=1 // pred_check_branch
      %43 = sbr.rel (0) target = $region17
    $region16: #{width_mlp_forward.1} parent=1 // pred_region
      %45 = vsyncadd [#allocation5], 0
      %s46 = sshll.u32 %s3, 4
      %s47 = int_to_ptr.hbm [resolvable:$true] %s46
      %s48 = sshll.u32 [#allocation6], 4
      %s49 = int_to_ptr.vmem [resolvable:$true] %s48
      %54 = dma.hbm_to_vmem [thread:$0]  %s47, 131072, %s49, [#allocation5], 1024, 1024, 64
    $region17: #{width_mlp_forward.1} parent=1 // pred_fallthru
      _
    // Predicated region
    $region18: #{width_mlp_forward.1} parent=1 // pred_check
      _
    $region19: #{width_mlp_forward.1} parent=1 // pred_check_branch
      %56 = sbr.rel (0) target = $region21
    $region20: #{width_mlp_forward.1} parent=1 // pred_region
      %58 = vsyncadd [#allocation8], 0
      %s60 = sshll.u32 %s4, 4
      %s61 = int_to_ptr.hbm [resolvable:$true] %s60
      %s62 = sshll.u32 [#allocation7], 4
      %s63 = int_to_ptr.vmem [resolvable:$true] %s62
      %65 = dma.hbm_to_vmem [thread:$0]  %s61, 128, %s63, [#allocation8]
    $region21: #{width_mlp_forward.1} parent=1 // pred_fallthru
      _
    // Predicated region
    $region22: #{width_mlp_forward.1} parent=1 // pred_check
      _
    $region23: #{width_mlp_forward.1} parent=1 // pred_check_branch
      %67 = sbr.rel (0) target = $region25
    $region24: #{width_mlp_forward.1} parent=1 // pred_region
      %69 = vsyncadd [#allocation8], 0
      %s70 = sshll.u32 %s5, 4
      %s71 = int_to_ptr.hbm [resolvable:$true] %s70
      %s72 = sshll.u32 [#allocation9], 4
      %s73 = int_to_ptr.vmem [resolvable:$true] %s72
      %78 = dma.hbm_to_vmem [thread:$0]  %s71, 16384, %s73, [#allocation8], 128, 128, 8
    $region25: #{width_mlp_forward.1} parent=1 // pred_fallthru
      _
    // Predicated region
    $region26: #{width_mlp_forward.1} parent=1 // pred_check
      _
    $region27: #{width_mlp_forward.1} parent=1 // pred_check_branch
      %80 = sbr.rel (0) target = $region29
    $region28: #{width_mlp_forward.1} parent=1 // pred_region
      %82 = vsyncadd [#allocation11], 0
      %s84 = sshll.u32 %s6, 4
      %s85 = int_to_ptr.hbm [resolvable:$true] %s84
      %s86 = sshll.u32 [#allocation10], 4
      %s87 = int_to_ptr.vmem [resolvable:$true] %s86
      %89 = dma.hbm_to_vmem [thread:$0]  %s85, 16, %s87, [#allocation11]
    $region29: #{width_mlp_forward.1} parent=1 // pred_fallthru
      _
    // Predicated region
    $region30: #{width_mlp_forward.1} parent=1 // pred_check
      _
    $region31: #{width_mlp_forward.1} parent=1 // pred_check_branch
      %91 = sbr.rel (0) target = $region33
    $region32: #{width_mlp_forward.1} parent=1 // pred_region
      %93 = dma.done [#allocation3], 16384
    $region33: #{width_mlp_forward.1} parent=1 // pred_fallthru
      _
    // Predicated region
    $region34: #{width_mlp_forward.1} parent=1 // pred_check
      _
    $region35: #{width_mlp_forward.1} parent=1 // pred_check_branch
      %95 = sbr.rel (0) target = $region37
    $region36: #{width_mlp_forward.1} parent=1 // pred_region
      %97 = dma.done [#allocation5], 128
    $region37: #{width_mlp_forward.1} parent=1 // pred_fallthru
      _
    // Predicated region
    $region38: #{width_mlp_forward.1} parent=1 // pred_check
      _
    $region39: #{width_mlp_forward.1} parent=1 // pred_check_branch
      %99 = sbr.rel (0) target = $region41
    $region40: #{width_mlp_forward.1} parent=1 // pred_region
      %101 = dma.done [#allocation5], 131072
    $region41: #{width_mlp_forward.1} parent=1 // pred_fallthru
      _
    // Predicated region
    $region42: #{width_mlp_forward.1} parent=1 // pred_check
      _
    $region43: #{width_mlp_forward.1} parent=1 // pred_check_branch
      %103 = sbr.rel (0) target = $region45
    $region44: #{width_mlp_forward.1} parent=1 // pred_region
      %105 = dma.done [#allocation8], 128
    $region45: #{width_mlp_forward.1} parent=1 // pred_fallthru
      _
    // Predicated region
    $region46: #{width_mlp_forward.1} parent=1 // pred_check
      _
    $region47: #{width_mlp_forward.1} parent=1 // pred_check_branch
      %107 = sbr.rel (0) target = $region49
    $region48: #{width_mlp_forward.1} parent=1 // pred_region
      %109 = dma.done [#allocation8], 16384
    $region49: #{width_mlp_forward.1} parent=1 // pred_fallthru
      _
    // Predicated region
    $region50: #{width_mlp_forward.1} parent=1 // pred_check
      _
    $region51: #{width_mlp_forward.1} parent=1 // pred_check_branch
      %111 = sbr.rel (0) target = $region53
    $region52: #{width_mlp_forward.1} parent=1 // pred_region
      %113 = dma.done [#allocation11], 16
    $region53: #{width_mlp_forward.1} parent=1 // pred_fallthru
      _
    %v114 = vld [vmem:[%s0] sm:$0xff]
    %v115 = vld [vmem:[#allocation2] sm:$0xff]
    %v116 = vld [vmem:[#allocation2 + $0x8] sm:$0xff]
    %v117 = vld [vmem:[#allocation2 + $0x10] sm:$0xff]
    %v118 = vld [vmem:[#allocation2 + $0x18] sm:$0xff]
    %v119 = vld [vmem:[#allocation2 + $0x20] sm:$0xff]
    %v120 = vld [vmem:[#allocation2 + $0x28] sm:$0xff]
    %v121 = vld [vmem:[#allocation2 + $0x30] sm:$0xff]
    %v122 = vld [vmem:[#allocation2 + $0x38] sm:$0xff]
    %v123 = vld [vmem:[#allocation2 + $0x40] sm:$0xff]
    %v124 = vld [vmem:[#allocation2 + $0x48] sm:$0xff]
    %v125 = vld [vmem:[#allocation2 + $0x50] sm:$0xff]
    %v126 = vld [vmem:[#allocation2 + $0x58] sm:$0xff]
    %v127 = vld [vmem:[#allocation2 + $0x60] sm:$0xff]
    %v128 = vld [vmem:[#allocation2 + $0x68] sm:$0xff]
    %v129 = vld [vmem:[#allocation2 + $0x70] sm:$0xff]
    %v130 = vld [vmem:[#allocation2 + $0x78] sm:$0xff]
    %v131 = vld [vmem:[#allocation2 + $0x80] sm:$0xff]
    %v132 = vld [vmem:[#allocation2 + $0x88] sm:$0xff]
    %v133 = vld [vmem:[#allocation2 + $0x90] sm:$0xff]
    %v134 = vld [vmem:[#allocation2 + $0x98] sm:$0xff]
    %v135 = vld [vmem:[#allocation2 + $0xa0] sm:$0xff]
    %v136 = vld [vmem:[#allocation2 + $0xa8] sm:$0xff]
    %v137 = vld [vmem:[#allocation2 + $0xb0] sm:$0xff]
    %v138 = vld [vmem:[#allocation2 + $0xb8] sm:$0xff]
    %v139 = vld [vmem:[#allocation2 + $0xc0] sm:$0xff]
    %v140 = vld [vmem:[#allocation2 + $0xc8] sm:$0xff]
    %v141 = vld [vmem:[#allocation2 + $0xd0] sm:$0xff]
    %v142 = vld [vmem:[#allocation2 + $0xd8] sm:$0xff]
    %v143 = vld [vmem:[#allocation2 + $0xe0] sm:$0xff]
    %v144 = vld [vmem:[#allocation2 + $0xe8] sm:$0xff]
    %v145 = vld [vmem:[#allocation2 + $0xf0] sm:$0xff]
    %v146 = vld [vmem:[#allocation2 + $0xf8] sm:$0xff]
    %v147 = vld [vmem:[#allocation2 + $0x100] sm:$0xff]
    %v148 = vld [vmem:[#allocation2 + $0x108] sm:$0xff]
    %v149 = vld [vmem:[#allocation2 + $0x110] sm:$0xff]
    %v150 = vld [vmem:[#allocation2 + $0x118] sm:$0xff]
    %v151 = vld [vmem:[#allocation2 + $0x120] sm:$0xff]
    %v152 = vld [vmem:[#allocation2 + $0x128] sm:$0xff]
    %v153 = vld [vmem:[#allocation2 + $0x130] sm:$0xff]
    %v154 = vld [vmem:[#allocation2 + $0x138] sm:$0xff]
    %v155 = vld [vmem:[#allocation2 + $0x140] sm:$0xff]
    %v156 = vld [vmem:[#allocation2 + $0x148] sm:$0xff]
    %v157 = vld [vmem:[#allocation2 + $0x150] sm:$0xff]
    %v158 = vld [vmem:[#allocation2 + $0x158] sm:$0xff]
    %v159 = vld [vmem:[#allocation2 + $0x160] sm:$0xff]
    %v160 = vld [vmem:[#allocation2 + $0x168] sm:$0xff]
    %v161 = vld [vmem:[#allocation2 + $0x170] sm:$0xff]
    %v162 = vld [vmem:[#allocation2 + $0x178] sm:$0xff]
    %v163 = vld [vmem:[#allocation2 + $0x180] sm:$0xff]
    %v164 = vld [vmem:[#allocation2 + $0x188] sm:$0xff]
    %v165 = vld [vmem:[#allocation2 + $0x190] sm:$0xff]
    %v166 = vld [vmem:[#allocation2 + $0x198] sm:$0xff]
    %v167 = vld [vmem:[#allocation2 + $0x1a0] sm:$0xff]
    %v168 = vld [vmem:[#allocation2 + $0x1a8] sm:$0xff]
    %v169 = vld [vmem:[#allocation2 + $0x1b0] sm:$0xff]
    %v170 = vld [vmem:[#allocation2 + $0x1b8] sm:$0xff]
    %v171 = vld [vmem:[#allocation2 + $0x1c0] sm:$0xff]
    %v172 = vld [vmem:[#allocation2 + $0x1c8] sm:$0xff]
    %v173 = vld [vmem:[#allocation2 + $0x1d0] sm:$0xff]
    %v174 = vld [vmem:[#allocation2 + $0x1d8] sm:$0xff]
    %v175 = vld [vmem:[#allocation2 + $0x1e0] sm:$0xff]
    %v176 = vld [vmem:[#allocation2 + $0x1e8] sm:$0xff]
    %v177 = vld [vmem:[#allocation2 + $0x1f0] sm:$0xff]
    %v178 = vld [vmem:[#allocation2 + $0x1f8] sm:$0xff]
    %v179 = vld [vmem:[#allocation2 + $0x200] sm:$0xff]
    %v180 = vld [vmem:[#allocation2 + $0x208] sm:$0xff]
    %v181 = vld [vmem:[#allocation2 + $0x210] sm:$0xff]
    %v182 = vld [vmem:[#allocation2 + $0x218] sm:$0xff]
    %v183 = vld [vmem:[#allocation2 + $0x220] sm:$0xff]
    %v184 = vld [vmem:[#allocation2 + $0x228] sm:$0xff]
    %v185 = vld [vmem:[#allocation2 + $0x230] sm:$0xff]
    %v186 = vld [vmem:[#allocation2 + $0x238] sm:$0xff]
    %v187 = vld [vmem:[#allocation2 + $0x240] sm:$0xff]
    %v188 = vld [vmem:[#allocation2 + $0x248] sm:$0xff]
    %v189 = vld [vmem:[#allocation2 + $0x250] sm:$0xff]
    %v190 = vld [vmem:[#allocation2 + $0x258] sm:$0xff]
    %v191 = vld [vmem:[#allocation2 + $0x260] sm:$0xff]
    %v192 = vld [vmem:[#allocation2 + $0x268] sm:$0xff]
    %v193 = vld [vmem:[#allocation2 + $0x270] sm:$0xff]
    %v194 = vld [vmem:[#allocation2 + $0x278] sm:$0xff]
    %v195 = vld [vmem:[#allocation2 + $0x280] sm:$0xff]
    %v196 = vld [vmem:[#allocation2 + $0x288] sm:$0xff]
    %v197 = vld [vmem:[#allocation2 + $0x290] sm:$0xff]
    %v198 = vld [vmem:[#allocation2 + $0x298] sm:$0xff]
    %v199 = vld [vmem:[#allocation2 + $0x2a0] sm:$0xff]
    %v200 = vld [vmem:[#allocation2 + $0x2a8] sm:$0xff]
    %v201 = vld [vmem:[#allocation2 + $0x2b0] sm:$0xff]
    %v202 = vld [vmem:[#allocation2 + $0x2b8] sm:$0xff]
    %v203 = vld [vmem:[#allocation2 + $0x2c0] sm:$0xff]
    %v204 = vld [vmem:[#allocation2 + $0x2c8] sm:$0xff]
    %v205 = vld [vmem:[#allocation2 + $0x2d0] sm:$0xff]
    %v206 = vld [vmem:[#allocation2 + $0x2d8] sm:$0xff]
    %v207 = vld [vmem:[#allocation2 + $0x2e0] sm:$0xff]
    %v208 = vld [vmem:[#allocation2 + $0x2e8] sm:$0xff]
    %v209 = vld [vmem:[#allocation2 + $0x2f0] sm:$0xff]
    %v210 = vld [vmem:[#allocation2 + $0x2f8] sm:$0xff]
    %v211 = vld [vmem:[#allocation2 + $0x300] sm:$0xff]
    %v212 = vld [vmem:[#allocation2 + $0x308] sm:$0xff]
    %v213 = vld [vmem:[#allocation2 + $0x310] sm:$0xff]
    %v214 = vld [vmem:[#allocation2 + $0x318] sm:$0xff]
    %v215 = vld [vmem:[#allocation2 + $0x320] sm:$0xff]
    %v216 = vld [vmem:[#allocation2 + $0x328] sm:$0xff]
    %v217 = vld [vmem:[#allocation2 + $0x330] sm:$0xff]
    %v218 = vld [vmem:[#allocation2 + $0x338] sm:$0xff]
    %v219 = vld [vmem:[#allocation2 + $0x340] sm:$0xff]
    %v220 = vld [vmem:[#allocation2 + $0x348] sm:$0xff]
    %v221 = vld [vmem:[#allocation2 + $0x350] sm:$0xff]
    %v222 = vld [vmem:[#allocation2 + $0x358] sm:$0xff]
    %v223 = vld [vmem:[#allocation2 + $0x360] sm:$0xff]
    %v224 = vld [vmem:[#allocation2 + $0x368] sm:$0xff]
    %v225 = vld [vmem:[#allocation2 + $0x370] sm:$0xff]
    %v226 = vld [vmem:[#allocation2 + $0x378] sm:$0xff]
    %v227 = vld [vmem:[#allocation2 + $0x380] sm:$0xff]
    %v228 = vld [vmem:[#allocation2 + $0x388] sm:$0xff]
    %v229 = vld [vmem:[#allocation2 + $0x390] sm:$0xff]
    %v230 = vld [vmem:[#allocation2 + $0x398] sm:$0xff]
    %v231 = vld [vmem:[#allocation2 + $0x3a0] sm:$0xff]
    %v232 = vld [vmem:[#allocation2 + $0x3a8] sm:$0xff]
    %v233 = vld [vmem:[#allocation2 + $0x3b0] sm:$0xff]
    %v234 = vld [vmem:[#allocation2 + $0x3b8] sm:$0xff]
    %v235 = vld [vmem:[#allocation2 + $0x3c0] sm:$0xff]
    %v236 = vld [vmem:[#allocation2 + $0x3c8] sm:$0xff]
    %v237 = vld [vmem:[#allocation2 + $0x3d0] sm:$0xff]
    %v238 = vld [vmem:[#allocation2 + $0x3d8] sm:$0xff]
    %v239 = vld [vmem:[#allocation2 + $0x3e0] sm:$0xff]
    %v240 = vld [vmem:[#allocation2 + $0x3e8] sm:$0xff]
    %v241 = vld [vmem:[#allocation2 + $0x3f0] sm:$0xff]
    %v242 = vld [vmem:[#allocation2 + $0x3f8] sm:$0xff]
    %v243 = vld [vmem:[#allocation4] sm:$0xff]
    %v245 = vperm.slane %v243, 0
    %v246 = vperm.slane %v243, 1
    %v247 = vperm.slane %v243, 2
    %v248 = vperm.slane %v243, 3
    %v249 = vperm.slane %v243, 4
    %v250 = vperm.slane %v243, 5
    %v251 = vperm.slane %v243, 6
    %v252 = vperm.slane %v243, 7
    %261 = vmatpush.msra.mxu0 %v235
    %262 = vmatpush.msra.mxu0 %v227
    %263 = vmatpush.msra.mxu0 %v219
    %264 = vmatpush.msra.mxu0 %v211
    %265 = vmatpush.msra.mxu0 %v203
    %266 = vmatpush.msra.mxu0 %v195
    %267 = vmatpush.msra.mxu0 %v187
    %268 = vmatpush.msra.mxu0 %v179
    %269 = vmatpush.msra.mxu0 %v171
    %270 = vmatpush.msra.mxu0 %v163
    %271 = vmatpush.msra.mxu0 %v155
    %272 = vmatpush.msra.mxu0 %v147
    %273 = vmatpush.msra.mxu0 %v139
    %274 = vmatpush.msra.mxu0 %v131
    %275 = vmatpush.msra.mxu0 %v123
    %276 = vmatpush.msra.mxu0 %v115
    %277 = vmatmul.f32.gmra.mxu0 %v114
    %v278 = vpop.f32.mrf.mxu0
    %v279 = vadd.f32 %v245, %v278
    %280 = vdwg.mxu0
    %281 = vmatpush.msra.mxu0 %v236
    %282 = vmatpush.msra.mxu0 %v228
    %283 = vmatpush.msra.mxu0 %v220
    %284 = vmatpush.msra.mxu0 %v212
    %285 = vmatpush.msra.mxu0 %v204
    %286 = vmatpush.msra.mxu0 %v196
    %287 = vmatpush.msra.mxu0 %v188
    %288 = vmatpush.msra.mxu0 %v180
    %289 = vmatpush.msra.mxu0 %v172
    %290 = vmatpush.msra.mxu0 %v164
    %291 = vmatpush.msra.mxu0 %v156
    %292 = vmatpush.msra.mxu0 %v148
    %293 = vmatpush.msra.mxu0 %v140
    %294 = vmatpush.msra.mxu0 %v132
    %295 = vmatpush.msra.mxu0 %v124
    %296 = vmatpush.msra.mxu0 %v116
    %297 = vmatmul.f32.gmra.mxu0 %v114
    %v298 = vpop.f32.mrf.mxu0
    %v299 = vadd.f32 %v246, %v298
    %300 = vdwg.mxu0
    %301 = vmatpush.msra.mxu0 %v237
    %302 = vmatpush.msra.mxu0 %v229
    %303 = vmatpush.msra.mxu0 %v221
    %304 = vmatpush.msra.mxu0 %v213
    %305 = vmatpush.msra.mxu0 %v205
    %306 = vmatpush.msra.mxu0 %v197
    %307 = vmatpush.msra.mxu0 %v189
    %308 = vmatpush.msra.mxu0 %v181
    %309 = vmatpush.msra.mxu0 %v173
    %310 = vmatpush.msra.mxu0 %v165
    %311 = vmatpush.msra.mxu0 %v157
    %312 = vmatpush.msra.mxu0 %v149
    %313 = vmatpush.msra.mxu0 %v141
    %314 = vmatpush.msra.mxu0 %v133
    %315 = vmatpush.msra.mxu0 %v125
    %316 = vmatpush.msra.mxu0 %v117
    %317 = vmatmul.f32.gmra.mxu0 %v114
    %v318 = vpop.f32.mrf.mxu0
    %v319 = vadd.f32 %v247, %v318
    %320 = vdwg.mxu0
    %321 = vmatpush.msra.mxu0 %v238
    %322 = vmatpush.msra.mxu0 %v230
    %323 = vmatpush.msra.mxu0 %v222
    %324 = vmatpush.msra.mxu0 %v214
    %325 = vmatpush.msra.mxu0 %v206
    %326 = vmatpush.msra.mxu0 %v198
    %327 = vmatpush.msra.mxu0 %v190
    %328 = vmatpush.msra.mxu0 %v182
    %329 = vmatpush.msra.mxu0 %v174
    %330 = vmatpush.msra.mxu0 %v166
    %331 = vmatpush.msra.mxu0 %v158
    %332 = vmatpush.msra.mxu0 %v150
    %333 = vmatpush.msra.mxu0 %v142
    %334 = vmatpush.msra.mxu0 %v134
    %335 = vmatpush.msra.mxu0 %v126
    %336 = vmatpush.msra.mxu0 %v118
    %337 = vmatmul.f32.gmra.mxu0 %v114
    %v338 = vpop.f32.mrf.mxu0
    %v339 = vadd.f32 %v248, %v338
    %340 = vdwg.mxu0
    %341 = vmatpush.msra.mxu0 %v239
    %342 = vmatpush.msra.mxu0 %v231
    %343 = vmatpush.msra.mxu0 %v223
    %344 = vmatpush.msra.mxu0 %v215
    %345 = vmatpush.msra.mxu0 %v207
    %346 = vmatpush.msra.mxu0 %v199
    %347 = vmatpush.msra.mxu0 %v191
    %348 = vmatpush.msra.mxu0 %v183
    %349 = vmatpush.msra.mxu0 %v175
    %350 = vmatpush.msra.mxu0 %v167
    %351 = vmatpush.msra.mxu0 %v159
    %352 = vmatpush.msra.mxu0 %v151
    %353 = vmatpush.msra.mxu0 %v143
    %354 = vmatpush.msra.mxu0 %v135
    %355 = vmatpush.msra.mxu0 %v127
    %356 = vmatpush.msra.mxu0 %v119
    %357 = vmatmul.f32.gmra.mxu0 %v114
    %v358 = vpop.f32.mrf.mxu0
    %v359 = vadd.f32 %v249, %v358
    %360 = vdwg.mxu0
    %361 = vmatpush.msra.mxu0 %v240
    %362 = vmatpush.msra.mxu0 %v232
    %363 = vmatpush.msra.mxu0 %v224
    %364 = vmatpush.msra.mxu0 %v216
    %365 = vmatpush.msra.mxu0 %v208
    %366 = vmatpush.msra.mxu0 %v200
    %367 = vmatpush.msra.mxu0 %v192
    %368 = vmatpush.msra.mxu0 %v184
    %369 = vmatpush.msra.mxu0 %v176
    %370 = vmatpush.msra.mxu0 %v168
    %371 = vmatpush.msra.mxu0 %v160
    %372 = vmatpush.msra.mxu0 %v152
    %373 = vmatpush.msra.mxu0 %v144
    %374 = vmatpush.msra.mxu0 %v136
    %375 = vmatpush.msra.mxu0 %v128
    %376 = vmatpush.msra.mxu0 %v120
    %377 = vmatmul.f32.gmra.mxu0 %v114
    %v378 = vpop.f32.mrf.mxu0
    %v379 = vadd.f32 %v250, %v378
    %380 = vdwg.mxu0
    %381 = vmatpush.msra.mxu0 %v241
    %382 = vmatpush.msra.mxu0 %v233
    %383 = vmatpush.msra.mxu0 %v225
    %384 = vmatpush.msra.mxu0 %v217
    %385 = vmatpush.msra.mxu0 %v209
    %386 = vmatpush.msra.mxu0 %v201
    %387 = vmatpush.msra.mxu0 %v193
    %388 = vmatpush.msra.mxu0 %v185
    %389 = vmatpush.msra.mxu0 %v177
    %390 = vmatpush.msra.mxu0 %v169
    %391 = vmatpush.msra.mxu0 %v161
    %392 = vmatpush.msra.mxu0 %v153
    %393 = vmatpush.msra.mxu0 %v145
    %394 = vmatpush.msra.mxu0 %v137
    %395 = vmatpush.msra.mxu0 %v129
    %396 = vmatpush.msra.mxu0 %v121
    %397 = vmatmul.f32.gmra.mxu0 %v114
    %v398 = vpop.f32.mrf.mxu0
    %v399 = vadd.f32 %v251, %v398
    %400 = vdwg.mxu0
    %401 = vmatpush.msra.mxu0 %v242
    %402 = vmatpush.msra.mxu0 %v234
    %403 = vmatpush.msra.mxu0 %v226
    %404 = vmatpush.msra.mxu0 %v218
    %405 = vmatpush.msra.mxu0 %v210
    %406 = vmatpush.msra.mxu0 %v202
    %407 = vmatpush.msra.mxu0 %v194
    %408 = vmatpush.msra.mxu0 %v186
    %409 = vmatpush.msra.mxu0 %v178
    %410 = vmatpush.msra.mxu0 %v170
    %411 = vmatpush.msra.mxu0 %v162
    %412 = vmatpush.msra.mxu0 %v154
    %413 = vmatpush.msra.mxu0 %v146
    %414 = vmatpush.msra.mxu0 %v138
    %415 = vmatpush.msra.mxu0 %v130
    %416 = vmatpush.msra.mxu0 %v122
    %417 = vmatmul.f32.gmra.mxu0 %v114
    %v418 = vpop.f32.mrf.mxu0
    %v419 = vadd.f32 %v252, %v418
    %420 = vdwg.mxu0
    %v421 = vmax.f32 %v279, 0.0
    %v422 = vmax.f32 %v299, 0.0
    %v423 = vmax.f32 %v319, 0.0
    %v424 = vmax.f32 %v339, 0.0
    %v425 = vmax.f32 %v359, 0.0
    %v426 = vmax.f32 %v379, 0.0
    %v427 = vmax.f32 %v399, 0.0
    %v428 = vmax.f32 %v419, 0.0
    %v429 = vmul.f32 %v279, 1.442695
    %v430 = vpow.pop %v429
    %v431 = vmul.f32 %v299, 1.442695
    %v432 = vpow.pop %v431
    %v433 = vmul.f32 %v319, 1.442695
    %v434 = vpow.pop %v433
    %v435 = vmul.f32 %v339, 1.442695
    %v436 = vpow.pop %v435
    %v437 = vmul.f32 %v359, 1.442695
    %v438 = vpow.pop %v437
    %v439 = vmul.f32 %v379, 1.442695
    %v440 = vpow.pop %v439
    %v441 = vmul.f32 %v399, 1.442695
    %v442 = vpow.pop %v441
    %v443 = vmul.f32 %v419, 1.442695
    %v444 = vpow.pop %v443
    %v445 = vsub.f32 %v430, 1.0
    %v446 = vsub.f32 %v432, 1.0
    %v447 = vsub.f32 %v434, 1.0
    %v448 = vsub.f32 %v436, 1.0
    %v449 = vsub.f32 %v438, 1.0
    %v450 = vsub.f32 %v440, 1.0
    %v451 = vsub.f32 %v442, 1.0
    %v452 = vsub.f32 %v444, 1.0
    %v453 = vmul.f32 %v445, 1.6732632
    %v454 = vmul.f32 %v446, 1.6732632
    %v455 = vmul.f32 %v447, 1.6732632
    %v456 = vmul.f32 %v448, 1.6732632
    %v457 = vmul.f32 %v449, 1.6732632
    %v458 = vmul.f32 %v450, 1.6732632
    %v459 = vmul.f32 %v451, 1.6732632
    %v460 = vmul.f32 %v452, 1.6732632
    %v461 = vmin.f32 %v453, 0.0
    %v462 = vmin.f32 %v454, 0.0
    %v463 = vmin.f32 %v455, 0.0
    %v464 = vmin.f32 %v456, 0.0
    %v465 = vmin.f32 %v457, 0.0
    %v466 = vmin.f32 %v458, 0.0
    %v467 = vmin.f32 %v459, 0.0
    %v468 = vmin.f32 %v460, 0.0
    %v469 = vadd.f32 %v421, %v461
    %v470 = vadd.f32 %v422, %v462
    %v471 = vadd.f32 %v423, %v463
    %v472 = vadd.f32 %v424, %v464
    %v473 = vadd.f32 %v425, %v465
    %v474 = vadd.f32 %v426, %v466
    %v475 = vadd.f32 %v427, %v467
    %v476 = vadd.f32 %v428, %v468
    %v477 = vmul.f32 %v469, 1.050701
    %v478 = vmul.f32 %v470, 1.050701
    %v479 = vmul.f32 %v471, 1.050701
    %v480 = vmul.f32 %v472, 1.050701
    %v481 = vmul.f32 %v473, 1.050701
    %v482 = vmul.f32 %v474, 1.050701
    %v483 = vmul.f32 %v475, 1.050701
    %v484 = vmul.f32 %v476, 1.050701
    %v485 = vld [vmem:[#allocation6] sm:$0xff]
    %v486 = vld [vmem:[#allocation6 + $0x8] sm:$0xff]
    %v487 = vld [vmem:[#allocation6 + $0x10] sm:$0xff]
    %v488 = vld [vmem:[#allocation6 + $0x18] sm:$0xff]
    %v489 = vld [vmem:[#allocation6 + $0x20] sm:$0xff]
    %v490 = vld [vmem:[#allocation6 + $0x28] sm:$0xff]
    %v491 = vld [vmem:[#allocation6 + $0x30] sm:$0xff]
    %v492 = vld [vmem:[#allocation6 + $0x38] sm:$0xff]
    %v493 = vld [vmem:[#allocation6 + $0x40] sm:$0xff]
    %v494 = vld [vmem:[#allocation6 + $0x48] sm:$0xff]
    %v495 = vld [vmem:[#allocation6 + $0x50] sm:$0xff]
    %v496 = vld [vmem:[#allocation6 + $0x58] sm:$0xff]
    %v497 = vld [vmem:[#allocation6 + $0x60] sm:$0xff]
    %v498 = vld [vmem:[#allocation6 + $0x68] sm:$0xff]
    %v499 = vld [vmem:[#allocation6 + $0x70] sm:$0xff]
    %v500 = vld [vmem:[#allocation6 + $0x78] sm:$0xff]
    %v501 = vld [vmem:[#allocation6 + $0x80] sm:$0xff]
    %v502 = vld [vmem:[#allocation6 + $0x88] sm:$0xff]
    %v503 = vld [vmem:[#allocation6 + $0x90] sm:$0xff]
    %v504 = vld [vmem:[#allocation6 + $0x98] sm:$0xff]
    %v505 = vld [vmem:[#allocation6 + $0xa0] sm:$0xff]
    %v506 = vld [vmem:[#allocation6 + $0xa8] sm:$0xff]
    %v507 = vld [vmem:[#allocation6 + $0xb0] sm:$0xff]
    %v508 = vld [vmem:[#allocation6 + $0xb8] sm:$0xff]
    %v509 = vld [vmem:[#allocation6 + $0xc0] sm:$0xff]
    %v510 = vld [vmem:[#allocation6 + $0xc8] sm:$0xff]
    %v511 = vld [vmem:[#allocation6 + $0xd0] sm:$0xff]
    %v512 = vld [vmem:[#allocation6 + $0xd8] sm:$0xff]
    %v513 = vld [vmem:[#allocation6 + $0xe0] sm:$0xff]
    %v514 = vld [vmem:[#allocation6 + $0xe8] sm:$0xff]
    %v515 = vld [vmem:[#allocation6 + $0xf0] sm:$0xff]
    %v516 = vld [vmem:[#allocation6 + $0xf8] sm:$0xff]
    %v517 = vld [vmem:[#allocation6 + $0x100] sm:$0xff]
    %v518 = vld [vmem:[#allocation6 + $0x108] sm:$0xff]
    %v519 = vld [vmem:[#allocation6 + $0x110] sm:$0xff]
    %v520 = vld [vmem:[#allocation6 + $0x118] sm:$0xff]
    %v521 = vld [vmem:[#allocation6 + $0x120] sm:$0xff]
    %v522 = vld [vmem:[#allocation6 + $0x128] sm:$0xff]
    %v523 = vld [vmem:[#allocation6 + $0x130] sm:$0xff]
    %v524 = vld [vmem:[#allocation6 + $0x138] sm:$0xff]
    %v525 = vld [vmem:[#allocation6 + $0x140] sm:$0xff]
    %v526 = vld [vmem:[#allocation6 + $0x148] sm:$0xff]
    %v527 = vld [vmem:[#allocation6 + $0x150] sm:$0xff]
    %v528 = vld [vmem:[#allocation6 + $0x158] sm:$0xff]
    %v529 = vld [vmem:[#allocation6 + $0x160] sm:$0xff]
    %v530 = vld [vmem:[#allocation6 + $0x168] sm:$0xff]
    %v531 = vld [vmem:[#allocation6 + $0x170] sm:$0xff]
    %v532 = vld [vmem:[#allocation6 + $0x178] sm:$0xff]
    %v533 = vld [vmem:[#allocation6 + $0x180] sm:$0xff]
    %v534 = vld [vmem:[#allocation6 + $0x188] sm:$0xff]
    %v535 = vld [vmem:[#allocation6 + $0x190] sm:$0xff]
    %v536 = vld [vmem:[#allocation6 + $0x198] sm:$0xff]
    %v537 = vld [vmem:[#allocation6 + $0x1a0] sm:$0xff]
    %v538 = vld [vmem:[#allocation6 + $0x1a8] sm:$0xff]
    %v539 = vld [vmem:[#allocation6 + $0x1b0] sm:$0xff]
    %v540 = vld [vmem:[#allocation6 + $0x1b8] sm:$0xff]
    %v541 = vld [vmem:[#allocation6 + $0x1c0] sm:$0xff]
    %v542 = vld [vmem:[#allocation6 + $0x1c8] sm:$0xff]
    %v543 = vld [vmem:[#allocation6 + $0x1d0] sm:$0xff]
    %v544 = vld [vmem:[#allocation6 + $0x1d8] sm:$0xff]
    %v545 = vld [vmem:[#allocation6 + $0x1e0] sm:$0xff]
    %v546 = vld [vmem:[#allocation6 + $0x1e8] sm:$0xff]
    %v547 = vld [vmem:[#allocation6 + $0x1f0] sm:$0xff]
    %v548 = vld [vmem:[#allocation6 + $0x1f8] sm:$0xff]
    %v549 = vld [vmem:[#allocation6 + $0x200] sm:$0xff]
    %v550 = vld [vmem:[#allocation6 + $0x208] sm:$0xff]
    %v551 = vld [vmem:[#allocation6 + $0x210] sm:$0xff]
    %v552 = vld [vmem:[#allocation6 + $0x218] sm:$0xff]
    %v553 = vld [vmem:[#allocation6 + $0x220] sm:$0xff]
    %v554 = vld [vmem:[#allocation6 + $0x228] sm:$0xff]
    %v555 = vld [vmem:[#allocation6 + $0x230] sm:$0xff]
    %v556 = vld [vmem:[#allocation6 + $0x238] sm:$0xff]
    %v557 = vld [vmem:[#allocation6 + $0x240] sm:$0xff]
    %v558 = vld [vmem:[#allocation6 + $0x248] sm:$0xff]
    %v559 = vld [vmem:[#allocation6 + $0x250] sm:$0xff]
    %v560 = vld [vmem:[#allocation6 + $0x258] sm:$0xff]
    %v561 = vld [vmem:[#allocation6 + $0x260] sm:$0xff]
    %v562 = vld [vmem:[#allocation6 + $0x268] sm:$0xff]
    %v563 = vld [vmem:[#allocation6 + $0x270] sm:$0xff]
    %v564 = vld [vmem:[#allocation6 + $0x278] sm:$0xff]
    %v565 = vld [vmem:[#allocation6 + $0x280] sm:$0xff]
    %v566 = vld [vmem:[#allocation6 + $0x288] sm:$0xff]
    %v567 = vld [vmem:[#allocation6 + $0x290] sm:$0xff]
    %v568 = vld [vmem:[#allocation6 + $0x298] sm:$0xff]
    %v569 = vld [vmem:[#allocation6 + $0x2a0] sm:$0xff]
    %v570 = vld [vmem:[#allocation6 + $0x2a8] sm:$0xff]
    %v571 = vld [vmem:[#allocation6 + $0x2b0] sm:$0xff]
    %v572 = vld [vmem:[#allocation6 + $0x2b8] sm:$0xff]
    %v573 = vld [vmem:[#allocation6 + $0x2c0] sm:$0xff]
    %v574 = vld [vmem:[#allocation6 + $0x2c8] sm:$0xff]
    %v575 = vld [vmem:[#allocation6 + $0x2d0] sm:$0xff]
    %v576 = vld [vmem:[#allocation6 + $0x2d8] sm:$0xff]
    %v577 = vld [vmem:[#allocation6 + $0x2e0] sm:$0xff]
    %v578 = vld [vmem:[#allocation6 + $0x2e8] sm:$0xff]
    %v579 = vld [vmem:[#allocation6 + $0x2f0] sm:$0xff]
    %v580 = vld [vmem:[#allocation6 + $0x2f8] sm:$0xff]
    %v581 = vld [vmem:[#allocation6 + $0x300] sm:$0xff]
    %v582 = vld [vmem:[#allocation6 + $0x308] sm:$0xff]
    %v583 = vld [vmem:[#allocation6 + $0x310] sm:$0xff]
    %v584 = vld [vmem:[#allocation6 + $0x318] sm:$0xff]
    %v585 = vld [vmem:[#allocation6 + $0x320] sm:$0xff]
    %v586 = vld [vmem:[#allocation6 + $0x328] sm:$0xff]
    %v587 = vld [vmem:[#allocation6 + $0x330] sm:$0xff]
    %v588 = vld [vmem:[#allocation6 + $0x338] sm:$0xff]
    %v589 = vld [vmem:[#allocation6 + $0x340] sm:$0xff]
    %v590 = vld [vmem:[#allocation6 + $0x348] sm:$0xff]
    %v591 = vld [vmem:[#allocation6 + $0x350] sm:$0xff]
    %v592 = vld [vmem:[#allocation6 + $0x358] sm:$0xff]
    %v593 = vld [vmem:[#allocation6 + $0x360] sm:$0xff]
    %v594 = vld [vmem:[#allocation6 + $0x368] sm:$0xff]
    %v595 = vld [vmem:[#allocation6 + $0x370] sm:$0xff]
    %v596 = vld [vmem:[#allocation6 + $0x378] sm:$0xff]
    %v597 = vld [vmem:[#allocation6 + $0x380] sm:$0xff]
    %v598 = vld [vmem:[#allocation6 + $0x388] sm:$0xff]
    %v599 = vld [vmem:[#allocation6 + $0x390] sm:$0xff]
    %v600 = vld [vmem:[#allocation6 + $0x398] sm:$0xff]
    %v601 = vld [vmem:[#allocation6 + $0x3a0] sm:$0xff]
    %v602 = vld [vmem:[#allocation6 + $0x3a8] sm:$0xff]
    %v603 = vld [vmem:[#allocation6 + $0x3b0] sm:$0xff]
    %v604 = vld [vmem:[#allocation6 + $0x3b8] sm:$0xff]
    %v605 = vld [vmem:[#allocation6 + $0x3c0] sm:$0xff]
    %v606 = vld [vmem:[#allocation6 + $0x3c8] sm:$0xff]
    %v607 = vld [vmem:[#allocation6 + $0x3d0] sm:$0xff]
    %v608 = vld [vmem:[#allocation6 + $0x3d8] sm:$0xff]
    %v609 = vld [vmem:[#allocation6 + $0x3e0] sm:$0xff]
    %v610 = vld [vmem:[#allocation6 + $0x3e8] sm:$0xff]
    %v611 = vld [vmem:[#allocation6 + $0x3f0] sm:$0xff]
    %v612 = vld [vmem:[#allocation6 + $0x3f8] sm:$0xff]
    %v613 = vld [vmem:[#allocation6 + $0x400] sm:$0xff]
    %v614 = vld [vmem:[#allocation6 + $0x408] sm:$0xff]
    %v615 = vld [vmem:[#allocation6 + $0x410] sm:$0xff]
    %v616 = vld [vmem:[#allocation6 + $0x418] sm:$0xff]
    %v617 = vld [vmem:[#allocation6 + $0x420] sm:$0xff]
    %v618 = vld [vmem:[#allocation6 + $0x428] sm:$0xff]
    %v619 = vld [vmem:[#allocation6 + $0x430] sm:$0xff]
    %v620 = vld [vmem:[#allocation6 + $0x438] sm:$0xff]
    %v621 = vld [vmem:[#allocation6 + $0x440] sm:$0xff]
    %v622 = vld [vmem:[#allocation6 + $0x448] sm:$0xff]
    %v623 = vld [vmem:[#allocation6 + $0x450] sm:$0xff]
    %v624 = vld [vmem:[#allocation6 + $0x458] sm:$0xff]
    %v625 = vld [vmem:[#allocation6 + $0x460] sm:$0xff]
    %v626 = vld [vmem:[#allocation6 + $0x468] sm:$0xff]
    %v627 = vld [vmem:[#allocation6 + $0x470] sm:$0xff]
    %v628 = vld [vmem:[#allocation6 + $0x478] sm:$0xff]
    %v629 = vld [vmem:[#allocation6 + $0x480] sm:$0xff]
    %v630 = vld [vmem:[#allocation6 + $0x488] sm:$0xff]
    %v631 = vld [vmem:[#allocation6 + $0x490] sm:$0xff]
    %v632 = vld [vmem:[#allocation6 + $0x498] sm:$0xff]
    %v633 = vld [vmem:[#allocation6 + $0x4a0] sm:$0xff]
    %v634 = vld [vmem:[#allocation6 + $0x4a8] sm:$0xff]
    %v635 = vld [vmem:[#allocation6 + $0x4b0] sm:$0xff]
    %v636 = vld [vmem:[#allocation6 + $0x4b8] sm:$0xff]
    %v637 = vld [vmem:[#allocation6 + $0x4c0] sm:$0xff]
    %v638 = vld [vmem:[#allocation6 + $0x4c8] sm:$0xff]
    %v639 = vld [vmem:[#allocation6 + $0x4d0] sm:$0xff]
    %v640 = vld [vmem:[#allocation6 + $0x4d8] sm:$0xff]
    %v641 = vld [vmem:[#allocation6 + $0x4e0] sm:$0xff]
    %v642 = vld [vmem:[#allocation6 + $0x4e8] sm:$0xff]
    %v643 = vld [vmem:[#allocation6 + $0x4f0] sm:$0xff]
    %v644 = vld [vmem:[#allocation6 + $0x4f8] sm:$0xff]
    %v645 = vld [vmem:[#allocation6 + $0x500] sm:$0xff]
    %v646 = vld [vmem:[#allocation6 + $0x508] sm:$0xff]
    %v647 = vld [vmem:[#allocation6 + $0x510] sm:$0xff]
    %v648 = vld [vmem:[#allocation6 + $0x518] sm:$0xff]
    %v649 = vld [vmem:[#allocation6 + $0x520] sm:$0xff]
    %v650 = vld [vmem:[#allocation6 + $0x528] sm:$0xff]
    %v651 = vld [vmem:[#allocation6 + $0x530] sm:$0xff]
    %v652 = vld [vmem:[#allocation6 + $0x538] sm:$0xff]
    %v653 = vld [vmem:[#allocation6 + $0x540] sm:$0xff]
    %v654 = vld [vmem:[#allocation6 + $0x548] sm:$0xff]
    %v655 = vld [vmem:[#allocation6 + $0x550] sm:$0xff]
    %v656 = vld [vmem:[#allocation6 + $0x558] sm:$0xff]
    %v657 = vld [vmem:[#allocation6 + $0x560] sm:$0xff]
    %v658 = vld [vmem:[#allocation6 + $0x568] sm:$0xff]
    %v659 = vld [vmem:[#allocation6 + $0x570] sm:$0xff]
    %v660 = vld [vmem:[#allocation6 + $0x578] sm:$0xff]
    %v661 = vld [vmem:[#allocation6 + $0x580] sm:$0xff]
    %v662 = vld [vmem:[#allocation6 + $0x588] sm:$0xff]
    %v663 = vld [vmem:[#allocation6 + $0x590] sm:$0xff]
    %v664 = vld [vmem:[#allocation6 + $0x598] sm:$0xff]
    %v665 = vld [vmem:[#allocation6 + $0x5a0] sm:$0xff]
    %v666 = vld [vmem:[#allocation6 + $0x5a8] sm:$0xff]
    %v667 = vld [vmem:[#allocation6 + $0x5b0] sm:$0xff]
    %v668 = vld [vmem:[#allocation6 + $0x5b8] sm:$0xff]
    %v669 = vld [vmem:[#allocation6 + $0x5c0] sm:$0xff]
    %v670 = vld [vmem:[#allocation6 + $0x5c8] sm:$0xff]
    %v671 = vld [vmem:[#allocation6 + $0x5d0] sm:$0xff]
    %v672 = vld [vmem:[#allocation6 + $0x5d8] sm:$0xff]
    %v673 = vld [vmem:[#allocation6 + $0x5e0] sm:$0xff]
    %v674 = vld [vmem:[#allocation6 + $0x5e8] sm:$0xff]
    %v675 = vld [vmem:[#allocation6 + $0x5f0] sm:$0xff]
    %v676 = vld [vmem:[#allocation6 + $0x5f8] sm:$0xff]
    %v677 = vld [vmem:[#allocation6 + $0x600] sm:$0xff]
    %v678 = vld [vmem:[#allocation6 + $0x608] sm:$0xff]
    %v679 = vld [vmem:[#allocation6 + $0x610] sm:$0xff]
    %v680 = vld [vmem:[#allocation6 + $0x618] sm:$0xff]
    %v681 = vld [vmem:[#allocation6 + $0x620] sm:$0xff]
    %v682 = vld [vmem:[#allocation6 + $0x628] sm:$0xff]
    %v683 = vld [vmem:[#allocation6 + $0x630] sm:$0xff]
    %v684 = vld [vmem:[#allocation6 + $0x638] sm:$0xff]
    %v685 = vld [vmem:[#allocation6 + $0x640] sm:$0xff]
    %v686 = vld [vmem:[#allocation6 + $0x648] sm:$0xff]
    %v687 = vld [vmem:[#allocation6 + $0x650] sm:$0xff]
    %v688 = vld [vmem:[#allocation6 + $0x658] sm:$0xff]
    %v689 = vld [vmem:[#allocation6 + $0x660] sm:$0xff]
    %v690 = vld [vmem:[#allocation6 + $0x668] sm:$0xff]
    %v691 = vld [vmem:[#allocation6 + $0x670] sm:$0xff]
    %v692 = vld [vmem:[#allocation6 + $0x678] sm:$0xff]
    %v693 = vld [vmem:[#allocation6 + $0x680] sm:$0xff]
    %v694 = vld [vmem:[#allocation6 + $0x688] sm:$0xff]
    %v695 = vld [vmem:[#allocation6 + $0x690] sm:$0xff]
    %v696 = vld [vmem:[#allocation6 + $0x698] sm:$0xff]
    %v697 = vld [vmem:[#allocation6 + $0x6a0] sm:$0xff]
    %v698 = vld [vmem:[#allocation6 + $0x6a8] sm:$0xff]
    %v699 = vld [vmem:[#allocation6 + $0x6b0] sm:$0xff]
    %v700 = vld [vmem:[#allocation6 + $0x6b8] sm:$0xff]
    %v701 = vld [vmem:[#allocation6 + $0x6c0] sm:$0xff]
    %v702 = vld [vmem:[#allocation6 + $0x6c8] sm:$0xff]
    %v703 = vld [vmem:[#allocation6 + $0x6d0] sm:$0xff]
    %v704 = vld [vmem:[#allocation6 + $0x6d8] sm:$0xff]
    %v705 = vld [vmem:[#allocation6 + $0x6e0] sm:$0xff]
    %v706 = vld [vmem:[#allocation6 + $0x6e8] sm:$0xff]
    %v707 = vld [vmem:[#allocation6 + $0x6f0] sm:$0xff]
    %v708 = vld [vmem:[#allocation6 + $0x6f8] sm:$0xff]
    %v709 = vld [vmem:[#allocation6 + $0x700] sm:$0xff]
    %v710 = vld [vmem:[#allocation6 + $0x708] sm:$0xff]
    %v711 = vld [vmem:[#allocation6 + $0x710] sm:$0xff]
    %v712 = vld [vmem:[#allocation6 + $0x718] sm:$0xff]
    %v713 = vld [vmem:[#allocation6 + $0x720] sm:$0xff]
    %v714 = vld [vmem:[#allocation6 + $0x728] sm:$0xff]
    %v715 = vld [vmem:[#allocation6 + $0x730] sm:$0xff]
    %v716 = vld [vmem:[#allocation6 + $0x738] sm:$0xff]
    %v717 = vld [vmem:[#allocation6 + $0x740] sm:$0xff]
    %v718 = vld [vmem:[#allocation6 + $0x748] sm:$0xff]
    %v719 = vld [vmem:[#allocation6 + $0x750] sm:$0xff]
    %v720 = vld [vmem:[#allocation6 + $0x758] sm:$0xff]
    %v721 = vld [vmem:[#allocation6 + $0x760] sm:$0xff]
    %v722 = vld [vmem:[#allocation6 + $0x768] sm:$0xff]
    %v723 = vld [vmem:[#allocation6 + $0x770] sm:$0xff]
    %v724 = vld [vmem:[#allocation6 + $0x778] sm:$0xff]
    %v725 = vld [vmem:[#allocation6 + $0x780] sm:$0xff]
    %v726 = vld [vmem:[#allocation6 + $0x788] sm:$0xff]
    %v727 = vld [vmem:[#allocation6 + $0x790] sm:$0xff]
    %v728 = vld [vmem:[#allocation6 + $0x798] sm:$0xff]
    %v729 = vld [vmem:[#allocation6 + $0x7a0] sm:$0xff]
    %v730 = vld [vmem:[#allocation6 + $0x7a8] sm:$0xff]
    %v731 = vld [vmem:[#allocation6 + $0x7b0] sm:$0xff]
    %v732 = vld [vmem:[#allocation6 + $0x7b8] sm:$0xff]
    %v733 = vld [vmem:[#allocation6 + $0x7c0] sm:$0xff]
    %v734 = vld [vmem:[#allocation6 + $0x7c8] sm:$0xff]
    %v735 = vld [vmem:[#allocation6 + $0x7d0] sm:$0xff]
    %v736 = vld [vmem:[#allocation6 + $0x7d8] sm:$0xff]
    %v737 = vld [vmem:[#allocation6 + $0x7e0] sm:$0xff]
    %v738 = vld [vmem:[#allocation6 + $0x7e8] sm:$0xff]
    %v739 = vld [vmem:[#allocation6 + $0x7f0] sm:$0xff]
    %v740 = vld [vmem:[#allocation6 + $0x7f8] sm:$0xff]
    %v741 = vld [vmem:[#allocation6 + $0x800] sm:$0xff]
    %v742 = vld [vmem:[#allocation6 + $0x808] sm:$0xff]
    %v743 = vld [vmem:[#allocation6 + $0x810] sm:$0xff]
    %v744 = vld [vmem:[#allocation6 + $0x818] sm:$0xff]
    %v745 = vld [vmem:[#allocation6 + $0x820] sm:$0xff]
    %v746 = vld [vmem:[#allocation6 + $0x828] sm:$0xff]
    %v747 = vld [vmem:[#allocation6 + $0x830] sm:$0xff]
    %v748 = vld [vmem:[#allocation6 + $0x838] sm:$0xff]
    %v749 = vld [vmem:[#allocation6 + $0x840] sm:$0xff]
    %v750 = vld [vmem:[#allocation6 + $0x848] sm:$0xff]
    %v751 = vld [vmem:[#allocation6 + $0x850] sm:$0xff]
    %v752 = vld [vmem:[#allocation6 + $0x858] sm:$0xff]
    %v753 = vld [vmem:[#allocation6 + $0x860] sm:$0xff]
    %v754 = vld [vmem:[#allocation6 + $0x868] sm:$0xff]
    %v755 = vld [vmem:[#allocation6 + $0x870] sm:$0xff]
    %v756 = vld [vmem:[#allocation6 + $0x878] sm:$0xff]
    %v757 = vld [vmem:[#allocation6 + $0x880] sm:$0xff]
    %v758 = vld [vmem:[#allocation6 + $0x888] sm:$0xff]
    %v759 = vld [vmem:[#allocation6 + $0x890] sm:$0xff]
    %v760 = vld [vmem:[#allocation6 + $0x898] sm:$0xff]
    %v761 = vld [vmem:[#allocation6 + $0x8a0] sm:$0xff]
    %v762 = vld [vmem:[#allocation6 + $0x8a8] sm:$0xff]
    %v763 = vld [vmem:[#allocation6 + $0x8b0] sm:$0xff]
    %v764 = vld [vmem:[#allocation6 + $0x8b8] sm:$0xff]
    %v765 = vld [vmem:[#allocation6 + $0x8c0] sm:$0xff]
    %v766 = vld [vmem:[#allocation6 + $0x8c8] sm:$0xff]
    %v767 = vld [vmem:[#allocation6 + $0x8d0] sm:$0xff]
    %v768 = vld [vmem:[#allocation6 + $0x8d8] sm:$0xff]
    %v769 = vld [vmem:[#allocation6 + $0x8e0] sm:$0xff]
    %v770 = vld [vmem:[#allocation6 + $0x8e8] sm:$0xff]
    %v771 = vld [vmem:[#allocation6 + $0x8f0] sm:$0xff]
    %v772 = vld [vmem:[#allocation6 + $0x8f8] sm:$0xff]
    %v773 = vld [vmem:[#allocation6 + $0x900] sm:$0xff]
    %v774 = vld [vmem:[#allocation6 + $0x908] sm:$0xff]
    %v775 = vld [vmem:[#allocation6 + $0x910] sm:$0xff]
    %v776 = vld [vmem:[#allocation6 + $0x918] sm:$0xff]
    %v777 = vld [vmem:[#allocation6 + $0x920] sm:$0xff]
    %v778 = vld [vmem:[#allocation6 + $0x928] sm:$0xff]
    %v779 = vld [vmem:[#allocation6 + $0x930] sm:$0xff]
    %v780 = vld [vmem:[#allocation6 + $0x938] sm:$0xff]
    %v781 = vld [vmem:[#allocation6 + $0x940] sm:$0xff]
    %v782 = vld [vmem:[#allocation6 + $0x948] sm:$0xff]
    %v783 = vld [vmem:[#allocation6 + $0x950] sm:$0xff]
    %v784 = vld [vmem:[#allocation6 + $0x958] sm:$0xff]
    %v785 = vld [vmem:[#allocation6 + $0x960] sm:$0xff]
    %v786 = vld [vmem:[#allocation6 + $0x968] sm:$0xff]
    %v787 = vld [vmem:[#allocation6 + $0x970] sm:$0xff]
    %v788 = vld [vmem:[#allocation6 + $0x978] sm:$0xff]
    %v789 = vld [vmem:[#allocation6 + $0x980] sm:$0xff]
    %v790 = vld [vmem:[#allocation6 + $0x988] sm:$0xff]
    %v791 = vld [vmem:[#allocation6 + $0x990] sm:$0xff]
    %v792 = vld [vmem:[#allocation6 + $0x998] sm:$0xff]
    %v793 = vld [vmem:[#allocation6 + $0x9a0] sm:$0xff]
    %v794 = vld [vmem:[#allocation6 + $0x9a8] sm:$0xff]
    %v795 = vld [vmem:[#allocation6 + $0x9b0] sm:$0xff]
    %v796 = vld [vmem:[#allocation6 + $0x9b8] sm:$0xff]
    %v797 = vld [vmem:[#allocation6 + $0x9c0] sm:$0xff]
    %v798 = vld [vmem:[#allocation6 + $0x9c8] sm:$0xff]
    %v799 = vld [vmem:[#allocation6 + $0x9d0] sm:$0xff]
    %v800 = vld [vmem:[#allocation6 + $0x9d8] sm:$0xff]
    %v801 = vld [vmem:[#allocation6 + $0x9e0] sm:$0xff]
    %v802 = vld [vmem:[#allocation6 + $0x9e8] sm:$0xff]
    %v803 = vld [vmem:[#allocation6 + $0x9f0] sm:$0xff]
    %v804 = vld [vmem:[#allocation6 + $0x9f8] sm:$0xff]
    %v805 = vld [vmem:[#allocation6 + $0xa00] sm:$0xff]
    %v806 = vld [vmem:[#allocation6 + $0xa08] sm:$0xff]
    %v807 = vld [vmem:[#allocation6 + $0xa10] sm:$0xff]
    %v808 = vld [vmem:[#allocation6 + $0xa18] sm:$0xff]
    %v809 = vld [vmem:[#allocation6 + $0xa20] sm:$0xff]
    %v810 = vld [vmem:[#allocation6 + $0xa28] sm:$0xff]
    %v811 = vld [vmem:[#allocation6 + $0xa30] sm:$0xff]
    %v812 = vld [vmem:[#allocation6 + $0xa38] sm:$0xff]
    %v813 = vld [vmem:[#allocation6 + $0xa40] sm:$0xff]
    %v814 = vld [vmem:[#allocation6 + $0xa48] sm:$0xff]
    %v815 = vld [vmem:[#allocation6 + $0xa50] sm:$0xff]
    %v816 = vld [vmem:[#allocation6 + $0xa58] sm:$0xff]
    %v817 = vld [vmem:[#allocation6 + $0xa60] sm:$0xff]
    %v818 = vld [vmem:[#allocation6 + $0xa68] sm:$0xff]
    %v819 = vld [vmem:[#allocation6 + $0xa70] sm:$0xff]
    %v820 = vld [vmem:[#allocation6 + $0xa78] sm:$0xff]
    %v821 = vld [vmem:[#allocation6 + $0xa80] sm:$0xff]
    %v822 = vld [vmem:[#allocation6 + $0xa88] sm:$0xff]
    %v823 = vld [vmem:[#allocation6 + $0xa90] sm:$0xff]
    %v824 = vld [vmem:[#allocation6 + $0xa98] sm:$0xff]
    %v825 = vld [vmem:[#allocation6 + $0xaa0] sm:$0xff]
    %v826 = vld [vmem:[#allocation6 + $0xaa8] sm:$0xff]
    %v827 = vld [vmem:[#allocation6 + $0xab0] sm:$0xff]
    %v828 = vld [vmem:[#allocation6 + $0xab8] sm:$0xff]
    %v829 = vld [vmem:[#allocation6 + $0xac0] sm:$0xff]
    %v830 = vld [vmem:[#allocation6 + $0xac8] sm:$0xff]
    %v831 = vld [vmem:[#allocation6 + $0xad0] sm:$0xff]
    %v832 = vld [vmem:[#allocation6 + $0xad8] sm:$0xff]
    %v833 = vld [vmem:[#allocation6 + $0xae0] sm:$0xff]
    %v834 = vld [vmem:[#allocation6 + $0xae8] sm:$0xff]
    %v835 = vld [vmem:[#allocation6 + $0xaf0] sm:$0xff]
    %v836 = vld [vmem:[#allocation6 + $0xaf8] sm:$0xff]
    %v837 = vld [vmem:[#allocation6 + $0xb00] sm:$0xff]
    %v838 = vld [vmem:[#allocation6 + $0xb08] sm:$0xff]
    %v839 = vld [vmem:[#allocation6 + $0xb10] sm:$0xff]
    %v840 = vld [vmem:[#allocation6 + $0xb18] sm:$0xff]
    %v841 = vld [vmem:[#allocation6 + $0xb20] sm:$0xff]
    %v842 = vld [vmem:[#allocation6 + $0xb28] sm:$0xff]
    %v843 = vld [vmem:[#allocation6 + $0xb30] sm:$0xff]
    %v844 = vld [vmem:[#allocation6 + $0xb38] sm:$0xff]
    %v845 = vld [vmem:[#allocation6 + $0xb40] sm:$0xff]
    %v846 = vld [vmem:[#allocation6 + $0xb48] sm:$0xff]
    %v847 = vld [vmem:[#allocation6 + $0xb50] sm:$0xff]
    %v848 = vld [vmem:[#allocation6 + $0xb58] sm:$0xff]
    %v849 = vld [vmem:[#allocation6 + $0xb60] sm:$0xff]
    %v850 = vld [vmem:[#allocation6 + $0xb68] sm:$0xff]
    %v851 = vld [vmem:[#allocation6 + $0xb70] sm:$0xff]
    %v852 = vld [vmem:[#allocation6 + $0xb78] sm:$0xff]
    %v853 = vld [vmem:[#allocation6 + $0xb80] sm:$0xff]
    %v854 = vld [vmem:[#allocation6 + $0xb88] sm:$0xff]
    %v855 = vld [vmem:[#allocation6 + $0xb90] sm:$0xff]
    %v856 = vld [vmem:[#allocation6 + $0xb98] sm:$0xff]
    %v857 = vld [vmem:[#allocation6 + $0xba0] sm:$0xff]
    %v858 = vld [vmem:[#allocation6 + $0xba8] sm:$0xff]
    %v859 = vld [vmem:[#allocation6 + $0xbb0] sm:$0xff]
    %v860 = vld [vmem:[#allocation6 + $0xbb8] sm:$0xff]
    %v861 = vld [vmem:[#allocation6 + $0xbc0] sm:$0xff]
    %v862 = vld [vmem:[#allocation6 + $0xbc8] sm:$0xff]
    %v863 = vld [vmem:[#allocation6 + $0xbd0] sm:$0xff]
    %v864 = vld [vmem:[#allocation6 + $0xbd8] sm:$0xff]
    %v865 = vld [vmem:[#allocation6 + $0xbe0] sm:$0xff]
    %v866 = vld [vmem:[#allocation6 + $0xbe8] sm:$0xff]
    %v867 = vld [vmem:[#allocation6 + $0xbf0] sm:$0xff]
    %v868 = vld [vmem:[#allocation6 + $0xbf8] sm:$0xff]
    %v869 = vld [vmem:[#allocation6 + $0xc00] sm:$0xff]
    %v870 = vld [vmem:[#allocation6 + $0xc08] sm:$0xff]
    %v871 = vld [vmem:[#allocation6 + $0xc10] sm:$0xff]
    %v872 = vld [vmem:[#allocation6 + $0xc18] sm:$0xff]
    %v873 = vld [vmem:[#allocation6 + $0xc20] sm:$0xff]
    %v874 = vld [vmem:[#allocation6 + $0xc28] sm:$0xff]
    %v875 = vld [vmem:[#allocation6 + $0xc30] sm:$0xff]
    %v876 = vld [vmem:[#allocation6 + $0xc38] sm:$0xff]
    %v877 = vld [vmem:[#allocation6 + $0xc40] sm:$0xff]
    %v878 = vld [vmem:[#allocation6 + $0xc48] sm:$0xff]
    %v879 = vld [vmem:[#allocation6 + $0xc50] sm:$0xff]
    %v880 = vld [vmem:[#allocation6 + $0xc58] sm:$0xff]
    %v881 = vld [vmem:[#allocation6 + $0xc60] sm:$0xff]
    %v882 = vld [vmem:[#allocation6 + $0xc68] sm:$0xff]
    %v883 = vld [vmem:[#allocation6 + $0xc70] sm:$0xff]
    %v884 = vld [vmem:[#allocation6 + $0xc78] sm:$0xff]
    %v885 = vld [vmem:[#allocation6 + $0xc80] sm:$0xff]
    %v886 = vld [vmem:[#allocation6 + $0xc88] sm:$0xff]
    %v887 = vld [vmem:[#allocation6 + $0xc90] sm:$0xff]
    %v888 = vld [vmem:[#allocation6 + $0xc98] sm:$0xff]
    %v889 = vld [vmem:[#allocation6 + $0xca0] sm:$0xff]
    %v890 = vld [vmem:[#allocation6 + $0xca8] sm:$0xff]
    %v891 = vld [vmem:[#allocation6 + $0xcb0] sm:$0xff]
    %v892 = vld [vmem:[#allocation6 + $0xcb8] sm:$0xff]
    %v893 = vld [vmem:[#allocation6 + $0xcc0] sm:$0xff]
    %v894 = vld [vmem:[#allocation6 + $0xcc8] sm:$0xff]
    %v895 = vld [vmem:[#allocation6 + $0xcd0] sm:$0xff]
    %v896 = vld [vmem:[#allocation6 + $0xcd8] sm:$0xff]
    %v897 = vld [vmem:[#allocation6 + $0xce0] sm:$0xff]
    %v898 = vld [vmem:[#allocation6 + $0xce8] sm:$0xff]
    %v899 = vld [vmem:[#allocation6 + $0xcf0] sm:$0xff]
    %v900 = vld [vmem:[#allocation6 + $0xcf8] sm:$0xff]
    %v901 = vld [vmem:[#allocation6 + $0xd00] sm:$0xff]
    %v902 = vld [vmem:[#allocation6 + $0xd08] sm:$0xff]
    %v903 = vld [vmem:[#allocation6 + $0xd10] sm:$0xff]
    %v904 = vld [vmem:[#allocation6 + $0xd18] sm:$0xff]
    %v905 = vld [vmem:[#allocation6 + $0xd20] sm:$0xff]
    %v906 = vld [vmem:[#allocation6 + $0xd28] sm:$0xff]
    %v907 = vld [vmem:[#allocation6 + $0xd30] sm:$0xff]
    %v908 = vld [vmem:[#allocation6 + $0xd38] sm:$0xff]
    %v909 = vld [vmem:[#allocation6 + $0xd40] sm:$0xff]
    %v910 = vld [vmem:[#allocation6 + $0xd48] sm:$0xff]
    %v911 = vld [vmem:[#allocation6 + $0xd50] sm:$0xff]
    %v912 = vld [vmem:[#allocation6 + $0xd58] sm:$0xff]
    %v913 = vld [vmem:[#allocation6 + $0xd60] sm:$0xff]
    %v914 = vld [vmem:[#allocation6 + $0xd68] sm:$0xff]
    %v915 = vld [vmem:[#allocation6 + $0xd70] sm:$0xff]
    %v916 = vld [vmem:[#allocation6 + $0xd78] sm:$0xff]
    %v917 = vld [vmem:[#allocation6 + $0xd80] sm:$0xff]
    %v918 = vld [vmem:[#allocation6 + $0xd88] sm:$0xff]
    %v919 = vld [vmem:[#allocation6 + $0xd90] sm:$0xff]
    %v920 = vld [vmem:[#allocation6 + $0xd98] sm:$0xff]
    %v921 = vld [vmem:[#allocation6 + $0xda0] sm:$0xff]
    %v922 = vld [vmem:[#allocation6 + $0xda8] sm:$0xff]
    %v923 = vld [vmem:[#allocation6 + $0xdb0] sm:$0xff]
    %v924 = vld [vmem:[#allocation6 + $0xdb8] sm:$0xff]
    %v925 = vld [vmem:[#allocation6 + $0xdc0] sm:$0xff]
    %v926 = vld [vmem:[#allocation6 + $0xdc8] sm:$0xff]
    %v927 = vld [vmem:[#allocation6 + $0xdd0] sm:$0xff]
    %v928 = vld [vmem:[#allocation6 + $0xdd8] sm:$0xff]
    %v929 = vld [vmem:[#allocation6 + $0xde0] sm:$0xff]
    %v930 = vld [vmem:[#allocation6 + $0xde8] sm:$0xff]
    %v931 = vld [vmem:[#allocation6 + $0xdf0] sm:$0xff]
    %v932 = vld [vmem:[#allocation6 + $0xdf8] sm:$0xff]
    %v933 = vld [vmem:[#allocation6 + $0xe00] sm:$0xff]
    %v934 = vld [vmem:[#allocation6 + $0xe08] sm:$0xff]
    %v935 = vld [vmem:[#allocation6 + $0xe10] sm:$0xff]
    %v936 = vld [vmem:[#allocation6 + $0xe18] sm:$0xff]
    %v937 = vld [vmem:[#allocation6 + $0xe20] sm:$0xff]
    %v938 = vld [vmem:[#allocation6 + $0xe28] sm:$0xff]
    %v939 = vld [vmem:[#allocation6 + $0xe30] sm:$0xff]
    %v940 = vld [vmem:[#allocation6 + $0xe38] sm:$0xff]
    %v941 = vld [vmem:[#allocation6 + $0xe40] sm:$0xff]
    %v942 = vld [vmem:[#allocation6 + $0xe48] sm:$0xff]
    %v943 = vld [vmem:[#allocation6 + $0xe50] sm:$0xff]
    %v944 = vld [vmem:[#allocation6 + $0xe58] sm:$0xff]
    %v945 = vld [vmem:[#allocation6 + $0xe60] sm:$0xff]
    %v946 = vld [vmem:[#allocation6 + $0xe68] sm:$0xff]
    %v947 = vld [vmem:[#allocation6 + $0xe70] sm:$0xff]
    %v948 = vld [vmem:[#allocation6 + $0xe78] sm:$0xff]
    %v949 = vld [vmem:[#allocation6 + $0xe80] sm:$0xff]
    %v950 = vld [vmem:[#allocation6 + $0xe88] sm:$0xff]
    %v951 = vld [vmem:[#allocation6 + $0xe90] sm:$0xff]
    %v952 = vld [vmem:[#allocation6 + $0xe98] sm:$0xff]
    %v953 = vld [vmem:[#allocation6 + $0xea0] sm:$0xff]
    %v954 = vld [vmem:[#allocation6 + $0xea8] sm:$0xff]
    %v955 = vld [vmem:[#allocation6 + $0xeb0] sm:$0xff]
    %v956 = vld [vmem:[#allocation6 + $0xeb8] sm:$0xff]
    %v957 = vld [vmem:[#allocation6 + $0xec0] sm:$0xff]
    %v958 = vld [vmem:[#allocation6 + $0xec8] sm:$0xff]
    %v959 = vld [vmem:[#allocation6 + $0xed0] sm:$0xff]
    %v960 = vld [vmem:[#allocation6 + $0xed8] sm:$0xff]
    %v961 = vld [vmem:[#allocation6 + $0xee0] sm:$0xff]
    %v962 = vld [vmem:[#allocation6 + $0xee8] sm:$0xff]
    %v963 = vld [vmem:[#allocation6 + $0xef0] sm:$0xff]
    %v964 = vld [vmem:[#allocation6 + $0xef8] sm:$0xff]
    %v965 = vld [vmem:[#allocation6 + $0xf00] sm:$0xff]
    %v966 = vld [vmem:[#allocation6 + $0xf08] sm:$0xff]
    %v967 = vld [vmem:[#allocation6 + $0xf10] sm:$0xff]
    %v968 = vld [vmem:[#allocation6 + $0xf18] sm:$0xff]
    %v969 = vld [vmem:[#allocation6 + $0xf20] sm:$0xff]
    %v970 = vld [vmem:[#allocation6 + $0xf28] sm:$0xff]
    %v971 = vld [vmem:[#allocation6 + $0xf30] sm:$0xff]
    %v972 = vld [vmem:[#allocation6 + $0xf38] sm:$0xff]
    %v973 = vld [vmem:[#allocation6 + $0xf40] sm:$0xff]
    %v974 = vld [vmem:[#allocation6 + $0xf48] sm:$0xff]
    %v975 = vld [vmem:[#allocation6 + $0xf50] sm:$0xff]
    %v976 = vld [vmem:[#allocation6 + $0xf58] sm:$0xff]
    %v977 = vld [vmem:[#allocation6 + $0xf60] sm:$0xff]
    %v978 = vld [vmem:[#allocation6 + $0xf68] sm:$0xff]
    %v979 = vld [vmem:[#allocation6 + $0xf70] sm:$0xff]
    %v980 = vld [vmem:[#allocation6 + $0xf78] sm:$0xff]
    %v981 = vld [vmem:[#allocation6 + $0xf80] sm:$0xff]
    %v982 = vld [vmem:[#allocation6 + $0xf88] sm:$0xff]
    %v983 = vld [vmem:[#allocation6 + $0xf90] sm:$0xff]
    %v984 = vld [vmem:[#allocation6 + $0xf98] sm:$0xff]
    %v985 = vld [vmem:[#allocation6 + $0xfa0] sm:$0xff]
    %v986 = vld [vmem:[#allocation6 + $0xfa8] sm:$0xff]
    %v987 = vld [vmem:[#allocation6 + $0xfb0] sm:$0xff]
    %v988 = vld [vmem:[#allocation6 + $0xfb8] sm:$0xff]
    %v989 = vld [vmem:[#allocation6 + $0xfc0] sm:$0xff]
    %v990 = vld [vmem:[#allocation6 + $0xfc8] sm:$0xff]
    %v991 = vld [vmem:[#allocation6 + $0xfd0] sm:$0xff]
    %v992 = vld [vmem:[#allocation6 + $0xfd8] sm:$0xff]
    %v993 = vld [vmem:[#allocation6 + $0xfe0] sm:$0xff]
    %v994 = vld [vmem:[#allocation6 + $0xfe8] sm:$0xff]
    %v995 = vld [vmem:[#allocation6 + $0xff0] sm:$0xff]
    %v996 = vld [vmem:[#allocation6 + $0xff8] sm:$0xff]
    %v997 = vld [vmem:[#allocation6 + $0x1000] sm:$0xff]
    %v998 = vld [vmem:[#allocation6 + $0x1008] sm:$0xff]
    %v999 = vld [vmem:[#allocation6 + $0x1010] sm:$0xff]
    %v1000 = vld [vmem:[#allocation6 + $0x1018] sm:$0xff]
    %v1001 = vld [vmem:[#allocation6 + $0x1020] sm:$0xff]
    %v1002 = vld [vmem:[#allocation6 + $0x1028] sm:$0xff]
    %v1003 = vld [vmem:[#allocation6 + $0x1030] sm:$0xff]
    %v1004 = vld [vmem:[#allocation6 + $0x1038] sm:$0xff]
    %v1005 = vld [vmem:[#allocation6 + $0x1040] sm:$0xff]
    %v1006 = vld [vmem:[#allocation6 + $0x1048] sm:$0xff]
    %v1007 = vld [vmem:[#allocation6 + $0x1050] sm:$0xff]
    %v1008 = vld [vmem:[#allocation6 + $0x1058] sm:$0xff]
    %v1009 = vld [vmem:[#allocation6 + $0x1060] sm:$0xff]
    %v1010 = vld [vmem:[#allocation6 + $0x1068] sm:$0xff]
    %v1011 = vld [vmem:[#allocation6 + $0x1070] sm:$0xff]
    %v1012 = vld [vmem:[#allocation6 + $0x1078] sm:$0xff]
    %v1013 = vld [vmem:[#allocation6 + $0x1080] sm:$0xff]
    %v1014 = vld [vmem:[#allocation6 + $0x1088] sm:$0xff]
    %v1015 = vld [vmem:[#allocation6 + $0x1090] sm:$0xff]
    %v1016 = vld [vmem:[#allocation6 + $0x1098] sm:$0xff]
    %v1017 = vld [vmem:[#allocation6 + $0x10a0] sm:$0xff]
    %v1018 = vld [vmem:[#allocation6 + $0x10a8] sm:$0xff]
    %v1019 = vld [vmem:[#allocation6 + $0x10b0] sm:$0xff]
    %v1020 = vld [vmem:[#allocation6 + $0x10b8] sm:$0xff]
    %v1021 = vld [vmem:[#allocation6 + $0x10c0] sm:$0xff]
    %v1022 = vld [vmem:[#allocation6 + $0x10c8] sm:$0xff]
    %v1023 = vld [vmem:[#allocation6 + $0x10d0] sm:$0xff]
    %v1024 = vld [vmem:[#allocation6 + $0x10d8] sm:$0xff]
    %v1025 = vld [vmem:[#allocation6 + $0x10e0] sm:$0xff]
    %v1026 = vld [vmem:[#allocation6 + $0x10e8] sm:$0xff]
    %v1027 = vld [vmem:[#allocation6 + $0x10f0] sm:$0xff]
    %v1028 = vld [vmem:[#allocation6 + $0x10f8] sm:$0xff]
    %v1029 = vld [vmem:[#allocation6 + $0x1100] sm:$0xff]
    %v1030 = vld [vmem:[#allocation6 + $0x1108] sm:$0xff]
    %v1031 = vld [vmem:[#allocation6 + $0x1110] sm:$0xff]
    %v1032 = vld [vmem:[#allocation6 + $0x1118] sm:$0xff]
    %v1033 = vld [vmem:[#allocation6 + $0x1120] sm:$0xff]
    %v1034 = vld [vmem:[#allocation6 + $0x1128] sm:$0xff]
    %v1035 = vld [vmem:[#allocation6 + $0x1130] sm:$0xff]
    %v1036 = vld [vmem:[#allocation6 + $0x1138] sm:$0xff]
    %v1037 = vld [vmem:[#allocation6 + $0x1140] sm:$0xff]
    %v1038 = vld [vmem:[#allocation6 + $0x1148] sm:$0xff]
    %v1039 = vld [vmem:[#allocation6 + $0x1150] sm:$0xff]
    %v1040 = vld [vmem:[#allocation6 + $0x1158] sm:$0xff]
    %v1041 = vld [vmem:[#allocation6 + $0x1160] sm:$0xff]
    %v1042 = vld [vmem:[#allocation6 + $0x1168] sm:$0xff]
    %v1043 = vld [vmem:[#allocation6 + $0x1170] sm:$0xff]
    %v1044 = vld [vmem:[#allocation6 + $0x1178] sm:$0xff]
    %v1045 = vld [vmem:[#allocation6 + $0x1180] sm:$0xff]
    %v1046 = vld [vmem:[#allocation6 + $0x1188] sm:$0xff]
    %v1047 = vld [vmem:[#allocation6 + $0x1190] sm:$0xff]
    %v1048 = vld [vmem:[#allocation6 + $0x1198] sm:$0xff]
    %v1049 = vld [vmem:[#allocation6 + $0x11a0] sm:$0xff]
    %v1050 = vld [vmem:[#allocation6 + $0x11a8] sm:$0xff]
    %v1051 = vld [vmem:[#allocation6 + $0x11b0] sm:$0xff]
    %v1052 = vld [vmem:[#allocation6 + $0x11b8] sm:$0xff]
    %v1053 = vld [vmem:[#allocation6 + $0x11c0] sm:$0xff]
    %v1054 = vld [vmem:[#allocation6 + $0x11c8] sm:$0xff]
    %v1055 = vld [vmem:[#allocation6 + $0x11d0] sm:$0xff]
    %v1056 = vld [vmem:[#allocation6 + $0x11d8] sm:$0xff]
    %v1057 = vld [vmem:[#allocation6 + $0x11e0] sm:$0xff]
    %v1058 = vld [vmem:[#allocation6 + $0x11e8] sm:$0xff]
    %v1059 = vld [vmem:[#allocation6 + $0x11f0] sm:$0xff]
    %v1060 = vld [vmem:[#allocation6 + $0x11f8] sm:$0xff]
    %v1061 = vld [vmem:[#allocation6 + $0x1200] sm:$0xff]
    %v1062 = vld [vmem:[#allocation6 + $0x1208] sm:$0xff]
    %v1063 = vld [vmem:[#allocation6 + $0x1210] sm:$0xff]
    %v1064 = vld [vmem:[#allocation6 + $0x1218] sm:$0xff]
    %v1065 = vld [vmem:[#allocation6 + $0x1220] sm:$0xff]
    %v1066 = vld [vmem:[#allocation6 + $0x1228] sm:$0xff]
    %v1067 = vld [vmem:[#allocation6 + $0x1230] sm:$0xff]
    %v1068 = vld [vmem:[#allocation6 + $0x1238] sm:$0xff]
    %v1069 = vld [vmem:[#allocation6 + $0x1240] sm:$0xff]
    %v1070 = vld [vmem:[#allocation6 + $0x1248] sm:$0xff]
    %v1071 = vld [vmem:[#allocation6 + $0x1250] sm:$0xff]
    %v1072 = vld [vmem:[#allocation6 + $0x1258] sm:$0xff]
    %v1073 = vld [vmem:[#allocation6 + $0x1260] sm:$0xff]
    %v1074 = vld [vmem:[#allocation6 + $0x1268] sm:$0xff]
    %v1075 = vld [vmem:[#allocation6 + $0x1270] sm:$0xff]
    %v1076 = vld [vmem:[#allocation6 + $0x1278] sm:$0xff]
    %v1077 = vld [vmem:[#allocation6 + $0x1280] sm:$0xff]
    %v1078 = vld [vmem:[#allocation6 + $0x1288] sm:$0xff]
    %v1079 = vld [vmem:[#allocation6 + $0x1290] sm:$0xff]
    %v1080 = vld [vmem:[#allocation6 + $0x1298] sm:$0xff]
    %v1081 = vld [vmem:[#allocation6 + $0x12a0] sm:$0xff]
    %v1082 = vld [vmem:[#allocation6 + $0x12a8] sm:$0xff]
    %v1083 = vld [vmem:[#allocation6 + $0x12b0] sm:$0xff]
    %v1084 = vld [vmem:[#allocation6 + $0x12b8] sm:$0xff]
    %v1085 = vld [vmem:[#allocation6 + $0x12c0] sm:$0xff]
    %v1086 = vld [vmem:[#allocation6 + $0x12c8] sm:$0xff]
    %v1087 = vld [vmem:[#allocation6 + $0x12d0] sm:$0xff]
    %v1088 = vld [vmem:[#allocation6 + $0x12d8] sm:$0xff]
    %v1089 = vld [vmem:[#allocation6 + $0x12e0] sm:$0xff]
    %v1090 = vld [vmem:[#allocation6 + $0x12e8] sm:$0xff]
    %v1091 = vld [vmem:[#allocation6 + $0x12f0] sm:$0xff]
    %v1092 = vld [vmem:[#allocation6 + $0x12f8] sm:$0xff]
    %v1093 = vld [vmem:[#allocation6 + $0x1300] sm:$0xff]
    %v1094 = vld [vmem:[#allocation6 + $0x1308] sm:$0xff]
    %v1095 = vld [vmem:[#allocation6 + $0x1310] sm:$0xff]
    %v1096 = vld [vmem:[#allocation6 + $0x1318] sm:$0xff]
    %v1097 = vld [vmem:[#allocation6 + $0x1320] sm:$0xff]
    %v1098 = vld [vmem:[#allocation6 + $0x1328] sm:$0xff]
    %v1099 = vld [vmem:[#allocation6 + $0x1330] sm:$0xff]
    %v1100 = vld [vmem:[#allocation6 + $0x1338] sm:$0xff]
    %v1101 = vld [vmem:[#allocation6 + $0x1340] sm:$0xff]
    %v1102 = vld [vmem:[#allocation6 + $0x1348] sm:$0xff]
    %v1103 = vld [vmem:[#allocation6 + $0x1350] sm:$0xff]
    %v1104 = vld [vmem:[#allocation6 + $0x1358] sm:$0xff]
    %v1105 = vld [vmem:[#allocation6 + $0x1360] sm:$0xff]
    %v1106 = vld [vmem:[#allocation6 + $0x1368] sm:$0xff]
    %v1107 = vld [vmem:[#allocation6 + $0x1370] sm:$0xff]
    %v1108 = vld [vmem:[#allocation6 + $0x1378] sm:$0xff]
    %v1109 = vld [vmem:[#allocation6 + $0x1380] sm:$0xff]
    %v1110 = vld [vmem:[#allocation6 + $0x1388] sm:$0xff]
    %v1111 = vld [vmem:[#allocation6 + $0x1390] sm:$0xff]
    %v1112 = vld [vmem:[#allocation6 + $0x1398] sm:$0xff]
    %v1113 = vld [vmem:[#allocation6 + $0x13a0] sm:$0xff]
    %v1114 = vld [vmem:[#allocation6 + $0x13a8] sm:$0xff]
    %v1115 = vld [vmem:[#allocation6 + $0x13b0] sm:$0xff]
    %v1116 = vld [vmem:[#allocation6 + $0x13b8] sm:$0xff]
    %v1117 = vld [vmem:[#allocation6 + $0x13c0] sm:$0xff]
    %v1118 = vld [vmem:[#allocation6 + $0x13c8] sm:$0xff]
    %v1119 = vld [vmem:[#allocation6 + $0x13d0] sm:$0xff]
    %v1120 = vld [vmem:[#allocation6 + $0x13d8] sm:$0xff]
    %v1121 = vld [vmem:[#allocation6 + $0x13e0] sm:$0xff]
    %v1122 = vld [vmem:[#allocation6 + $0x13e8] sm:$0xff]
    %v1123 = vld [vmem:[#allocation6 + $0x13f0] sm:$0xff]
    %v1124 = vld [vmem:[#allocation6 + $0x13f8] sm:$0xff]
    %v1125 = vld [vmem:[#allocation6 + $0x1400] sm:$0xff]
    %v1126 = vld [vmem:[#allocation6 + $0x1408] sm:$0xff]
    %v1127 = vld [vmem:[#allocation6 + $0x1410] sm:$0xff]
    %v1128 = vld [vmem:[#allocation6 + $0x1418] sm:$0xff]
    %v1129 = vld [vmem:[#allocation6 + $0x1420] sm:$0xff]
    %v1130 = vld [vmem:[#allocation6 + $0x1428] sm:$0xff]
    %v1131 = vld [vmem:[#allocation6 + $0x1430] sm:$0xff]
    %v1132 = vld [vmem:[#allocation6 + $0x1438] sm:$0xff]
    %v1133 = vld [vmem:[#allocation6 + $0x1440] sm:$0xff]
    %v1134 = vld [vmem:[#allocation6 + $0x1448] sm:$0xff]
    %v1135 = vld [vmem:[#allocation6 + $0x1450] sm:$0xff]
    %v1136 = vld [vmem:[#allocation6 + $0x1458] sm:$0xff]
    %v1137 = vld [vmem:[#allocation6 + $0x1460] sm:$0xff]
    %v1138 = vld [vmem:[#allocation6 + $0x1468] sm:$0xff]
    %v1139 = vld [vmem:[#allocation6 + $0x1470] sm:$0xff]
    %v1140 = vld [vmem:[#allocation6 + $0x1478] sm:$0xff]
    %v1141 = vld [vmem:[#allocation6 + $0x1480] sm:$0xff]
    %v1142 = vld [vmem:[#allocation6 + $0x1488] sm:$0xff]
    %v1143 = vld [vmem:[#allocation6 + $0x1490] sm:$0xff]
    %v1144 = vld [vmem:[#allocation6 + $0x1498] sm:$0xff]
    %v1145 = vld [vmem:[#allocation6 + $0x14a0] sm:$0xff]
    %v1146 = vld [vmem:[#allocation6 + $0x14a8] sm:$0xff]
    %v1147 = vld [vmem:[#allocation6 + $0x14b0] sm:$0xff]
    %v1148 = vld [vmem:[#allocation6 + $0x14b8] sm:$0xff]
    %v1149 = vld [vmem:[#allocation6 + $0x14c0] sm:$0xff]
    %v1150 = vld [vmem:[#allocation6 + $0x14c8] sm:$0xff]
    %v1151 = vld [vmem:[#allocation6 + $0x14d0] sm:$0xff]
    %v1152 = vld [vmem:[#allocation6 + $0x14d8] sm:$0xff]
    %v1153 = vld [vmem:[#allocation6 + $0x14e0] sm:$0xff]
    %v1154 = vld [vmem:[#allocation6 + $0x14e8] sm:$0xff]
    %v1155 = vld [vmem:[#allocation6 + $0x14f0] sm:$0xff]
    %v1156 = vld [vmem:[#allocation6 + $0x14f8] sm:$0xff]
    %v1157 = vld [vmem:[#allocation6 + $0x1500] sm:$0xff]
    %v1158 = vld [vmem:[#allocation6 + $0x1508] sm:$0xff]
    %v1159 = vld [vmem:[#allocation6 + $0x1510] sm:$0xff]
    %v1160 = vld [vmem:[#allocation6 + $0x1518] sm:$0xff]
    %v1161 = vld [vmem:[#allocation6 + $0x1520] sm:$0xff]
    %v1162 = vld [vmem:[#allocation6 + $0x1528] sm:$0xff]
    %v1163 = vld [vmem:[#allocation6 + $0x1530] sm:$0xff]
    %v1164 = vld [vmem:[#allocation6 + $0x1538] sm:$0xff]
    %v1165 = vld [vmem:[#allocation6 + $0x1540] sm:$0xff]
    %v1166 = vld [vmem:[#allocation6 + $0x1548] sm:$0xff]
    %v1167 = vld [vmem:[#allocation6 + $0x1550] sm:$0xff]
    %v1168 = vld [vmem:[#allocation6 + $0x1558] sm:$0xff]
    %v1169 = vld [vmem:[#allocation6 + $0x1560] sm:$0xff]
    %v1170 = vld [vmem:[#allocation6 + $0x1568] sm:$0xff]
    %v1171 = vld [vmem:[#allocation6 + $0x1570] sm:$0xff]
    %v1172 = vld [vmem:[#allocation6 + $0x1578] sm:$0xff]
    %v1173 = vld [vmem:[#allocation6 + $0x1580] sm:$0xff]
    %v1174 = vld [vmem:[#allocation6 + $0x1588] sm:$0xff]
    %v1175 = vld [vmem:[#allocation6 + $0x1590] sm:$0xff]
    %v1176 = vld [vmem:[#allocation6 + $0x1598] sm:$0xff]
    %v1177 = vld [vmem:[#allocation6 + $0x15a0] sm:$0xff]
    %v1178 = vld [vmem:[#allocation6 + $0x15a8] sm:$0xff]
    %v1179 = vld [vmem:[#allocation6 + $0x15b0] sm:$0xff]
    %v1180 = vld [vmem:[#allocation6 + $0x15b8] sm:$0xff]
    %v1181 = vld [vmem:[#allocation6 + $0x15c0] sm:$0xff]
    %v1182 = vld [vmem:[#allocation6 + $0x15c8] sm:$0xff]
    %v1183 = vld [vmem:[#allocation6 + $0x15d0] sm:$0xff]
    %v1184 = vld [vmem:[#allocation6 + $0x15d8] sm:$0xff]
    %v1185 = vld [vmem:[#allocation6 + $0x15e0] sm:$0xff]
    %v1186 = vld [vmem:[#allocation6 + $0x15e8] sm:$0xff]
    %v1187 = vld [vmem:[#allocation6 + $0x15f0] sm:$0xff]
    %v1188 = vld [vmem:[#allocation6 + $0x15f8] sm:$0xff]
    %v1189 = vld [vmem:[#allocation6 + $0x1600] sm:$0xff]
    %v1190 = vld [vmem:[#allocation6 + $0x1608] sm:$0xff]
    %v1191 = vld [vmem:[#allocation6 + $0x1610] sm:$0xff]
    %v1192 = vld [vmem:[#allocation6 + $0x1618] sm:$0xff]
    %v1193 = vld [vmem:[#allocation6 + $0x1620] sm:$0xff]
    %v1194 = vld [vmem:[#allocation6 + $0x1628] sm:$0xff]
    %v1195 = vld [vmem:[#allocation6 + $0x1630] sm:$0xff]
    %v1196 = vld [vmem:[#allocation6 + $0x1638] sm:$0xff]
    %v1197 = vld [vmem:[#allocation6 + $0x1640] sm:$0xff]
    %v1198 = vld [vmem:[#allocation6 + $0x1648] sm:$0xff]
    %v1199 = vld [vmem:[#allocation6 + $0x1650] sm:$0xff]
    %v1200 = vld [vmem:[#allocation6 + $0x1658] sm:$0xff]
    %v1201 = vld [vmem:[#allocation6 + $0x1660] sm:$0xff]
    %v1202 = vld [vmem:[#allocation6 + $0x1668] sm:$0xff]
    %v1203 = vld [vmem:[#allocation6 + $0x1670] sm:$0xff]
    %v1204 = vld [vmem:[#allocation6 + $0x1678] sm:$0xff]
    %v1205 = vld [vmem:[#allocation6 + $0x1680] sm:$0xff]
    %v1206 = vld [vmem:[#allocation6 + $0x1688] sm:$0xff]
    %v1207 = vld [vmem:[#allocation6 + $0x1690] sm:$0xff]
    %v1208 = vld [vmem:[#allocation6 + $0x1698] sm:$0xff]
    %v1209 = vld [vmem:[#allocation6 + $0x16a0] sm:$0xff]
    %v1210 = vld [vmem:[#allocation6 + $0x16a8] sm:$0xff]
    %v1211 = vld [vmem:[#allocation6 + $0x16b0] sm:$0xff]
    %v1212 = vld [vmem:[#allocation6 + $0x16b8] sm:$0xff]
    %v1213 = vld [vmem:[#allocation6 + $0x16c0] sm:$0xff]
    %v1214 = vld [vmem:[#allocation6 + $0x16c8] sm:$0xff]
    %v1215 = vld [vmem:[#allocation6 + $0x16d0] sm:$0xff]
    %v1216 = vld [vmem:[#allocation6 + $0x16d8] sm:$0xff]
    %v1217 = vld [vmem:[#allocation6 + $0x16e0] sm:$0xff]
    %v1218 = vld [vmem:[#allocation6 + $0x16e8] sm:$0xff]
    %v1219 = vld [vmem:[#allocation6 + $0x16f0] sm:$0xff]
    %v1220 = vld [vmem:[#allocation6 + $0x16f8] sm:$0xff]
    %v1221 = vld [vmem:[#allocation6 + $0x1700] sm:$0xff]
    %v1222 = vld [vmem:[#allocation6 + $0x1708] sm:$0xff]
    %v1223 = vld [vmem:[#allocation6 + $0x1710] sm:$0xff]
    %v1224 = vld [vmem:[#allocation6 + $0x1718] sm:$0xff]
    %v1225 = vld [vmem:[#allocation6 + $0x1720] sm:$0xff]
    %v1226 = vld [vmem:[#allocation6 + $0x1728] sm:$0xff]
    %v1227 = vld [vmem:[#allocation6 + $0x1730] sm:$0xff]
    %v1228 = vld [vmem:[#allocation6 + $0x1738] sm:$0xff]
    %v1229 = vld [vmem:[#allocation6 + $0x1740] sm:$0xff]
    %v1230 = vld [vmem:[#allocation6 + $0x1748] sm:$0xff]
    %v1231 = vld [vmem:[#allocation6 + $0x1750] sm:$0xff]
    %v1232 = vld [vmem:[#allocation6 + $0x1758] sm:$0xff]
    %v1233 = vld [vmem:[#allocation6 + $0x1760] sm:$0xff]
    %v1234 = vld [vmem:[#allocation6 + $0x1768] sm:$0xff]
    %v1235 = vld [vmem:[#allocation6 + $0x1770] sm:$0xff]
    %v1236 = vld [vmem:[#allocation6 + $0x1778] sm:$0xff]
    %v1237 = vld [vmem:[#allocation6 + $0x1780] sm:$0xff]
    %v1238 = vld [vmem:[#allocation6 + $0x1788] sm:$0xff]
    %v1239 = vld [vmem:[#allocation6 + $0x1790] sm:$0xff]
    %v1240 = vld [vmem:[#allocation6 + $0x1798] sm:$0xff]
    %v1241 = vld [vmem:[#allocation6 + $0x17a0] sm:$0xff]
    %v1242 = vld [vmem:[#allocation6 + $0x17a8] sm:$0xff]
    %v1243 = vld [vmem:[#allocation6 + $0x17b0] sm:$0xff]
    %v1244 = vld [vmem:[#allocation6 + $0x17b8] sm:$0xff]
    %v1245 = vld [vmem:[#allocation6 + $0x17c0] sm:$0xff]
    %v1246 = vld [vmem:[#allocation6 + $0x17c8] sm:$0xff]
    %v1247 = vld [vmem:[#allocation6 + $0x17d0] sm:$0xff]
    %v1248 = vld [vmem:[#allocation6 + $0x17d8] sm:$0xff]
    %v1249 = vld [vmem:[#allocation6 + $0x17e0] sm:$0xff]
    %v1250 = vld [vmem:[#allocation6 + $0x17e8] sm:$0xff]
    %v1251 = vld [vmem:[#allocation6 + $0x17f0] sm:$0xff]
    %v1252 = vld [vmem:[#allocation6 + $0x17f8] sm:$0xff]
    %v1253 = vld [vmem:[#allocation6 + $0x1800] sm:$0xff]
    %v1254 = vld [vmem:[#allocation6 + $0x1808] sm:$0xff]
    %v1255 = vld [vmem:[#allocation6 + $0x1810] sm:$0xff]
    %v1256 = vld [vmem:[#allocation6 + $0x1818] sm:$0xff]
    %v1257 = vld [vmem:[#allocation6 + $0x1820] sm:$0xff]
    %v1258 = vld [vmem:[#allocation6 + $0x1828] sm:$0xff]
    %v1259 = vld [vmem:[#allocation6 + $0x1830] sm:$0xff]
    %v1260 = vld [vmem:[#allocation6 + $0x1838] sm:$0xff]
    %v1261 = vld [vmem:[#allocation6 + $0x1840] sm:$0xff]
    %v1262 = vld [vmem:[#allocation6 + $0x1848] sm:$0xff]
    %v1263 = vld [vmem:[#allocation6 + $0x1850] sm:$0xff]
    %v1264 = vld [vmem:[#allocation6 + $0x1858] sm:$0xff]
    %v1265 = vld [vmem:[#allocation6 + $0x1860] sm:$0xff]
    %v1266 = vld [vmem:[#allocation6 + $0x1868] sm:$0xff]
    %v1267 = vld [vmem:[#allocation6 + $0x1870] sm:$0xff]
    %v1268 = vld [vmem:[#allocation6 + $0x1878] sm:$0xff]
    %v1269 = vld [vmem:[#allocation6 + $0x1880] sm:$0xff]
    %v1270 = vld [vmem:[#allocation6 + $0x1888] sm:$0xff]
    %v1271 = vld [vmem:[#allocation6 + $0x1890] sm:$0xff]
    %v1272 = vld [vmem:[#allocation6 + $0x1898] sm:$0xff]
    %v1273 = vld [vmem:[#allocation6 + $0x18a0] sm:$0xff]
    %v1274 = vld [vmem:[#allocation6 + $0x18a8] sm:$0xff]
    %v1275 = vld [vmem:[#allocation6 + $0x18b0] sm:$0xff]
    %v1276 = vld [vmem:[#allocation6 + $0x18b8] sm:$0xff]
    %v1277 = vld [vmem:[#allocation6 + $0x18c0] sm:$0xff]
    %v1278 = vld [vmem:[#allocation6 + $0x18c8] sm:$0xff]
    %v1279 = vld [vmem:[#allocation6 + $0x18d0] sm:$0xff]
    %v1280 = vld [vmem:[#allocation6 + $0x18d8] sm:$0xff]
    %v1281 = vld [vmem:[#allocation6 + $0x18e0] sm:$0xff]
    %v1282 = vld [vmem:[#allocation6 + $0x18e8] sm:$0xff]
    %v1283 = vld [vmem:[#allocation6 + $0x18f0] sm:$0xff]
    %v1284 = vld [vmem:[#allocation6 + $0x18f8] sm:$0xff]
    %v1285 = vld [vmem:[#allocation6 + $0x1900] sm:$0xff]
    %v1286 = vld [vmem:[#allocation6 + $0x1908] sm:$0xff]
    %v1287 = vld [vmem:[#allocation6 + $0x1910] sm:$0xff]
    %v1288 = vld [vmem:[#allocation6 + $0x1918] sm:$0xff]
    %v1289 = vld [vmem:[#allocation6 + $0x1920] sm:$0xff]
    %v1290 = vld [vmem:[#allocation6 + $0x1928] sm:$0xff]
    %v1291 = vld [vmem:[#allocation6 + $0x1930] sm:$0xff]
    %v1292 = vld [vmem:[#allocation6 + $0x1938] sm:$0xff]
    %v1293 = vld [vmem:[#allocation6 + $0x1940] sm:$0xff]
    %v1294 = vld [vmem:[#allocation6 + $0x1948] sm:$0xff]
    %v1295 = vld [vmem:[#allocation6 + $0x1950] sm:$0xff]
    %v1296 = vld [vmem:[#allocation6 + $0x1958] sm:$0xff]
    %v1297 = vld [vmem:[#allocation6 + $0x1960] sm:$0xff]
    %v1298 = vld [vmem:[#allocation6 + $0x1968] sm:$0xff]
    %v1299 = vld [vmem:[#allocation6 + $0x1970] sm:$0xff]
    %v1300 = vld [vmem:[#allocation6 + $0x1978] sm:$0xff]
    %v1301 = vld [vmem:[#allocation6 + $0x1980] sm:$0xff]
    %v1302 = vld [vmem:[#allocation6 + $0x1988] sm:$0xff]
    %v1303 = vld [vmem:[#allocation6 + $0x1990] sm:$0xff]
    %v1304 = vld [vmem:[#allocation6 + $0x1998] sm:$0xff]
    %v1305 = vld [vmem:[#allocation6 + $0x19a0] sm:$0xff]
    %v1306 = vld [vmem:[#allocation6 + $0x19a8] sm:$0xff]
    %v1307 = vld [vmem:[#allocation6 + $0x19b0] sm:$0xff]
    %v1308 = vld [vmem:[#allocation6 + $0x19b8] sm:$0xff]
    %v1309 = vld [vmem:[#allocation6 + $0x19c0] sm:$0xff]
    %v1310 = vld [vmem:[#allocation6 + $0x19c8] sm:$0xff]
    %v1311 = vld [vmem:[#allocation6 + $0x19d0] sm:$0xff]
    %v1312 = vld [vmem:[#allocation6 + $0x19d8] sm:$0xff]
    %v1313 = vld [vmem:[#allocation6 + $0x19e0] sm:$0xff]
    %v1314 = vld [vmem:[#allocation6 + $0x19e8] sm:$0xff]
    %v1315 = vld [vmem:[#allocation6 + $0x19f0] sm:$0xff]
    %v1316 = vld [vmem:[#allocation6 + $0x19f8] sm:$0xff]
    %v1317 = vld [vmem:[#allocation6 + $0x1a00] sm:$0xff]
    %v1318 = vld [vmem:[#allocation6 + $0x1a08] sm:$0xff]
    %v1319 = vld [vmem:[#allocation6 + $0x1a10] sm:$0xff]
    %v1320 = vld [vmem:[#allocation6 + $0x1a18] sm:$0xff]
    %v1321 = vld [vmem:[#allocation6 + $0x1a20] sm:$0xff]
    %v1322 = vld [vmem:[#allocation6 + $0x1a28] sm:$0xff]
    %v1323 = vld [vmem:[#allocation6 + $0x1a30] sm:$0xff]
    %v1324 = vld [vmem:[#allocation6 + $0x1a38] sm:$0xff]
    %v1325 = vld [vmem:[#allocation6 + $0x1a40] sm:$0xff]
    %v1326 = vld [vmem:[#allocation6 + $0x1a48] sm:$0xff]
    %v1327 = vld [vmem:[#allocation6 + $0x1a50] sm:$0xff]
    %v1328 = vld [vmem:[#allocation6 + $0x1a58] sm:$0xff]
    %v1329 = vld [vmem:[#allocation6 + $0x1a60] sm:$0xff]
    %v1330 = vld [vmem:[#allocation6 + $0x1a68] sm:$0xff]
    %v1331 = vld [vmem:[#allocation6 + $0x1a70] sm:$0xff]
    %v1332 = vld [vmem:[#allocation6 + $0x1a78] sm:$0xff]
    %v1333 = vld [vmem:[#allocation6 + $0x1a80] sm:$0xff]
    %v1334 = vld [vmem:[#allocation6 + $0x1a88] sm:$0xff]
    %v1335 = vld [vmem:[#allocation6 + $0x1a90] sm:$0xff]
    %v1336 = vld [vmem:[#allocation6 + $0x1a98] sm:$0xff]
    %v1337 = vld [vmem:[#allocation6 + $0x1aa0] sm:$0xff]
    %v1338 = vld [vmem:[#allocation6 + $0x1aa8] sm:$0xff]
    %v1339 = vld [vmem:[#allocation6 + $0x1ab0] sm:$0xff]
    %v1340 = vld [vmem:[#allocation6 + $0x1ab8] sm:$0xff]
    %v1341 = vld [vmem:[#allocation6 + $0x1ac0] sm:$0xff]
    %v1342 = vld [vmem:[#allocation6 + $0x1ac8] sm:$0xff]
    %v1343 = vld [vmem:[#allocation6 + $0x1ad0] sm:$0xff]
    %v1344 = vld [vmem:[#allocation6 + $0x1ad8] sm:$0xff]
    %v1345 = vld [vmem:[#allocation6 + $0x1ae0] sm:$0xff]
    %v1346 = vld [vmem:[#allocation6 + $0x1ae8] sm:$0xff]
    %v1347 = vld [vmem:[#allocation6 + $0x1af0] sm:$0xff]
    %v1348 = vld [vmem:[#allocation6 + $0x1af8] sm:$0xff]
    %v1349 = vld [vmem:[#allocation6 + $0x1b00] sm:$0xff]
    %v1350 = vld [vmem:[#allocation6 + $0x1b08] sm:$0xff]
    %v1351 = vld [vmem:[#allocation6 + $0x1b10] sm:$0xff]
    %v1352 = vld [vmem:[#allocation6 + $0x1b18] sm:$0xff]
    %v1353 = vld [vmem:[#allocation6 + $0x1b20] sm:$0xff]
    %v1354 = vld [vmem:[#allocation6 + $0x1b28] sm:$0xff]
    %v1355 = vld [vmem:[#allocation6 + $0x1b30] sm:$0xff]
    %v1356 = vld [vmem:[#allocation6 + $0x1b38] sm:$0xff]
    %v1357 = vld [vmem:[#allocation6 + $0x1b40] sm:$0xff]
    %v1358 = vld [vmem:[#allocation6 + $0x1b48] sm:$0xff]
    %v1359 = vld [vmem:[#allocation6 + $0x1b50] sm:$0xff]
    %v1360 = vld [vmem:[#allocation6 + $0x1b58] sm:$0xff]
    %v1361 = vld [vmem:[#allocation6 + $0x1b60] sm:$0xff]
    %v1362 = vld [vmem:[#allocation6 + $0x1b68] sm:$0xff]
    %v1363 = vld [vmem:[#allocation6 + $0x1b70] sm:$0xff]
    %v1364 = vld [vmem:[#allocation6 + $0x1b78] sm:$0xff]
    %v1365 = vld [vmem:[#allocation6 + $0x1b80] sm:$0xff]
    %v1366 = vld [vmem:[#allocation6 + $0x1b88] sm:$0xff]
    %v1367 = vld [vmem:[#allocation6 + $0x1b90] sm:$0xff]
    %v1368 = vld [vmem:[#allocation6 + $0x1b98] sm:$0xff]
    %v1369 = vld [vmem:[#allocation6 + $0x1ba0] sm:$0xff]
    %v1370 = vld [vmem:[#allocation6 + $0x1ba8] sm:$0xff]
    %v1371 = vld [vmem:[#allocation6 + $0x1bb0] sm:$0xff]
    %v1372 = vld [vmem:[#allocation6 + $0x1bb8] sm:$0xff]
    %v1373 = vld [vmem:[#allocation6 + $0x1bc0] sm:$0xff]
    %v1374 = vld [vmem:[#allocation6 + $0x1bc8] sm:$0xff]
    %v1375 = vld [vmem:[#allocation6 + $0x1bd0] sm:$0xff]
    %v1376 = vld [vmem:[#allocation6 + $0x1bd8] sm:$0xff]
    %v1377 = vld [vmem:[#allocation6 + $0x1be0] sm:$0xff]
    %v1378 = vld [vmem:[#allocation6 + $0x1be8] sm:$0xff]
    %v1379 = vld [vmem:[#allocation6 + $0x1bf0] sm:$0xff]
    %v1380 = vld [vmem:[#allocation6 + $0x1bf8] sm:$0xff]
    %v1381 = vld [vmem:[#allocation6 + $0x1c00] sm:$0xff]
    %v1382 = vld [vmem:[#allocation6 + $0x1c08] sm:$0xff]
    %v1383 = vld [vmem:[#allocation6 + $0x1c10] sm:$0xff]
    %v1384 = vld [vmem:[#allocation6 + $0x1c18] sm:$0xff]
    %v1385 = vld [vmem:[#allocation6 + $0x1c20] sm:$0xff]
    %v1386 = vld [vmem:[#allocation6 + $0x1c28] sm:$0xff]
    %v1387 = vld [vmem:[#allocation6 + $0x1c30] sm:$0xff]
    %v1388 = vld [vmem:[#allocation6 + $0x1c38] sm:$0xff]
    %v1389 = vld [vmem:[#allocation6 + $0x1c40] sm:$0xff]
    %v1390 = vld [vmem:[#allocation6 + $0x1c48] sm:$0xff]
    %v1391 = vld [vmem:[#allocation6 + $0x1c50] sm:$0xff]
    %v1392 = vld [vmem:[#allocation6 + $0x1c58] sm:$0xff]
    %v1393 = vld [vmem:[#allocation6 + $0x1c60] sm:$0xff]
    %v1394 = vld [vmem:[#allocation6 + $0x1c68] sm:$0xff]
    %v1395 = vld [vmem:[#allocation6 + $0x1c70] sm:$0xff]
    %v1396 = vld [vmem:[#allocation6 + $0x1c78] sm:$0xff]
    %v1397 = vld [vmem:[#allocation6 + $0x1c80] sm:$0xff]
    %v1398 = vld [vmem:[#allocation6 + $0x1c88] sm:$0xff]
    %v1399 = vld [vmem:[#allocation6 + $0x1c90] sm:$0xff]
    %v1400 = vld [vmem:[#allocation6 + $0x1c98] sm:$0xff]
    %v1401 = vld [vmem:[#allocation6 + $0x1ca0] sm:$0xff]
    %v1402 = vld [vmem:[#allocation6 + $0x1ca8] sm:$0xff]
    %v1403 = vld [vmem:[#allocation6 + $0x1cb0] sm:$0xff]
    %v1404 = vld [vmem:[#allocation6 + $0x1cb8] sm:$0xff]
    %v1405 = vld [vmem:[#allocation6 + $0x1cc0] sm:$0xff]
    %v1406 = vld [vmem:[#allocation6 + $0x1cc8] sm:$0xff]
    %v1407 = vld [vmem:[#allocation6 + $0x1cd0] sm:$0xff]
    %v1408 = vld [vmem:[#allocation6 + $0x1cd8] sm:$0xff]
    %v1409 = vld [vmem:[#allocation6 + $0x1ce0] sm:$0xff]
    %v1410 = vld [vmem:[#allocation6 + $0x1ce8] sm:$0xff]
    %v1411 = vld [vmem:[#allocation6 + $0x1cf0] sm:$0xff]
    %v1412 = vld [vmem:[#allocation6 + $0x1cf8] sm:$0xff]
    %v1413 = vld [vmem:[#allocation6 + $0x1d00] sm:$0xff]
    %v1414 = vld [vmem:[#allocation6 + $0x1d08] sm:$0xff]
    %v1415 = vld [vmem:[#allocation6 + $0x1d10] sm:$0xff]
    %v1416 = vld [vmem:[#allocation6 + $0x1d18] sm:$0xff]
    %v1417 = vld [vmem:[#allocation6 + $0x1d20] sm:$0xff]
    %v1418 = vld [vmem:[#allocation6 + $0x1d28] sm:$0xff]
    %v1419 = vld [vmem:[#allocation6 + $0x1d30] sm:$0xff]
    %v1420 = vld [vmem:[#allocation6 + $0x1d38] sm:$0xff]
    %v1421 = vld [vmem:[#allocation6 + $0x1d40] sm:$0xff]
    %v1422 = vld [vmem:[#allocation6 + $0x1d48] sm:$0xff]
    %v1423 = vld [vmem:[#allocation6 + $0x1d50] sm:$0xff]
    %v1424 = vld [vmem:[#allocation6 + $0x1d58] sm:$0xff]
    %v1425 = vld [vmem:[#allocation6 + $0x1d60] sm:$0xff]
    %v1426 = vld [vmem:[#allocation6 + $0x1d68] sm:$0xff]
    %v1427 = vld [vmem:[#allocation6 + $0x1d70] sm:$0xff]
    %v1428 = vld [vmem:[#allocation6 + $0x1d78] sm:$0xff]
    %v1429 = vld [vmem:[#allocation6 + $0x1d80] sm:$0xff]
    %v1430 = vld [vmem:[#allocation6 + $0x1d88] sm:$0xff]
    %v1431 = vld [vmem:[#allocation6 + $0x1d90] sm:$0xff]
    %v1432 = vld [vmem:[#allocation6 + $0x1d98] sm:$0xff]
    %v1433 = vld [vmem:[#allocation6 + $0x1da0] sm:$0xff]
    %v1434 = vld [vmem:[#allocation6 + $0x1da8] sm:$0xff]
    %v1435 = vld [vmem:[#allocation6 + $0x1db0] sm:$0xff]
    %v1436 = vld [vmem:[#allocation6 + $0x1db8] sm:$0xff]
    %v1437 = vld [vmem:[#allocation6 + $0x1dc0] sm:$0xff]
    %v1438 = vld [vmem:[#allocation6 + $0x1dc8] sm:$0xff]
    %v1439 = vld [vmem:[#allocation6 + $0x1dd0] sm:$0xff]
    %v1440 = vld [vmem:[#allocation6 + $0x1dd8] sm:$0xff]
    %v1441 = vld [vmem:[#allocation6 + $0x1de0] sm:$0xff]
    %v1442 = vld [vmem:[#allocation6 + $0x1de8] sm:$0xff]
    %v1443 = vld [vmem:[#allocation6 + $0x1df0] sm:$0xff]
    %v1444 = vld [vmem:[#allocation6 + $0x1df8] sm:$0xff]
    %v1445 = vld [vmem:[#allocation6 + $0x1e00] sm:$0xff]
    %v1446 = vld [vmem:[#allocation6 + $0x1e08] sm:$0xff]
    %v1447 = vld [vmem:[#allocation6 + $0x1e10] sm:$0xff]
    %v1448 = vld [vmem:[#allocation6 + $0x1e18] sm:$0xff]
    %v1449 = vld [vmem:[#allocation6 + $0x1e20] sm:$0xff]
    %v1450 = vld [vmem:[#allocation6 + $0x1e28] sm:$0xff]
    %v1451 = vld [vmem:[#allocation6 + $0x1e30] sm:$0xff]
    %v1452 = vld [vmem:[#allocation6 + $0x1e38] sm:$0xff]
    %v1453 = vld [vmem:[#allocation6 + $0x1e40] sm:$0xff]
    %v1454 = vld [vmem:[#allocation6 + $0x1e48] sm:$0xff]
    %v1455 = vld [vmem:[#allocation6 + $0x1e50] sm:$0xff]
    %v1456 = vld [vmem:[#allocation6 + $0x1e58] sm:$0xff]
    %v1457 = vld [vmem:[#allocation6 + $0x1e60] sm:$0xff]
    %v1458 = vld [vmem:[#allocation6 + $0x1e68] sm:$0xff]
    %v1459 = vld [vmem:[#allocation6 + $0x1e70] sm:$0xff]
    %v1460 = vld [vmem:[#allocation6 + $0x1e78] sm:$0xff]
    %v1461 = vld [vmem:[#allocation6 + $0x1e80] sm:$0xff]
    %v1462 = vld [vmem:[#allocation6 + $0x1e88] sm:$0xff]
    %v1463 = vld [vmem:[#allocation6 + $0x1e90] sm:$0xff]
    %v1464 = vld [vmem:[#allocation6 + $0x1e98] sm:$0xff]
    %v1465 = vld [vmem:[#allocation6 + $0x1ea0] sm:$0xff]
    %v1466 = vld [vmem:[#allocation6 + $0x1ea8] sm:$0xff]
    %v1467 = vld [vmem:[#allocation6 + $0x1eb0] sm:$0xff]
    %v1468 = vld [vmem:[#allocation6 + $0x1eb8] sm:$0xff]
    %v1469 = vld [vmem:[#allocation6 + $0x1ec0] sm:$0xff]
    %v1470 = vld [vmem:[#allocation6 + $0x1ec8] sm:$0xff]
    %v1471 = vld [vmem:[#allocation6 + $0x1ed0] sm:$0xff]
    %v1472 = vld [vmem:[#allocation6 + $0x1ed8] sm:$0xff]
    %v1473 = vld [vmem:[#allocation6 + $0x1ee0] sm:$0xff]
    %v1474 = vld [vmem:[#allocation6 + $0x1ee8] sm:$0xff]
    %v1475 = vld [vmem:[#allocation6 + $0x1ef0] sm:$0xff]
    %v1476 = vld [vmem:[#allocation6 + $0x1ef8] sm:$0xff]
    %v1477 = vld [vmem:[#allocation6 + $0x1f00] sm:$0xff]
    %v1478 = vld [vmem:[#allocation6 + $0x1f08] sm:$0xff]
    %v1479 = vld [vmem:[#allocation6 + $0x1f10] sm:$0xff]
    %v1480 = vld [vmem:[#allocation6 + $0x1f18] sm:$0xff]
    %v1481 = vld [vmem:[#allocation6 + $0x1f20] sm:$0xff]
    %v1482 = vld [vmem:[#allocation6 + $0x1f28] sm:$0xff]
    %v1483 = vld [vmem:[#allocation6 + $0x1f30] sm:$0xff]
    %v1484 = vld [vmem:[#allocation6 + $0x1f38] sm:$0xff]
    %v1485 = vld [vmem:[#allocation6 + $0x1f40] sm:$0xff]
    %v1486 = vld [vmem:[#allocation6 + $0x1f48] sm:$0xff]
    %v1487 = vld [vmem:[#allocation6 + $0x1f50] sm:$0xff]
    %v1488 = vld [vmem:[#allocation6 + $0x1f58] sm:$0xff]
    %v1489 = vld [vmem:[#allocation6 + $0x1f60] sm:$0xff]
    %v1490 = vld [vmem:[#allocation6 + $0x1f68] sm:$0xff]
    %v1491 = vld [vmem:[#allocation6 + $0x1f70] sm:$0xff]
    %v1492 = vld [vmem:[#allocation6 + $0x1f78] sm:$0xff]
    %v1493 = vld [vmem:[#allocation6 + $0x1f80] sm:$0xff]
    %v1494 = vld [vmem:[#allocation6 + $0x1f88] sm:$0xff]
    %v1495 = vld [vmem:[#allocation6 + $0x1f90] sm:$0xff]
    %v1496 = vld [vmem:[#allocation6 + $0x1f98] sm:$0xff]
    %v1497 = vld [vmem:[#allocation6 + $0x1fa0] sm:$0xff]
    %v1498 = vld [vmem:[#allocation6 + $0x1fa8] sm:$0xff]
    %v1499 = vld [vmem:[#allocation6 + $0x1fb0] sm:$0xff]
    %v1500 = vld [vmem:[#allocation6 + $0x1fb8] sm:$0xff]
    %v1501 = vld [vmem:[#allocation6 + $0x1fc0] sm:$0xff]
    %v1502 = vld [vmem:[#allocation6 + $0x1fc8] sm:$0xff]
    %v1503 = vld [vmem:[#allocation6 + $0x1fd0] sm:$0xff]
    %v1504 = vld [vmem:[#allocation6 + $0x1fd8] sm:$0xff]
    %v1505 = vld [vmem:[#allocation6 + $0x1fe0] sm:$0xff]
    %v1506 = vld [vmem:[#allocation6 + $0x1fe8] sm:$0xff]
    %v1507 = vld [vmem:[#allocation6 + $0x1ff0] sm:$0xff]
    %v1508 = vld [vmem:[#allocation6 + $0x1ff8] sm:$0xff]
    %v1509 = vld [vmem:[#allocation7] sm:$0xff]
    %v1511 = vperm.slane %v1509, 0
    %v1512 = vperm.slane %v1509, 1
    %v1513 = vperm.slane %v1509, 2
    %v1514 = vperm.slane %v1509, 3
    %v1515 = vperm.slane %v1509, 4
    %v1516 = vperm.slane %v1509, 5
    %v1517 = vperm.slane %v1509, 6
    %v1518 = vperm.slane %v1509, 7
    %1527 = vmatpush.msra.mxu0 %v605
    %1528 = vmatpush.msra.mxu0 %v597
    %1529 = vmatpush.msra.mxu0 %v589
    %1530 = vmatpush.msra.mxu0 %v581
    %1531 = vmatpush.msra.mxu0 %v573
    %1532 = vmatpush.msra.mxu0 %v565
    %1533 = vmatpush.msra.mxu0 %v557
    %1534 = vmatpush.msra.mxu0 %v549
    %1535 = vmatpush.msra.mxu0 %v541
    %1536 = vmatpush.msra.mxu0 %v533
    %1537 = vmatpush.msra.mxu0 %v525
    %1538 = vmatpush.msra.mxu0 %v517
    %1539 = vmatpush.msra.mxu0 %v509
    %1540 = vmatpush.msra.mxu0 %v501
    %1541 = vmatpush.msra.mxu0 %v493
    %1542 = vmatpush.msra.mxu0 %v485
    %1543 = vmatmul.f32.gmra.mxu0 %v477
    %v1544 = vpop.f32.mrf.mxu0
    %v1545 = vadd.f32 %v1511, %v1544
    %1546 = vdwg.mxu0
    %1547 = vmatpush.msra.mxu0 %v733
    %1548 = vmatpush.msra.mxu0 %v725
    %1549 = vmatpush.msra.mxu0 %v717
    %1550 = vmatpush.msra.mxu0 %v709
    %1551 = vmatpush.msra.mxu0 %v701
    %1552 = vmatpush.msra.mxu0 %v693
    %1553 = vmatpush.msra.mxu0 %v685
    %1554 = vmatpush.msra.mxu0 %v677
    %1555 = vmatpush.msra.mxu0 %v669
    %1556 = vmatpush.msra.mxu0 %v661
    %1557 = vmatpush.msra.mxu0 %v653
    %1558 = vmatpush.msra.mxu0 %v645
    %1559 = vmatpush.msra.mxu0 %v637
    %1560 = vmatpush.msra.mxu0 %v629
    %1561 = vmatpush.msra.mxu0 %v621
    %1562 = vmatpush.msra.mxu0 %v613
    %1563 = vmatmul.f32.gmra.mxu0 %v478
    %v1564 = vpop.f32.mrf.mxu0
    %v1565 = vadd.f32 %v1545, %v1564
    %1566 = vdwg.mxu0
    %1567 = vmatpush.msra.mxu0 %v861
    %1568 = vmatpush.msra.mxu0 %v853
    %1569 = vmatpush.msra.mxu0 %v845
    %1570 = vmatpush.msra.mxu0 %v837
    %1571 = vmatpush.msra.mxu0 %v829
    %1572 = vmatpush.msra.mxu0 %v821
    %1573 = vmatpush.msra.mxu0 %v813
    %1574 = vmatpush.msra.mxu0 %v805
    %1575 = vmatpush.msra.mxu0 %v797
    %1576 = vmatpush.msra.mxu0 %v789
    %1577 = vmatpush.msra.mxu0 %v781
    %1578 = vmatpush.msra.mxu0 %v773
    %1579 = vmatpush.msra.mxu0 %v765
    %1580 = vmatpush.msra.mxu0 %v757
    %1581 = vmatpush.msra.mxu0 %v749
    %1582 = vmatpush.msra.mxu0 %v741
    %1583 = vmatmul.f32.gmra.mxu0 %v479
    %v1584 = vpop.f32.mrf.mxu0
    %v1585 = vadd.f32 %v1565, %v1584
    %1586 = vdwg.mxu0
    %1587 = vmatpush.msra.mxu0 %v989
    %1588 = vmatpush.msra.mxu0 %v981
    %1589 = vmatpush.msra.mxu0 %v973
    %1590 = vmatpush.msra.mxu0 %v965
    %1591 = vmatpush.msra.mxu0 %v957
    %1592 = vmatpush.msra.mxu0 %v949
    %1593 = vmatpush.msra.mxu0 %v941
    %1594 = vmatpush.msra.mxu0 %v933
    %1595 = vmatpush.msra.mxu0 %v925
    %1596 = vmatpush.msra.mxu0 %v917
    %1597 = vmatpush.msra.mxu0 %v909
    %1598 = vmatpush.msra.mxu0 %v901
    %1599 = vmatpush.msra.mxu0 %v893
    %1600 = vmatpush.msra.mxu0 %v885
    %1601 = vmatpush.msra.mxu0 %v877
    %1602 = vmatpush.msra.mxu0 %v869
    %1603 = vmatmul.f32.gmra.mxu0 %v480
    %v1604 = vpop.f32.mrf.mxu0
    %v1605 = vadd.f32 %v1585, %v1604
    %1606 = vdwg.mxu0
    %1607 = vmatpush.msra.mxu0 %v1117
    %1608 = vmatpush.msra.mxu0 %v1109
    %1609 = vmatpush.msra.mxu0 %v1101
    %1610 = vmatpush.msra.mxu0 %v1093
    %1611 = vmatpush.msra.mxu0 %v1085
    %1612 = vmatpush.msra.mxu0 %v1077
    %1613 = vmatpush.msra.mxu0 %v1069
    %1614 = vmatpush.msra.mxu0 %v1061
    %1615 = vmatpush.msra.mxu0 %v1053
    %1616 = vmatpush.msra.mxu0 %v1045
    %1617 = vmatpush.msra.mxu0 %v1037
    %1618 = vmatpush.msra.mxu0 %v1029
    %1619 = vmatpush.msra.mxu0 %v1021
    %1620 = vmatpush.msra.mxu0 %v1013
    %1621 = vmatpush.msra.mxu0 %v1005
    %1622 = vmatpush.msra.mxu0 %v997
    %1623 = vmatmul.f32.gmra.mxu0 %v481
    %v1624 = vpop.f32.mrf.mxu0
    %v1625 = vadd.f32 %v1605, %v1624
    %1626 = vdwg.mxu0
    %1627 = vmatpush.msra.mxu0 %v1245
    %1628 = vmatpush.msra.mxu0 %v1237
    %1629 = vmatpush.msra.mxu0 %v1229
    %1630 = vmatpush.msra.mxu0 %v1221
    %1631 = vmatpush.msra.mxu0 %v1213
    %1632 = vmatpush.msra.mxu0 %v1205
    %1633 = vmatpush.msra.mxu0 %v1197
    %1634 = vmatpush.msra.mxu0 %v1189
    %1635 = vmatpush.msra.mxu0 %v1181
    %1636 = vmatpush.msra.mxu0 %v1173
    %1637 = vmatpush.msra.mxu0 %v1165
    %1638 = vmatpush.msra.mxu0 %v1157
    %1639 = vmatpush.msra.mxu0 %v1149
    %1640 = vmatpush.msra.mxu0 %v1141
    %1641 = vmatpush.msra.mxu0 %v1133
    %1642 = vmatpush.msra.mxu0 %v1125
    %1643 = vmatmul.f32.gmra.mxu0 %v482
    %v1644 = vpop.f32.mrf.mxu0
    %v1645 = vadd.f32 %v1625, %v1644
    %1646 = vdwg.mxu0
    %1647 = vmatpush.msra.mxu0 %v1373
    %1648 = vmatpush.msra.mxu0 %v1365
    %1649 = vmatpush.msra.mxu0 %v1357
    %1650 = vmatpush.msra.mxu0 %v1349
    %1651 = vmatpush.msra.mxu0 %v1341
    %1652 = vmatpush.msra.mxu0 %v1333
    %1653 = vmatpush.msra.mxu0 %v1325
    %1654 = vmatpush.msra.mxu0 %v1317
    %1655 = vmatpush.msra.mxu0 %v1309
    %1656 = vmatpush.msra.mxu0 %v1301
    %1657 = vmatpush.msra.mxu0 %v1293
    %1658 = vmatpush.msra.mxu0 %v1285
    %1659 = vmatpush.msra.mxu0 %v1277
    %1660 = vmatpush.msra.mxu0 %v1269
    %1661 = vmatpush.msra.mxu0 %v1261
    %1662 = vmatpush.msra.mxu0 %v1253
    %1663 = vmatmul.f32.gmra.mxu0 %v483
    %v1664 = vpop.f32.mrf.mxu0
    %v1665 = vadd.f32 %v1645, %v1664
    %1666 = vdwg.mxu0
    %1667 = vmatpush.msra.mxu0 %v1501
    %1668 = vmatpush.msra.mxu0 %v1493
    %1669 = vmatpush.msra.mxu0 %v1485
    %1670 = vmatpush.msra.mxu0 %v1477
    %1671 = vmatpush.msra.mxu0 %v1469
    %1672 = vmatpush.msra.mxu0 %v1461
    %1673 = vmatpush.msra.mxu0 %v1453
    %1674 = vmatpush.msra.mxu0 %v1445
    %1675 = vmatpush.msra.mxu0 %v1437
    %1676 = vmatpush.msra.mxu0 %v1429
    %1677 = vmatpush.msra.mxu0 %v1421
    %1678 = vmatpush.msra.mxu0 %v1413
    %1679 = vmatpush.msra.mxu0 %v1405
    %1680 = vmatpush.msra.mxu0 %v1397
    %1681 = vmatpush.msra.mxu0 %v1389
    %1682 = vmatpush.msra.mxu0 %v1381
    %1683 = vmatmul.f32.gmra.mxu0 %v484
    %v1684 = vpop.f32.mrf.mxu0
    %v1685 = vadd.f32 %v1665, %v1684
    %1686 = vdwg.mxu0
    %1687 = vmatpush.msra.mxu0 %v606
    %1688 = vmatpush.msra.mxu0 %v598
    %1689 = vmatpush.msra.mxu0 %v590
    %1690 = vmatpush.msra.mxu0 %v582
    %1691 = vmatpush.msra.mxu0 %v574
    %1692 = vmatpush.msra.mxu0 %v566
    %1693 = vmatpush.msra.mxu0 %v558
    %1694 = vmatpush.msra.mxu0 %v550
    %1695 = vmatpush.msra.mxu0 %v542
    %1696 = vmatpush.msra.mxu0 %v534
    %1697 = vmatpush.msra.mxu0 %v526
    %1698 = vmatpush.msra.mxu0 %v518
    %1699 = vmatpush.msra.mxu0 %v510
    %1700 = vmatpush.msra.mxu0 %v502
    %1701 = vmatpush.msra.mxu0 %v494
    %1702 = vmatpush.msra.mxu0 %v486
    %1703 = vmatmul.f32.gmra.mxu0 %v477
    %v1704 = vpop.f32.mrf.mxu0
    %v1705 = vadd.f32 %v1512, %v1704
    %1706 = vdwg.mxu0
    %1707 = vmatpush.msra.mxu0 %v734
    %1708 = vmatpush.msra.mxu0 %v726
    %1709 = vmatpush.msra.mxu0 %v718
    %1710 = vmatpush.msra.mxu0 %v710
    %1711 = vmatpush.msra.mxu0 %v702
    %1712 = vmatpush.msra.mxu0 %v694
    %1713 = vmatpush.msra.mxu0 %v686
    %1714 = vmatpush.msra.mxu0 %v678
    %1715 = vmatpush.msra.mxu0 %v670
    %1716 = vmatpush.msra.mxu0 %v662
    %1717 = vmatpush.msra.mxu0 %v654
    %1718 = vmatpush.msra.mxu0 %v646
    %1719 = vmatpush.msra.mxu0 %v638
    %1720 = vmatpush.msra.mxu0 %v630
    %1721 = vmatpush.msra.mxu0 %v622
    %1722 = vmatpush.msra.mxu0 %v614
    %1723 = vmatmul.f32.gmra.mxu0 %v478
    %v1724 = vpop.f32.mrf.mxu0
    %v1725 = vadd.f32 %v1705, %v1724
    %1726 = vdwg.mxu0
    %1727 = vmatpush.msra.mxu0 %v862
    %1728 = vmatpush.msra.mxu0 %v854
    %1729 = vmatpush.msra.mxu0 %v846
    %1730 = vmatpush.msra.mxu0 %v838
    %1731 = vmatpush.msra.mxu0 %v830
    %1732 = vmatpush.msra.mxu0 %v822
    %1733 = vmatpush.msra.mxu0 %v814
    %1734 = vmatpush.msra.mxu0 %v806
    %1735 = vmatpush.msra.mxu0 %v798
    %1736 = vmatpush.msra.mxu0 %v790
    %1737 = vmatpush.msra.mxu0 %v782
    %1738 = vmatpush.msra.mxu0 %v774
    %1739 = vmatpush.msra.mxu0 %v766
    %1740 = vmatpush.msra.mxu0 %v758
    %1741 = vmatpush.msra.mxu0 %v750
    %1742 = vmatpush.msra.mxu0 %v742
    %1743 = vmatmul.f32.gmra.mxu0 %v479
    %v1744 = vpop.f32.mrf.mxu0
    %v1745 = vadd.f32 %v1725, %v1744
    %1746 = vdwg.mxu0
    %1747 = vmatpush.msra.mxu0 %v990
    %1748 = vmatpush.msra.mxu0 %v982
    %1749 = vmatpush.msra.mxu0 %v974
    %1750 = vmatpush.msra.mxu0 %v966
    %1751 = vmatpush.msra.mxu0 %v958
    %1752 = vmatpush.msra.mxu0 %v950
    %1753 = vmatpush.msra.mxu0 %v942
    %1754 = vmatpush.msra.mxu0 %v934
    %1755 = vmatpush.msra.mxu0 %v926
    %1756 = vmatpush.msra.mxu0 %v918
    %1757 = vmatpush.msra.mxu0 %v910
    %1758 = vmatpush.msra.mxu0 %v902
    %1759 = vmatpush.msra.mxu0 %v894
    %1760 = vmatpush.msra.mxu0 %v886
    %1761 = vmatpush.msra.mxu0 %v878
    %1762 = vmatpush.msra.mxu0 %v870
    %1763 = vmatmul.f32.gmra.mxu0 %v480
    %v1764 = vpop.f32.mrf.mxu0
    %v1765 = vadd.f32 %v1745, %v1764
    %1766 = vdwg.mxu0
    %1767 = vmatpush.msra.mxu0 %v1118
    %1768 = vmatpush.msra.mxu0 %v1110
    %1769 = vmatpush.msra.mxu0 %v1102
    %1770 = vmatpush.msra.mxu0 %v1094
    %1771 = vmatpush.msra.mxu0 %v1086
    %1772 = vmatpush.msra.mxu0 %v1078
    %1773 = vmatpush.msra.mxu0 %v1070
    %1774 = vmatpush.msra.mxu0 %v1062
    %1775 = vmatpush.msra.mxu0 %v1054
    %1776 = vmatpush.msra.mxu0 %v1046
    %1777 = vmatpush.msra.mxu0 %v1038
    %1778 = vmatpush.msra.mxu0 %v1030
    %1779 = vmatpush.msra.mxu0 %v1022
    %1780 = vmatpush.msra.mxu0 %v1014
    %1781 = vmatpush.msra.mxu0 %v1006
    %1782 = vmatpush.msra.mxu0 %v998
    %1783 = vmatmul.f32.gmra.mxu0 %v481
    %v1784 = vpop.f32.mrf.mxu0
    %v1785 = vadd.f32 %v1765, %v1784
    %1786 = vdwg.mxu0
    %1787 = vmatpush.msra.mxu0 %v1246
    %1788 = vmatpush.msra.mxu0 %v1238
    %1789 = vmatpush.msra.mxu0 %v1230
    %1790 = vmatpush.msra.mxu0 %v1222
    %1791 = vmatpush.msra.mxu0 %v1214
    %1792 = vmatpush.msra.mxu0 %v1206
    %1793 = vmatpush.msra.mxu0 %v1198
    %1794 = vmatpush.msra.mxu0 %v1190
    %1795 = vmatpush.msra.mxu0 %v1182
    %1796 = vmatpush.msra.mxu0 %v1174
    %1797 = vmatpush.msra.mxu0 %v1166
    %1798 = vmatpush.msra.mxu0 %v1158
    %1799 = vmatpush.msra.mxu0 %v1150
    %1800 = vmatpush.msra.mxu0 %v1142
    %1801 = vmatpush.msra.mxu0 %v1134
    %1802 = vmatpush.msra.mxu0 %v1126
    %1803 = vmatmul.f32.gmra.mxu0 %v482
    %v1804 = vpop.f32.mrf.mxu0
    %v1805 = vadd.f32 %v1785, %v1804
    %1806 = vdwg.mxu0
    %1807 = vmatpush.msra.mxu0 %v1374
    %1808 = vmatpush.msra.mxu0 %v1366
    %1809 = vmatpush.msra.mxu0 %v1358
    %1810 = vmatpush.msra.mxu0 %v1350
    %1811 = vmatpush.msra.mxu0 %v1342
    %1812 = vmatpush.msra.mxu0 %v1334
    %1813 = vmatpush.msra.mxu0 %v1326
    %1814 = vmatpush.msra.mxu0 %v1318
    %1815 = vmatpush.msra.mxu0 %v1310
    %1816 = vmatpush.msra.mxu0 %v1302
    %1817 = vmatpush.msra.mxu0 %v1294
    %1818 = vmatpush.msra.mxu0 %v1286
    %1819 = vmatpush.msra.mxu0 %v1278
    %1820 = vmatpush.msra.mxu0 %v1270
    %1821 = vmatpush.msra.mxu0 %v1262
    %1822 = vmatpush.msra.mxu0 %v1254
    %1823 = vmatmul.f32.gmra.mxu0 %v483
    %v1824 = vpop.f32.mrf.mxu0
    %v1825 = vadd.f32 %v1805, %v1824
    %1826 = vdwg.mxu0
    %1827 = vmatpush.msra.mxu0 %v1502
    %1828 = vmatpush.msra.mxu0 %v1494
    %1829 = vmatpush.msra.mxu0 %v1486
    %1830 = vmatpush.msra.mxu0 %v1478
    %1831 = vmatpush.msra.mxu0 %v1470
    %1832 = vmatpush.msra.mxu0 %v1462
    %1833 = vmatpush.msra.mxu0 %v1454
    %1834 = vmatpush.msra.mxu0 %v1446
    %1835 = vmatpush.msra.mxu0 %v1438
    %1836 = vmatpush.msra.mxu0 %v1430
    %1837 = vmatpush.msra.mxu0 %v1422
    %1838 = vmatpush.msra.mxu0 %v1414
    %1839 = vmatpush.msra.mxu0 %v1406
    %1840 = vmatpush.msra.mxu0 %v1398
    %1841 = vmatpush.msra.mxu0 %v1390
    %1842 = vmatpush.msra.mxu0 %v1382
    %1843 = vmatmul.f32.gmra.mxu0 %v484
    %v1844 = vpop.f32.mrf.mxu0
    %v1845 = vadd.f32 %v1825, %v1844
    %1846 = vdwg.mxu0
    %1847 = vmatpush.msra.mxu0 %v607
    %1848 = vmatpush.msra.mxu0 %v599
    %1849 = vmatpush.msra.mxu0 %v591
    %1850 = vmatpush.msra.mxu0 %v583
    %1851 = vmatpush.msra.mxu0 %v575
    %1852 = vmatpush.msra.mxu0 %v567
    %1853 = vmatpush.msra.mxu0 %v559
    %1854 = vmatpush.msra.mxu0 %v551
    %1855 = vmatpush.msra.mxu0 %v543
    %1856 = vmatpush.msra.mxu0 %v535
    %1857 = vmatpush.msra.mxu0 %v527
    %1858 = vmatpush.msra.mxu0 %v519
    %1859 = vmatpush.msra.mxu0 %v511
    %1860 = vmatpush.msra.mxu0 %v503
    %1861 = vmatpush.msra.mxu0 %v495
    %1862 = vmatpush.msra.mxu0 %v487
    %1863 = vmatmul.f32.gmra.mxu0 %v477
    %v1864 = vpop.f32.mrf.mxu0
    %v1865 = vadd.f32 %v1513, %v1864
    %1866 = vdwg.mxu0
    %1867 = vmatpush.msra.mxu0 %v735
    %1868 = vmatpush.msra.mxu0 %v727
    %1869 = vmatpush.msra.mxu0 %v719
    %1870 = vmatpush.msra.mxu0 %v711
    %1871 = vmatpush.msra.mxu0 %v703
    %1872 = vmatpush.msra.mxu0 %v695
    %1873 = vmatpush.msra.mxu0 %v687
    %1874 = vmatpush.msra.mxu0 %v679
    %1875 = vmatpush.msra.mxu0 %v671
    %1876 = vmatpush.msra.mxu0 %v663
    %1877 = vmatpush.msra.mxu0 %v655
    %1878 = vmatpush.msra.mxu0 %v647
    %1879 = vmatpush.msra.mxu0 %v639
    %1880 = vmatpush.msra.mxu0 %v631
    %1881 = vmatpush.msra.mxu0 %v623
    %1882 = vmatpush.msra.mxu0 %v615
    %1883 = vmatmul.f32.gmra.mxu0 %v478
    %v1884 = vpop.f32.mrf.mxu0
    %v1885 = vadd.f32 %v1865, %v1884
    %1886 = vdwg.mxu0
    %1887 = vmatpush.msra.mxu0 %v863
    %1888 = vmatpush.msra.mxu0 %v855
    %1889 = vmatpush.msra.mxu0 %v847
    %1890 = vmatpush.msra.mxu0 %v839
    %1891 = vmatpush.msra.mxu0 %v831
    %1892 = vmatpush.msra.mxu0 %v823
    %1893 = vmatpush.msra.mxu0 %v815
    %1894 = vmatpush.msra.mxu0 %v807
    %1895 = vmatpush.msra.mxu0 %v799
    %1896 = vmatpush.msra.mxu0 %v791
    %1897 = vmatpush.msra.mxu0 %v783
    %1898 = vmatpush.msra.mxu0 %v775
    %1899 = vmatpush.msra.mxu0 %v767
    %1900 = vmatpush.msra.mxu0 %v759
    %1901 = vmatpush.msra.mxu0 %v751
    %1902 = vmatpush.msra.mxu0 %v743
    %1903 = vmatmul.f32.gmra.mxu0 %v479
    %v1904 = vpop.f32.mrf.mxu0
    %v1905 = vadd.f32 %v1885, %v1904
    %1906 = vdwg.mxu0
    %1907 = vmatpush.msra.mxu0 %v991
    %1908 = vmatpush.msra.mxu0 %v983
    %1909 = vmatpush.msra.mxu0 %v975
    %1910 = vmatpush.msra.mxu0 %v967
    %1911 = vmatpush.msra.mxu0 %v959
    %1912 = vmatpush.msra.mxu0 %v951
    %1913 = vmatpush.msra.mxu0 %v943
    %1914 = vmatpush.msra.mxu0 %v935
    %1915 = vmatpush.msra.mxu0 %v927
    %1916 = vmatpush.msra.mxu0 %v919
    %1917 = vmatpush.msra.mxu0 %v911
    %1918 = vmatpush.msra.mxu0 %v903
    %1919 = vmatpush.msra.mxu0 %v895
    %1920 = vmatpush.msra.mxu0 %v887
    %1921 = vmatpush.msra.mxu0 %v879
    %1922 = vmatpush.msra.mxu0 %v871
    %1923 = vmatmul.f32.gmra.mxu0 %v480
    %v1924 = vpop.f32.mrf.mxu0
    %v1925 = vadd.f32 %v1905, %v1924
    %1926 = vdwg.mxu0
    %1927 = vmatpush.msra.mxu0 %v1119
    %1928 = vmatpush.msra.mxu0 %v1111
    %1929 = vmatpush.msra.mxu0 %v1103
    %1930 = vmatpush.msra.mxu0 %v1095
    %1931 = vmatpush.msra.mxu0 %v1087
    %1932 = vmatpush.msra.mxu0 %v1079
    %1933 = vmatpush.msra.mxu0 %v1071
    %1934 = vmatpush.msra.mxu0 %v1063
    %1935 = vmatpush.msra.mxu0 %v1055
    %1936 = vmatpush.msra.mxu0 %v1047
    %1937 = vmatpush.msra.mxu0 %v1039
    %1938 = vmatpush.msra.mxu0 %v1031
    %1939 = vmatpush.msra.mxu0 %v1023
    %1940 = vmatpush.msra.mxu0 %v1015
    %1941 = vmatpush.msra.mxu0 %v1007
    %1942 = vmatpush.msra.mxu0 %v999
    %1943 = vmatmul.f32.gmra.mxu0 %v481
    %v1944 = vpop.f32.mrf.mxu0
    %v1945 = vadd.f32 %v1925, %v1944
    %1946 = vdwg.mxu0
    %1947 = vmatpush.msra.mxu0 %v1247
    %1948 = vmatpush.msra.mxu0 %v1239
    %1949 = vmatpush.msra.mxu0 %v1231
    %1950 = vmatpush.msra.mxu0 %v1223
    %1951 = vmatpush.msra.mxu0 %v1215
    %1952 = vmatpush.msra.mxu0 %v1207
    %1953 = vmatpush.msra.mxu0 %v1199
    %1954 = vmatpush.msra.mxu0 %v1191
    %1955 = vmatpush.msra.mxu0 %v1183
    %1956 = vmatpush.msra.mxu0 %v1175
    %1957 = vmatpush.msra.mxu0 %v1167
    %1958 = vmatpush.msra.mxu0 %v1159
    %1959 = vmatpush.msra.mxu0 %v1151
    %1960 = vmatpush.msra.mxu0 %v1143
    %1961 = vmatpush.msra.mxu0 %v1135
    %1962 = vmatpush.msra.mxu0 %v1127
    %1963 = vmatmul.f32.gmra.mxu0 %v482
    %v1964 = vpop.f32.mrf.mxu0
    %v1965 = vadd.f32 %v1945, %v1964
    %1966 = vdwg.mxu0
    %1967 = vmatpush.msra.mxu0 %v1375
    %1968 = vmatpush.msra.mxu0 %v1367
    %1969 = vmatpush.msra.mxu0 %v1359
    %1970 = vmatpush.msra.mxu0 %v1351
    %1971 = vmatpush.msra.mxu0 %v1343
    %1972 = vmatpush.msra.mxu0 %v1335
    %1973 = vmatpush.msra.mxu0 %v1327
    %1974 = vmatpush.msra.mxu0 %v1319
    %1975 = vmatpush.msra.mxu0 %v1311
    %1976 = vmatpush.msra.mxu0 %v1303
    %1977 = vmatpush.msra.mxu0 %v1295
    %1978 = vmatpush.msra.mxu0 %v1287
    %1979 = vmatpush.msra.mxu0 %v1279
    %1980 = vmatpush.msra.mxu0 %v1271
    %1981 = vmatpush.msra.mxu0 %v1263
    %1982 = vmatpush.msra.mxu0 %v1255
    %1983 = vmatmul.f32.gmra.mxu0 %v483
    %v1984 = vpop.f32.mrf.mxu0
    %v1985 = vadd.f32 %v1965, %v1984
    %1986 = vdwg.mxu0
    %1987 = vmatpush.msra.mxu0 %v1503
    %1988 = vmatpush.msra.mxu0 %v1495
    %1989 = vmatpush.msra.mxu0 %v1487
    %1990 = vmatpush.msra.mxu0 %v1479
    %1991 = vmatpush.msra.mxu0 %v1471
    %1992 = vmatpush.msra.mxu0 %v1463
    %1993 = vmatpush.msra.mxu0 %v1455
    %1994 = vmatpush.msra.mxu0 %v1447
    %1995 = vmatpush.msra.mxu0 %v1439
    %1996 = vmatpush.msra.mxu0 %v1431
    %1997 = vmatpush.msra.mxu0 %v1423
    %1998 = vmatpush.msra.mxu0 %v1415
    %1999 = vmatpush.msra.mxu0 %v1407
    %2000 = vmatpush.msra.mxu0 %v1399
    %2001 = vmatpush.msra.mxu0 %v1391
    %2002 = vmatpush.msra.mxu0 %v1383
    %2003 = vmatmul.f32.gmra.mxu0 %v484
    %v2004 = vpop.f32.mrf.mxu0
    %v2005 = vadd.f32 %v1985, %v2004
    %2006 = vdwg.mxu0
    %2007 = vmatpush.msra.mxu0 %v608
    %2008 = vmatpush.msra.mxu0 %v600
    %2009 = vmatpush.msra.mxu0 %v592
    %2010 = vmatpush.msra.mxu0 %v584
    %2011 = vmatpush.msra.mxu0 %v576
    %2012 = vmatpush.msra.mxu0 %v568
    %2013 = vmatpush.msra.mxu0 %v560
    %2014 = vmatpush.msra.mxu0 %v552
    %2015 = vmatpush.msra.mxu0 %v544
    %2016 = vmatpush.msra.mxu0 %v536
    %2017 = vmatpush.msra.mxu0 %v528
    %2018 = vmatpush.msra.mxu0 %v520
    %2019 = vmatpush.msra.mxu0 %v512
    %2020 = vmatpush.msra.mxu0 %v504
    %2021 = vmatpush.msra.mxu0 %v496
    %2022 = vmatpush.msra.mxu0 %v488
    %2023 = vmatmul.f32.gmra.mxu0 %v477
    %v2024 = vpop.f32.mrf.mxu0
    %v2025 = vadd.f32 %v1514, %v2024
    %2026 = vdwg.mxu0
    %2027 = vmatpush.msra.mxu0 %v736
    %2028 = vmatpush.msra.mxu0 %v728
    %2029 = vmatpush.msra.mxu0 %v720
    %2030 = vmatpush.msra.mxu0 %v712
    %2031 = vmatpush.msra.mxu0 %v704
    %2032 = vmatpush.msra.mxu0 %v696
    %2033 = vmatpush.msra.mxu0 %v688
    %2034 = vmatpush.msra.mxu0 %v680
    %2035 = vmatpush.msra.mxu0 %v672
    %2036 = vmatpush.msra.mxu0 %v664
    %2037 = vmatpush.msra.mxu0 %v656
    %2038 = vmatpush.msra.mxu0 %v648
    %2039 = vmatpush.msra.mxu0 %v640
    %2040 = vmatpush.msra.mxu0 %v632
    %2041 = vmatpush.msra.mxu0 %v624
    %2042 = vmatpush.msra.mxu0 %v616
    %2043 = vmatmul.f32.gmra.mxu0 %v478
    %v2044 = vpop.f32.mrf.mxu0
    %v2045 = vadd.f32 %v2025, %v2044
    %2046 = vdwg.mxu0
    %2047 = vmatpush.msra.mxu0 %v864
    %2048 = vmatpush.msra.mxu0 %v856
    %2049 = vmatpush.msra.mxu0 %v848
    %2050 = vmatpush.msra.mxu0 %v840
    %2051 = vmatpush.msra.mxu0 %v832
    %2052 = vmatpush.msra.mxu0 %v824
    %2053 = vmatpush.msra.mxu0 %v816
    %2054 = vmatpush.msra.mxu0 %v808
    %2055 = vmatpush.msra.mxu0 %v800
    %2056 = vmatpush.msra.mxu0 %v792
    %2057 = vmatpush.msra.mxu0 %v784
    %2058 = vmatpush.msra.mxu0 %v776
    %2059 = vmatpush.msra.mxu0 %v768
    %2060 = vmatpush.msra.mxu0 %v760
    %2061 = vmatpush.msra.mxu0 %v752
    %2062 = vmatpush.msra.mxu0 %v744
    %2063 = vmatmul.f32.gmra.mxu0 %v479
    %v2064 = vpop.f32.mrf.mxu0
    %v2065 = vadd.f32 %v2045, %v2064
    %2066 = vdwg.mxu0
    %2067 = vmatpush.msra.mxu0 %v992
    %2068 = vmatpush.msra.mxu0 %v984
    %2069 = vmatpush.msra.mxu0 %v976
    %2070 = vmatpush.msra.mxu0 %v968
    %2071 = vmatpush.msra.mxu0 %v960
    %2072 = vmatpush.msra.mxu0 %v952
    %2073 = vmatpush.msra.mxu0 %v944
    %2074 = vmatpush.msra.mxu0 %v936
    %2075 = vmatpush.msra.mxu0 %v928
    %2076 = vmatpush.msra.mxu0 %v920
    %2077 = vmatpush.msra.mxu0 %v912
    %2078 = vmatpush.msra.mxu0 %v904
    %2079 = vmatpush.msra.mxu0 %v896
    %2080 = vmatpush.msra.mxu0 %v888
    %2081 = vmatpush.msra.mxu0 %v880
    %2082 = vmatpush.msra.mxu0 %v872
    %2083 = vmatmul.f32.gmra.mxu0 %v480
    %v2084 = vpop.f32.mrf.mxu0
    %v2085 = vadd.f32 %v2065, %v2084
    %2086 = vdwg.mxu0
    %2087 = vmatpush.msra.mxu0 %v1120
    %2088 = vmatpush.msra.mxu0 %v1112
    %2089 = vmatpush.msra.mxu0 %v1104
    %2090 = vmatpush.msra.mxu0 %v1096
    %2091 = vmatpush.msra.mxu0 %v1088
    %2092 = vmatpush.msra.mxu0 %v1080
    %2093 = vmatpush.msra.mxu0 %v1072
    %2094 = vmatpush.msra.mxu0 %v1064
    %2095 = vmatpush.msra.mxu0 %v1056
    %2096 = vmatpush.msra.mxu0 %v1048
    %2097 = vmatpush.msra.mxu0 %v1040
    %2098 = vmatpush.msra.mxu0 %v1032
    %2099 = vmatpush.msra.mxu0 %v1024
    %2100 = vmatpush.msra.mxu0 %v1016
    %2101 = vmatpush.msra.mxu0 %v1008
    %2102 = vmatpush.msra.mxu0 %v1000
    %2103 = vmatmul.f32.gmra.mxu0 %v481
    %v2104 = vpop.f32.mrf.mxu0
    %v2105 = vadd.f32 %v2085, %v2104
    %2106 = vdwg.mxu0
    %2107 = vmatpush.msra.mxu0 %v1248
    %2108 = vmatpush.msra.mxu0 %v1240
    %2109 = vmatpush.msra.mxu0 %v1232
    %2110 = vmatpush.msra.mxu0 %v1224
    %2111 = vmatpush.msra.mxu0 %v1216
    %2112 = vmatpush.msra.mxu0 %v1208
    %2113 = vmatpush.msra.mxu0 %v1200
    %2114 = vmatpush.msra.mxu0 %v1192
    %2115 = vmatpush.msra.mxu0 %v1184
    %2116 = vmatpush.msra.mxu0 %v1176
    %2117 = vmatpush.msra.mxu0 %v1168
    %2118 = vmatpush.msra.mxu0 %v1160
    %2119 = vmatpush.msra.mxu0 %v1152
    %2120 = vmatpush.msra.mxu0 %v1144
    %2121 = vmatpush.msra.mxu0 %v1136
    %2122 = vmatpush.msra.mxu0 %v1128
    %2123 = vmatmul.f32.gmra.mxu0 %v482
    %v2124 = vpop.f32.mrf.mxu0
    %v2125 = vadd.f32 %v2105, %v2124
    %2126 = vdwg.mxu0
    %2127 = vmatpush.msra.mxu0 %v1376
    %2128 = vmatpush.msra.mxu0 %v1368
    %2129 = vmatpush.msra.mxu0 %v1360
    %2130 = vmatpush.msra.mxu0 %v1352
    %2131 = vmatpush.msra.mxu0 %v1344
    %2132 = vmatpush.msra.mxu0 %v1336
    %2133 = vmatpush.msra.mxu0 %v1328
    %2134 = vmatpush.msra.mxu0 %v1320
    %2135 = vmatpush.msra.mxu0 %v1312
    %2136 = vmatpush.msra.mxu0 %v1304
    %2137 = vmatpush.msra.mxu0 %v1296
    %2138 = vmatpush.msra.mxu0 %v1288
    %2139 = vmatpush.msra.mxu0 %v1280
    %2140 = vmatpush.msra.mxu0 %v1272
    %2141 = vmatpush.msra.mxu0 %v1264
    %2142 = vmatpush.msra.mxu0 %v1256
    %2143 = vmatmul.f32.gmra.mxu0 %v483
    %v2144 = vpop.f32.mrf.mxu0
    %v2145 = vadd.f32 %v2125, %v2144
    %2146 = vdwg.mxu0
    %2147 = vmatpush.msra.mxu0 %v1504
    %2148 = vmatpush.msra.mxu0 %v1496
    %2149 = vmatpush.msra.mxu0 %v1488
    %2150 = vmatpush.msra.mxu0 %v1480
    %2151 = vmatpush.msra.mxu0 %v1472
    %2152 = vmatpush.msra.mxu0 %v1464
    %2153 = vmatpush.msra.mxu0 %v1456
    %2154 = vmatpush.msra.mxu0 %v1448
    %2155 = vmatpush.msra.mxu0 %v1440
    %2156 = vmatpush.msra.mxu0 %v1432
    %2157 = vmatpush.msra.mxu0 %v1424
    %2158 = vmatpush.msra.mxu0 %v1416
    %2159 = vmatpush.msra.mxu0 %v1408
    %2160 = vmatpush.msra.mxu0 %v1400
    %2161 = vmatpush.msra.mxu0 %v1392
    %2162 = vmatpush.msra.mxu0 %v1384
    %2163 = vmatmul.f32.gmra.mxu0 %v484
    %v2164 = vpop.f32.mrf.mxu0
    %v2165 = vadd.f32 %v2145, %v2164
    %2166 = vdwg.mxu0
    %2167 = vmatpush.msra.mxu0 %v609
    %2168 = vmatpush.msra.mxu0 %v601
    %2169 = vmatpush.msra.mxu0 %v593
    %2170 = vmatpush.msra.mxu0 %v585
    %2171 = vmatpush.msra.mxu0 %v577
    %2172 = vmatpush.msra.mxu0 %v569
    %2173 = vmatpush.msra.mxu0 %v561
    %2174 = vmatpush.msra.mxu0 %v553
    %2175 = vmatpush.msra.mxu0 %v545
    %2176 = vmatpush.msra.mxu0 %v537
    %2177 = vmatpush.msra.mxu0 %v529
    %2178 = vmatpush.msra.mxu0 %v521
    %2179 = vmatpush.msra.mxu0 %v513
    %2180 = vmatpush.msra.mxu0 %v505
    %2181 = vmatpush.msra.mxu0 %v497
    %2182 = vmatpush.msra.mxu0 %v489
    %2183 = vmatmul.f32.gmra.mxu0 %v477
    %v2184 = vpop.f32.mrf.mxu0
    %v2185 = vadd.f32 %v1515, %v2184
    %2186 = vdwg.mxu0
    %2187 = vmatpush.msra.mxu0 %v737
    %2188 = vmatpush.msra.mxu0 %v729
    %2189 = vmatpush.msra.mxu0 %v721
    %2190 = vmatpush.msra.mxu0 %v713
    %2191 = vmatpush.msra.mxu0 %v705
    %2192 = vmatpush.msra.mxu0 %v697
    %2193 = vmatpush.msra.mxu0 %v689
    %2194 = vmatpush.msra.mxu0 %v681
    %2195 = vmatpush.msra.mxu0 %v673
    %2196 = vmatpush.msra.mxu0 %v665
    %2197 = vmatpush.msra.mxu0 %v657
    %2198 = vmatpush.msra.mxu0 %v649
    %2199 = vmatpush.msra.mxu0 %v641
    %2200 = vmatpush.msra.mxu0 %v633
    %2201 = vmatpush.msra.mxu0 %v625
    %2202 = vmatpush.msra.mxu0 %v617
    %2203 = vmatmul.f32.gmra.mxu0 %v478
    %v2204 = vpop.f32.mrf.mxu0
    %v2205 = vadd.f32 %v2185, %v2204
    %2206 = vdwg.mxu0
    %2207 = vmatpush.msra.mxu0 %v865
    %2208 = vmatpush.msra.mxu0 %v857
    %2209 = vmatpush.msra.mxu0 %v849
    %2210 = vmatpush.msra.mxu0 %v841
    %2211 = vmatpush.msra.mxu0 %v833
    %2212 = vmatpush.msra.mxu0 %v825
    %2213 = vmatpush.msra.mxu0 %v817
    %2214 = vmatpush.msra.mxu0 %v809
    %2215 = vmatpush.msra.mxu0 %v801
    %2216 = vmatpush.msra.mxu0 %v793
    %2217 = vmatpush.msra.mxu0 %v785
    %2218 = vmatpush.msra.mxu0 %v777
    %2219 = vmatpush.msra.mxu0 %v769
    %2220 = vmatpush.msra.mxu0 %v761
    %2221 = vmatpush.msra.mxu0 %v753
    %2222 = vmatpush.msra.mxu0 %v745
    %2223 = vmatmul.f32.gmra.mxu0 %v479
    %v2224 = vpop.f32.mrf.mxu0
    %v2225 = vadd.f32 %v2205, %v2224
    %2226 = vdwg.mxu0
    %2227 = vmatpush.msra.mxu0 %v993
    %2228 = vmatpush.msra.mxu0 %v985
    %2229 = vmatpush.msra.mxu0 %v977
    %2230 = vmatpush.msra.mxu0 %v969
    %2231 = vmatpush.msra.mxu0 %v961
    %2232 = vmatpush.msra.mxu0 %v953
    %2233 = vmatpush.msra.mxu0 %v945
    %2234 = vmatpush.msra.mxu0 %v937
    %2235 = vmatpush.msra.mxu0 %v929
    %2236 = vmatpush.msra.mxu0 %v921
    %2237 = vmatpush.msra.mxu0 %v913
    %2238 = vmatpush.msra.mxu0 %v905
    %2239 = vmatpush.msra.mxu0 %v897
    %2240 = vmatpush.msra.mxu0 %v889
    %2241 = vmatpush.msra.mxu0 %v881
    %2242 = vmatpush.msra.mxu0 %v873
    %2243 = vmatmul.f32.gmra.mxu0 %v480
    %v2244 = vpop.f32.mrf.mxu0
    %v2245 = vadd.f32 %v2225, %v2244
    %2246 = vdwg.mxu0
    %2247 = vmatpush.msra.mxu0 %v1121
    %2248 = vmatpush.msra.mxu0 %v1113
    %2249 = vmatpush.msra.mxu0 %v1105
    %2250 = vmatpush.msra.mxu0 %v1097
    %2251 = vmatpush.msra.mxu0 %v1089
    %2252 = vmatpush.msra.mxu0 %v1081
    %2253 = vmatpush.msra.mxu0 %v1073
    %2254 = vmatpush.msra.mxu0 %v1065
    %2255 = vmatpush.msra.mxu0 %v1057
    %2256 = vmatpush.msra.mxu0 %v1049
    %2257 = vmatpush.msra.mxu0 %v1041
    %2258 = vmatpush.msra.mxu0 %v1033
    %2259 = vmatpush.msra.mxu0 %v1025
    %2260 = vmatpush.msra.mxu0 %v1017
    %2261 = vmatpush.msra.mxu0 %v1009
    %2262 = vmatpush.msra.mxu0 %v1001
    %2263 = vmatmul.f32.gmra.mxu0 %v481
    %v2264 = vpop.f32.mrf.mxu0
    %v2265 = vadd.f32 %v2245, %v2264
    %2266 = vdwg.mxu0
    %2267 = vmatpush.msra.mxu0 %v1249
    %2268 = vmatpush.msra.mxu0 %v1241
    %2269 = vmatpush.msra.mxu0 %v1233
    %2270 = vmatpush.msra.mxu0 %v1225
    %2271 = vmatpush.msra.mxu0 %v1217
    %2272 = vmatpush.msra.mxu0 %v1209
    %2273 = vmatpush.msra.mxu0 %v1201
    %2274 = vmatpush.msra.mxu0 %v1193
    %2275 = vmatpush.msra.mxu0 %v1185
    %2276 = vmatpush.msra.mxu0 %v1177
    %2277 = vmatpush.msra.mxu0 %v1169
    %2278 = vmatpush.msra.mxu0 %v1161
    %2279 = vmatpush.msra.mxu0 %v1153
    %2280 = vmatpush.msra.mxu0 %v1145
    %2281 = vmatpush.msra.mxu0 %v1137
    %2282 = vmatpush.msra.mxu0 %v1129
    %2283 = vmatmul.f32.gmra.mxu0 %v482
    %v2284 = vpop.f32.mrf.mxu0
    %v2285 = vadd.f32 %v2265, %v2284
    %2286 = vdwg.mxu0
    %2287 = vmatpush.msra.mxu0 %v1377
    %2288 = vmatpush.msra.mxu0 %v1369
    %2289 = vmatpush.msra.mxu0 %v1361
    %2290 = vmatpush.msra.mxu0 %v1353
    %2291 = vmatpush.msra.mxu0 %v1345
    %2292 = vmatpush.msra.mxu0 %v1337
    %2293 = vmatpush.msra.mxu0 %v1329
    %2294 = vmatpush.msra.mxu0 %v1321
    %2295 = vmatpush.msra.mxu0 %v1313
    %2296 = vmatpush.msra.mxu0 %v1305
    %2297 = vmatpush.msra.mxu0 %v1297
    %2298 = vmatpush.msra.mxu0 %v1289
    %2299 = vmatpush.msra.mxu0 %v1281
    %2300 = vmatpush.msra.mxu0 %v1273
    %2301 = vmatpush.msra.mxu0 %v1265
    %2302 = vmatpush.msra.mxu0 %v1257
    %2303 = vmatmul.f32.gmra.mxu0 %v483
    %v2304 = vpop.f32.mrf.mxu0
    %v2305 = vadd.f32 %v2285, %v2304
    %2306 = vdwg.mxu0
    %2307 = vmatpush.msra.mxu0 %v1505
    %2308 = vmatpush.msra.mxu0 %v1497
    %2309 = vmatpush.msra.mxu0 %v1489
    %2310 = vmatpush.msra.mxu0 %v1481
    %2311 = vmatpush.msra.mxu0 %v1473
    %2312 = vmatpush.msra.mxu0 %v1465
    %2313 = vmatpush.msra.mxu0 %v1457
    %2314 = vmatpush.msra.mxu0 %v1449
    %2315 = vmatpush.msra.mxu0 %v1441
    %2316 = vmatpush.msra.mxu0 %v1433
    %2317 = vmatpush.msra.mxu0 %v1425
    %2318 = vmatpush.msra.mxu0 %v1417
    %2319 = vmatpush.msra.mxu0 %v1409
    %2320 = vmatpush.msra.mxu0 %v1401
    %2321 = vmatpush.msra.mxu0 %v1393
    %2322 = vmatpush.msra.mxu0 %v1385
    %2323 = vmatmul.f32.gmra.mxu0 %v484
    %v2324 = vpop.f32.mrf.mxu0
    %v2325 = vadd.f32 %v2305, %v2324
    %2326 = vdwg.mxu0
    %2327 = vmatpush.msra.mxu0 %v610
    %2328 = vmatpush.msra.mxu0 %v602
    %2329 = vmatpush.msra.mxu0 %v594
    %2330 = vmatpush.msra.mxu0 %v586
    %2331 = vmatpush.msra.mxu0 %v578
    %2332 = vmatpush.msra.mxu0 %v570
    %2333 = vmatpush.msra.mxu0 %v562
    %2334 = vmatpush.msra.mxu0 %v554
    %2335 = vmatpush.msra.mxu0 %v546
    %2336 = vmatpush.msra.mxu0 %v538
    %2337 = vmatpush.msra.mxu0 %v530
    %2338 = vmatpush.msra.mxu0 %v522
    %2339 = vmatpush.msra.mxu0 %v514
    %2340 = vmatpush.msra.mxu0 %v506
    %2341 = vmatpush.msra.mxu0 %v498
    %2342 = vmatpush.msra.mxu0 %v490
    %2343 = vmatmul.f32.gmra.mxu0 %v477
    %v2344 = vpop.f32.mrf.mxu0
    %v2345 = vadd.f32 %v1516, %v2344
    %2346 = vdwg.mxu0
    %2347 = vmatpush.msra.mxu0 %v738
    %2348 = vmatpush.msra.mxu0 %v730
    %2349 = vmatpush.msra.mxu0 %v722
    %2350 = vmatpush.msra.mxu0 %v714
    %2351 = vmatpush.msra.mxu0 %v706
    %2352 = vmatpush.msra.mxu0 %v698
    %2353 = vmatpush.msra.mxu0 %v690
    %2354 = vmatpush.msra.mxu0 %v682
    %2355 = vmatpush.msra.mxu0 %v674
    %2356 = vmatpush.msra.mxu0 %v666
    %2357 = vmatpush.msra.mxu0 %v658
    %2358 = vmatpush.msra.mxu0 %v650
    %2359 = vmatpush.msra.mxu0 %v642
    %2360 = vmatpush.msra.mxu0 %v634
    %2361 = vmatpush.msra.mxu0 %v626
    %2362 = vmatpush.msra.mxu0 %v618
    %2363 = vmatmul.f32.gmra.mxu0 %v478
    %v2364 = vpop.f32.mrf.mxu0
    %v2365 = vadd.f32 %v2345, %v2364
    %2366 = vdwg.mxu0
    %2367 = vmatpush.msra.mxu0 %v866
    %2368 = vmatpush.msra.mxu0 %v858
    %2369 = vmatpush.msra.mxu0 %v850
    %2370 = vmatpush.msra.mxu0 %v842
    %2371 = vmatpush.msra.mxu0 %v834
    %2372 = vmatpush.msra.mxu0 %v826
    %2373 = vmatpush.msra.mxu0 %v818
    %2374 = vmatpush.msra.mxu0 %v810
    %2375 = vmatpush.msra.mxu0 %v802
    %2376 = vmatpush.msra.mxu0 %v794
    %2377 = vmatpush.msra.mxu0 %v786
    %2378 = vmatpush.msra.mxu0 %v778
    %2379 = vmatpush.msra.mxu0 %v770
    %2380 = vmatpush.msra.mxu0 %v762
    %2381 = vmatpush.msra.mxu0 %v754
    %2382 = vmatpush.msra.mxu0 %v746
    %2383 = vmatmul.f32.gmra.mxu0 %v479
    %v2384 = vpop.f32.mrf.mxu0
    %v2385 = vadd.f32 %v2365, %v2384
    %2386 = vdwg.mxu0
    %2387 = vmatpush.msra.mxu0 %v994
    %2388 = vmatpush.msra.mxu0 %v986
    %2389 = vmatpush.msra.mxu0 %v978
    %2390 = vmatpush.msra.mxu0 %v970
    %2391 = vmatpush.msra.mxu0 %v962
    %2392 = vmatpush.msra.mxu0 %v954
    %2393 = vmatpush.msra.mxu0 %v946
    %2394 = vmatpush.msra.mxu0 %v938
    %2395 = vmatpush.msra.mxu0 %v930
    %2396 = vmatpush.msra.mxu0 %v922
    %2397 = vmatpush.msra.mxu0 %v914
    %2398 = vmatpush.msra.mxu0 %v906
    %2399 = vmatpush.msra.mxu0 %v898
    %2400 = vmatpush.msra.mxu0 %v890
    %2401 = vmatpush.msra.mxu0 %v882
    %2402 = vmatpush.msra.mxu0 %v874
    %2403 = vmatmul.f32.gmra.mxu0 %v480
    %v2404 = vpop.f32.mrf.mxu0
    %v2405 = vadd.f32 %v2385, %v2404
    %2406 = vdwg.mxu0
    %2407 = vmatpush.msra.mxu0 %v1122
    %2408 = vmatpush.msra.mxu0 %v1114
    %2409 = vmatpush.msra.mxu0 %v1106
    %2410 = vmatpush.msra.mxu0 %v1098
    %2411 = vmatpush.msra.mxu0 %v1090
    %2412 = vmatpush.msra.mxu0 %v1082
    %2413 = vmatpush.msra.mxu0 %v1074
    %2414 = vmatpush.msra.mxu0 %v1066
    %2415 = vmatpush.msra.mxu0 %v1058
    %2416 = vmatpush.msra.mxu0 %v1050
    %2417 = vmatpush.msra.mxu0 %v1042
    %2418 = vmatpush.msra.mxu0 %v1034
    %2419 = vmatpush.msra.mxu0 %v1026
    %2420 = vmatpush.msra.mxu0 %v1018
    %2421 = vmatpush.msra.mxu0 %v1010
    %2422 = vmatpush.msra.mxu0 %v1002
    %2423 = vmatmul.f32.gmra.mxu0 %v481
    %v2424 = vpop.f32.mrf.mxu0
    %v2425 = vadd.f32 %v2405, %v2424
    %2426 = vdwg.mxu0
    %2427 = vmatpush.msra.mxu0 %v1250
    %2428 = vmatpush.msra.mxu0 %v1242
    %2429 = vmatpush.msra.mxu0 %v1234
    %2430 = vmatpush.msra.mxu0 %v1226
    %2431 = vmatpush.msra.mxu0 %v1218
    %2432 = vmatpush.msra.mxu0 %v1210
    %2433 = vmatpush.msra.mxu0 %v1202
    %2434 = vmatpush.msra.mxu0 %v1194
    %2435 = vmatpush.msra.mxu0 %v1186
    %2436 = vmatpush.msra.mxu0 %v1178
    %2437 = vmatpush.msra.mxu0 %v1170
    %2438 = vmatpush.msra.mxu0 %v1162
    %2439 = vmatpush.msra.mxu0 %v1154
    %2440 = vmatpush.msra.mxu0 %v1146
    %2441 = vmatpush.msra.mxu0 %v1138
    %2442 = vmatpush.msra.mxu0 %v1130
    %2443 = vmatmul.f32.gmra.mxu0 %v482
    %v2444 = vpop.f32.mrf.mxu0
    %v2445 = vadd.f32 %v2425, %v2444
    %2446 = vdwg.mxu0
    %2447 = vmatpush.msra.mxu0 %v1378
    %2448 = vmatpush.msra.mxu0 %v1370
    %2449 = vmatpush.msra.mxu0 %v1362
    %2450 = vmatpush.msra.mxu0 %v1354
    %2451 = vmatpush.msra.mxu0 %v1346
    %2452 = vmatpush.msra.mxu0 %v1338
    %2453 = vmatpush.msra.mxu0 %v1330
    %2454 = vmatpush.msra.mxu0 %v1322
    %2455 = vmatpush.msra.mxu0 %v1314
    %2456 = vmatpush.msra.mxu0 %v1306
    %2457 = vmatpush.msra.mxu0 %v1298
    %2458 = vmatpush.msra.mxu0 %v1290
    %2459 = vmatpush.msra.mxu0 %v1282
    %2460 = vmatpush.msra.mxu0 %v1274
    %2461 = vmatpush.msra.mxu0 %v1266
    %2462 = vmatpush.msra.mxu0 %v1258
    %2463 = vmatmul.f32.gmra.mxu0 %v483
    %v2464 = vpop.f32.mrf.mxu0
    %v2465 = vadd.f32 %v2445, %v2464
    %2466 = vdwg.mxu0
    %2467 = vmatpush.msra.mxu0 %v1506
    %2468 = vmatpush.msra.mxu0 %v1498
    %2469 = vmatpush.msra.mxu0 %v1490
    %2470 = vmatpush.msra.mxu0 %v1482
    %2471 = vmatpush.msra.mxu0 %v1474
    %2472 = vmatpush.msra.mxu0 %v1466
    %2473 = vmatpush.msra.mxu0 %v1458
    %2474 = vmatpush.msra.mxu0 %v1450
    %2475 = vmatpush.msra.mxu0 %v1442
    %2476 = vmatpush.msra.mxu0 %v1434
    %2477 = vmatpush.msra.mxu0 %v1426
    %2478 = vmatpush.msra.mxu0 %v1418
    %2479 = vmatpush.msra.mxu0 %v1410
    %2480 = vmatpush.msra.mxu0 %v1402
    %2481 = vmatpush.msra.mxu0 %v1394
    %2482 = vmatpush.msra.mxu0 %v1386
    %2483 = vmatmul.f32.gmra.mxu0 %v484
    %v2484 = vpop.f32.mrf.mxu0
    %v2485 = vadd.f32 %v2465, %v2484
    %2486 = vdwg.mxu0
    %2487 = vmatpush.msra.mxu0 %v611
    %2488 = vmatpush.msra.mxu0 %v603
    %2489 = vmatpush.msra.mxu0 %v595
    %2490 = vmatpush.msra.mxu0 %v587
    %2491 = vmatpush.msra.mxu0 %v579
    %2492 = vmatpush.msra.mxu0 %v571
    %2493 = vmatpush.msra.mxu0 %v563
    %2494 = vmatpush.msra.mxu0 %v555
    %2495 = vmatpush.msra.mxu0 %v547
    %2496 = vmatpush.msra.mxu0 %v539
    %2497 = vmatpush.msra.mxu0 %v531
    %2498 = vmatpush.msra.mxu0 %v523
    %2499 = vmatpush.msra.mxu0 %v515
    %2500 = vmatpush.msra.mxu0 %v507
    %2501 = vmatpush.msra.mxu0 %v499
    %2502 = vmatpush.msra.mxu0 %v491
    %2503 = vmatmul.f32.gmra.mxu0 %v477
    %v2504 = vpop.f32.mrf.mxu0
    %v2505 = vadd.f32 %v1517, %v2504
    %2506 = vdwg.mxu0
    %2507 = vmatpush.msra.mxu0 %v739
    %2508 = vmatpush.msra.mxu0 %v731
    %2509 = vmatpush.msra.mxu0 %v723
    %2510 = vmatpush.msra.mxu0 %v715
    %2511 = vmatpush.msra.mxu0 %v707
    %2512 = vmatpush.msra.mxu0 %v699
    %2513 = vmatpush.msra.mxu0 %v691
    %2514 = vmatpush.msra.mxu0 %v683
    %2515 = vmatpush.msra.mxu0 %v675
    %2516 = vmatpush.msra.mxu0 %v667
    %2517 = vmatpush.msra.mxu0 %v659
    %2518 = vmatpush.msra.mxu0 %v651
    %2519 = vmatpush.msra.mxu0 %v643
    %2520 = vmatpush.msra.mxu0 %v635
    %2521 = vmatpush.msra.mxu0 %v627
    %2522 = vmatpush.msra.mxu0 %v619
    %2523 = vmatmul.f32.gmra.mxu0 %v478
    %v2524 = vpop.f32.mrf.mxu0
    %v2525 = vadd.f32 %v2505, %v2524
    %2526 = vdwg.mxu0
    %2527 = vmatpush.msra.mxu0 %v867
    %2528 = vmatpush.msra.mxu0 %v859
    %2529 = vmatpush.msra.mxu0 %v851
    %2530 = vmatpush.msra.mxu0 %v843
    %2531 = vmatpush.msra.mxu0 %v835
    %2532 = vmatpush.msra.mxu0 %v827
    %2533 = vmatpush.msra.mxu0 %v819
    %2534 = vmatpush.msra.mxu0 %v811
    %2535 = vmatpush.msra.mxu0 %v803
    %2536 = vmatpush.msra.mxu0 %v795
    %2537 = vmatpush.msra.mxu0 %v787
    %2538 = vmatpush.msra.mxu0 %v779
    %2539 = vmatpush.msra.mxu0 %v771
    %2540 = vmatpush.msra.mxu0 %v763
    %2541 = vmatpush.msra.mxu0 %v755
    %2542 = vmatpush.msra.mxu0 %v747
    %2543 = vmatmul.f32.gmra.mxu0 %v479
    %v2544 = vpop.f32.mrf.mxu0
    %v2545 = vadd.f32 %v2525, %v2544
    %2546 = vdwg.mxu0
    %2547 = vmatpush.msra.mxu0 %v995
    %2548 = vmatpush.msra.mxu0 %v987
    %2549 = vmatpush.msra.mxu0 %v979
    %2550 = vmatpush.msra.mxu0 %v971
    %2551 = vmatpush.msra.mxu0 %v963
    %2552 = vmatpush.msra.mxu0 %v955
    %2553 = vmatpush.msra.mxu0 %v947
    %2554 = vmatpush.msra.mxu0 %v939
    %2555 = vmatpush.msra.mxu0 %v931
    %2556 = vmatpush.msra.mxu0 %v923
    %2557 = vmatpush.msra.mxu0 %v915
    %2558 = vmatpush.msra.mxu0 %v907
    %2559 = vmatpush.msra.mxu0 %v899
    %2560 = vmatpush.msra.mxu0 %v891
    %2561 = vmatpush.msra.mxu0 %v883
    %2562 = vmatpush.msra.mxu0 %v875
    %2563 = vmatmul.f32.gmra.mxu0 %v480
    %v2564 = vpop.f32.mrf.mxu0
    %v2565 = vadd.f32 %v2545, %v2564
    %2566 = vdwg.mxu0
    %2567 = vmatpush.msra.mxu0 %v1123
    %2568 = vmatpush.msra.mxu0 %v1115
    %2569 = vmatpush.msra.mxu0 %v1107
    %2570 = vmatpush.msra.mxu0 %v1099
    %2571 = vmatpush.msra.mxu0 %v1091
    %2572 = vmatpush.msra.mxu0 %v1083
    %2573 = vmatpush.msra.mxu0 %v1075
    %2574 = vmatpush.msra.mxu0 %v1067
    %2575 = vmatpush.msra.mxu0 %v1059
    %2576 = vmatpush.msra.mxu0 %v1051
    %2577 = vmatpush.msra.mxu0 %v1043
    %2578 = vmatpush.msra.mxu0 %v1035
    %2579 = vmatpush.msra.mxu0 %v1027
    %2580 = vmatpush.msra.mxu0 %v1019
    %2581 = vmatpush.msra.mxu0 %v1011
    %2582 = vmatpush.msra.mxu0 %v1003
    %2583 = vmatmul.f32.gmra.mxu0 %v481
    %v2584 = vpop.f32.mrf.mxu0
    %v2585 = vadd.f32 %v2565, %v2584
    %2586 = vdwg.mxu0
    %2587 = vmatpush.msra.mxu0 %v1251
    %2588 = vmatpush.msra.mxu0 %v1243
    %2589 = vmatpush.msra.mxu0 %v1235
    %2590 = vmatpush.msra.mxu0 %v1227
    %2591 = vmatpush.msra.mxu0 %v1219
    %2592 = vmatpush.msra.mxu0 %v1211
    %2593 = vmatpush.msra.mxu0 %v1203
    %2594 = vmatpush.msra.mxu0 %v1195
    %2595 = vmatpush.msra.mxu0 %v1187
    %2596 = vmatpush.msra.mxu0 %v1179
    %2597 = vmatpush.msra.mxu0 %v1171
    %2598 = vmatpush.msra.mxu0 %v1163
    %2599 = vmatpush.msra.mxu0 %v1155
    %2600 = vmatpush.msra.mxu0 %v1147
    %2601 = vmatpush.msra.mxu0 %v1139
    %2602 = vmatpush.msra.mxu0 %v1131
    %2603 = vmatmul.f32.gmra.mxu0 %v482
    %v2604 = vpop.f32.mrf.mxu0
    %v2605 = vadd.f32 %v2585, %v2604
    %2606 = vdwg.mxu0
    %2607 = vmatpush.msra.mxu0 %v1379
    %2608 = vmatpush.msra.mxu0 %v1371
    %2609 = vmatpush.msra.mxu0 %v1363
    %2610 = vmatpush.msra.mxu0 %v1355
    %2611 = vmatpush.msra.mxu0 %v1347
    %2612 = vmatpush.msra.mxu0 %v1339
    %2613 = vmatpush.msra.mxu0 %v1331
    %2614 = vmatpush.msra.mxu0 %v1323
    %2615 = vmatpush.msra.mxu0 %v1315
    %2616 = vmatpush.msra.mxu0 %v1307
    %2617 = vmatpush.msra.mxu0 %v1299
    %2618 = vmatpush.msra.mxu0 %v1291
    %2619 = vmatpush.msra.mxu0 %v1283
    %2620 = vmatpush.msra.mxu0 %v1275
    %2621 = vmatpush.msra.mxu0 %v1267
    %2622 = vmatpush.msra.mxu0 %v1259
    %2623 = vmatmul.f32.gmra.mxu0 %v483
    %v2624 = vpop.f32.mrf.mxu0
    %v2625 = vadd.f32 %v2605, %v2624
    %2626 = vdwg.mxu0
    %2627 = vmatpush.msra.mxu0 %v1507
    %2628 = vmatpush.msra.mxu0 %v1499
    %2629 = vmatpush.msra.mxu0 %v1491
    %2630 = vmatpush.msra.mxu0 %v1483
    %2631 = vmatpush.msra.mxu0 %v1475
    %2632 = vmatpush.msra.mxu0 %v1467
    %2633 = vmatpush.msra.mxu0 %v1459
    %2634 = vmatpush.msra.mxu0 %v1451
    %2635 = vmatpush.msra.mxu0 %v1443
    %2636 = vmatpush.msra.mxu0 %v1435
    %2637 = vmatpush.msra.mxu0 %v1427
    %2638 = vmatpush.msra.mxu0 %v1419
    %2639 = vmatpush.msra.mxu0 %v1411
    %2640 = vmatpush.msra.mxu0 %v1403
    %2641 = vmatpush.msra.mxu0 %v1395
    %2642 = vmatpush.msra.mxu0 %v1387
    %2643 = vmatmul.f32.gmra.mxu0 %v484
    %v2644 = vpop.f32.mrf.mxu0
    %v2645 = vadd.f32 %v2625, %v2644
    %2646 = vdwg.mxu0
    %2647 = vmatpush.msra.mxu0 %v612
    %2648 = vmatpush.msra.mxu0 %v604
    %2649 = vmatpush.msra.mxu0 %v596
    %2650 = vmatpush.msra.mxu0 %v588
    %2651 = vmatpush.msra.mxu0 %v580
    %2652 = vmatpush.msra.mxu0 %v572
    %2653 = vmatpush.msra.mxu0 %v564
    %2654 = vmatpush.msra.mxu0 %v556
    %2655 = vmatpush.msra.mxu0 %v548
    %2656 = vmatpush.msra.mxu0 %v540
    %2657 = vmatpush.msra.mxu0 %v532
    %2658 = vmatpush.msra.mxu0 %v524
    %2659 = vmatpush.msra.mxu0 %v516
    %2660 = vmatpush.msra.mxu0 %v508
    %2661 = vmatpush.msra.mxu0 %v500
    %2662 = vmatpush.msra.mxu0 %v492
    %2663 = vmatmul.f32.gmra.mxu0 %v477
    %v2664 = vpop.f32.mrf.mxu0
    %v2665 = vadd.f32 %v1518, %v2664
    %2666 = vdwg.mxu0
    %2667 = vmatpush.msra.mxu0 %v740
    %2668 = vmatpush.msra.mxu0 %v732
    %2669 = vmatpush.msra.mxu0 %v724
    %2670 = vmatpush.msra.mxu0 %v716
    %2671 = vmatpush.msra.mxu0 %v708
    %2672 = vmatpush.msra.mxu0 %v700
    %2673 = vmatpush.msra.mxu0 %v692
    %2674 = vmatpush.msra.mxu0 %v684
    %2675 = vmatpush.msra.mxu0 %v676
    %2676 = vmatpush.msra.mxu0 %v668
    %2677 = vmatpush.msra.mxu0 %v660
    %2678 = vmatpush.msra.mxu0 %v652
    %2679 = vmatpush.msra.mxu0 %v644
    %2680 = vmatpush.msra.mxu0 %v636
    %2681 = vmatpush.msra.mxu0 %v628
    %2682 = vmatpush.msra.mxu0 %v620
    %2683 = vmatmul.f32.gmra.mxu0 %v478
    %v2684 = vpop.f32.mrf.mxu0
    %v2685 = vadd.f32 %v2665, %v2684
    %2686 = vdwg.mxu0
    %2687 = vmatpush.msra.mxu0 %v868
    %2688 = vmatpush.msra.mxu0 %v860
    %2689 = vmatpush.msra.mxu0 %v852
    %2690 = vmatpush.msra.mxu0 %v844
    %2691 = vmatpush.msra.mxu0 %v836
    %2692 = vmatpush.msra.mxu0 %v828
    %2693 = vmatpush.msra.mxu0 %v820
    %2694 = vmatpush.msra.mxu0 %v812
    %2695 = vmatpush.msra.mxu0 %v804
    %2696 = vmatpush.msra.mxu0 %v796
    %2697 = vmatpush.msra.mxu0 %v788
    %2698 = vmatpush.msra.mxu0 %v780
    %2699 = vmatpush.msra.mxu0 %v772
    %2700 = vmatpush.msra.mxu0 %v764
    %2701 = vmatpush.msra.mxu0 %v756
    %2702 = vmatpush.msra.mxu0 %v748
    %2703 = vmatmul.f32.gmra.mxu0 %v479
    %v2704 = vpop.f32.mrf.mxu0
    %v2705 = vadd.f32 %v2685, %v2704
    %2706 = vdwg.mxu0
    %2707 = vmatpush.msra.mxu0 %v996
    %2708 = vmatpush.msra.mxu0 %v988
    %2709 = vmatpush.msra.mxu0 %v980
    %2710 = vmatpush.msra.mxu0 %v972
    %2711 = vmatpush.msra.mxu0 %v964
    %2712 = vmatpush.msra.mxu0 %v956
    %2713 = vmatpush.msra.mxu0 %v948
    %2714 = vmatpush.msra.mxu0 %v940
    %2715 = vmatpush.msra.mxu0 %v932
    %2716 = vmatpush.msra.mxu0 %v924
    %2717 = vmatpush.msra.mxu0 %v916
    %2718 = vmatpush.msra.mxu0 %v908
    %2719 = vmatpush.msra.mxu0 %v900
    %2720 = vmatpush.msra.mxu0 %v892
    %2721 = vmatpush.msra.mxu0 %v884
    %2722 = vmatpush.msra.mxu0 %v876
    %2723 = vmatmul.f32.gmra.mxu0 %v480
    %v2724 = vpop.f32.mrf.mxu0
    %v2725 = vadd.f32 %v2705, %v2724
    %2726 = vdwg.mxu0
    %2727 = vmatpush.msra.mxu0 %v1124
    %2728 = vmatpush.msra.mxu0 %v1116
    %2729 = vmatpush.msra.mxu0 %v1108
    %2730 = vmatpush.msra.mxu0 %v1100
    %2731 = vmatpush.msra.mxu0 %v1092
    %2732 = vmatpush.msra.mxu0 %v1084
    %2733 = vmatpush.msra.mxu0 %v1076
    %2734 = vmatpush.msra.mxu0 %v1068
    %2735 = vmatpush.msra.mxu0 %v1060
    %2736 = vmatpush.msra.mxu0 %v1052
    %2737 = vmatpush.msra.mxu0 %v1044
    %2738 = vmatpush.msra.mxu0 %v1036
    %2739 = vmatpush.msra.mxu0 %v1028
    %2740 = vmatpush.msra.mxu0 %v1020
    %2741 = vmatpush.msra.mxu0 %v1012
    %2742 = vmatpush.msra.mxu0 %v1004
    %2743 = vmatmul.f32.gmra.mxu0 %v481
    %v2744 = vpop.f32.mrf.mxu0
    %v2745 = vadd.f32 %v2725, %v2744
    %2746 = vdwg.mxu0
    %2747 = vmatpush.msra.mxu0 %v1252
    %2748 = vmatpush.msra.mxu0 %v1244
    %2749 = vmatpush.msra.mxu0 %v1236
    %2750 = vmatpush.msra.mxu0 %v1228
    %2751 = vmatpush.msra.mxu0 %v1220
    %2752 = vmatpush.msra.mxu0 %v1212
    %2753 = vmatpush.msra.mxu0 %v1204
    %2754 = vmatpush.msra.mxu0 %v1196
    %2755 = vmatpush.msra.mxu0 %v1188
    %2756 = vmatpush.msra.mxu0 %v1180
    %2757 = vmatpush.msra.mxu0 %v1172
    %2758 = vmatpush.msra.mxu0 %v1164
    %2759 = vmatpush.msra.mxu0 %v1156
    %2760 = vmatpush.msra.mxu0 %v1148
    %2761 = vmatpush.msra.mxu0 %v1140
    %2762 = vmatpush.msra.mxu0 %v1132
    %2763 = vmatmul.f32.gmra.mxu0 %v482
    %v2764 = vpop.f32.mrf.mxu0
    %v2765 = vadd.f32 %v2745, %v2764
    %2766 = vdwg.mxu0
    %2767 = vmatpush.msra.mxu0 %v1380
    %2768 = vmatpush.msra.mxu0 %v1372
    %2769 = vmatpush.msra.mxu0 %v1364
    %2770 = vmatpush.msra.mxu0 %v1356
    %2771 = vmatpush.msra.mxu0 %v1348
    %2772 = vmatpush.msra.mxu0 %v1340
    %2773 = vmatpush.msra.mxu0 %v1332
    %2774 = vmatpush.msra.mxu0 %v1324
    %2775 = vmatpush.msra.mxu0 %v1316
    %2776 = vmatpush.msra.mxu0 %v1308
    %2777 = vmatpush.msra.mxu0 %v1300
    %2778 = vmatpush.msra.mxu0 %v1292
    %2779 = vmatpush.msra.mxu0 %v1284
    %2780 = vmatpush.msra.mxu0 %v1276
    %2781 = vmatpush.msra.mxu0 %v1268
    %2782 = vmatpush.msra.mxu0 %v1260
    %2783 = vmatmul.f32.gmra.mxu0 %v483
    %v2784 = vpop.f32.mrf.mxu0
    %v2785 = vadd.f32 %v2765, %v2784
    %2786 = vdwg.mxu0
    %2787 = vmatpush.msra.mxu0 %v1508
    %2788 = vmatpush.msra.mxu0 %v1500
    %2789 = vmatpush.msra.mxu0 %v1492
    %2790 = vmatpush.msra.mxu0 %v1484
    %2791 = vmatpush.msra.mxu0 %v1476
    %2792 = vmatpush.msra.mxu0 %v1468
    %2793 = vmatpush.msra.mxu0 %v1460
    %2794 = vmatpush.msra.mxu0 %v1452
    %2795 = vmatpush.msra.mxu0 %v1444
    %2796 = vmatpush.msra.mxu0 %v1436
    %2797 = vmatpush.msra.mxu0 %v1428
    %2798 = vmatpush.msra.mxu0 %v1420
    %2799 = vmatpush.msra.mxu0 %v1412
    %2800 = vmatpush.msra.mxu0 %v1404
    %2801 = vmatpush.msra.mxu0 %v1396
    %2802 = vmatpush.msra.mxu0 %v1388
    %2803 = vmatmul.f32.gmra.mxu0 %v484
    %v2804 = vpop.f32.mrf.mxu0
    %v2805 = vadd.f32 %v2785, %v2804
    %2806 = vdwg.mxu0
    %v2807 = vmax.f32 %v1685, 0.0
    %v2808 = vmax.f32 %v1845, 0.0
    %v2809 = vmax.f32 %v2005, 0.0
    %v2810 = vmax.f32 %v2165, 0.0
    %v2811 = vmax.f32 %v2325, 0.0
    %v2812 = vmax.f32 %v2485, 0.0
    %v2813 = vmax.f32 %v2645, 0.0
    %v2814 = vmax.f32 %v2805, 0.0
    %v2815 = vmul.f32 %v1685, 1.442695
    %v2816 = vpow.pop %v2815
    %v2817 = vmul.f32 %v1845, 1.442695
    %v2818 = vpow.pop %v2817
    %v2819 = vmul.f32 %v2005, 1.442695
    %v2820 = vpow.pop %v2819
    %v2821 = vmul.f32 %v2165, 1.442695
    %v2822 = vpow.pop %v2821
    %v2823 = vmul.f32 %v2325, 1.442695
    %v2824 = vpow.pop %v2823
    %v2825 = vmul.f32 %v2485, 1.442695
    %v2826 = vpow.pop %v2825
    %v2827 = vmul.f32 %v2645, 1.442695
    %v2828 = vpow.pop %v2827
    %v2829 = vmul.f32 %v2805, 1.442695
    %v2830 = vpow.pop %v2829
    %v2831 = vsub.f32 %v2816, 1.0
    %v2832 = vsub.f32 %v2818, 1.0
    %v2833 = vsub.f32 %v2820, 1.0
    %v2834 = vsub.f32 %v2822, 1.0
    %v2835 = vsub.f32 %v2824, 1.0
    %v2836 = vsub.f32 %v2826, 1.0
    %v2837 = vsub.f32 %v2828, 1.0
    %v2838 = vsub.f32 %v2830, 1.0
    %v2839 = vmul.f32 %v2831, 1.6732632
    %v2840 = vmul.f32 %v2832, 1.6732632
    %v2841 = vmul.f32 %v2833, 1.6732632
    %v2842 = vmul.f32 %v2834, 1.6732632
    %v2843 = vmul.f32 %v2835, 1.6732632
    %v2844 = vmul.f32 %v2836, 1.6732632
    %v2845 = vmul.f32 %v2837, 1.6732632
    %v2846 = vmul.f32 %v2838, 1.6732632
    %v2847 = vmin.f32 %v2839, 0.0
    %v2848 = vmin.f32 %v2840, 0.0
    %v2849 = vmin.f32 %v2841, 0.0
    %v2850 = vmin.f32 %v2842, 0.0
    %v2851 = vmin.f32 %v2843, 0.0
    %v2852 = vmin.f32 %v2844, 0.0
    %v2853 = vmin.f32 %v2845, 0.0
    %v2854 = vmin.f32 %v2846, 0.0
    %v2855 = vadd.f32 %v2807, %v2847
    %v2856 = vadd.f32 %v2808, %v2848
    %v2857 = vadd.f32 %v2809, %v2849
    %v2858 = vadd.f32 %v2810, %v2850
    %v2859 = vadd.f32 %v2811, %v2851
    %v2860 = vadd.f32 %v2812, %v2852
    %v2861 = vadd.f32 %v2813, %v2853
    %v2862 = vadd.f32 %v2814, %v2854
    %v2863 = vmul.f32 %v2855, 1.050701
    %v2864 = vmul.f32 %v2856, 1.050701
    %v2865 = vmul.f32 %v2857, 1.050701
    %v2866 = vmul.f32 %v2858, 1.050701
    %v2867 = vmul.f32 %v2859, 1.050701
    %v2868 = vmul.f32 %v2860, 1.050701
    %v2869 = vmul.f32 %v2861, 1.050701
    %v2870 = vmul.f32 %v2862, 1.050701
    %v2871 = vld [vmem:[#allocation9] sm:$0xff]
    %v2872 = vld [vmem:[#allocation9 + $0x8] sm:$0xff]
    %v2873 = vld [vmem:[#allocation9 + $0x10] sm:$0xff]
    %v2874 = vld [vmem:[#allocation9 + $0x18] sm:$0xff]
    %v2875 = vld [vmem:[#allocation9 + $0x20] sm:$0xff]
    %v2876 = vld [vmem:[#allocation9 + $0x28] sm:$0xff]
    %v2877 = vld [vmem:[#allocation9 + $0x30] sm:$0xff]
    %v2878 = vld [vmem:[#allocation9 + $0x38] sm:$0xff]
    %v2879 = vld [vmem:[#allocation9 + $0x40] sm:$0xff]
    %v2880 = vld [vmem:[#allocation9 + $0x48] sm:$0xff]
    %v2881 = vld [vmem:[#allocation9 + $0x50] sm:$0xff]
    %v2882 = vld [vmem:[#allocation9 + $0x58] sm:$0xff]
    %v2883 = vld [vmem:[#allocation9 + $0x60] sm:$0xff]
    %v2884 = vld [vmem:[#allocation9 + $0x68] sm:$0xff]
    %v2885 = vld [vmem:[#allocation9 + $0x70] sm:$0xff]
    %v2886 = vld [vmem:[#allocation9 + $0x78] sm:$0xff]
    %v2887 = vld [vmem:[#allocation9 + $0x80] sm:$0xff]
    %v2888 = vld [vmem:[#allocation9 + $0x88] sm:$0xff]
    %v2889 = vld [vmem:[#allocation9 + $0x90] sm:$0xff]
    %v2890 = vld [vmem:[#allocation9 + $0x98] sm:$0xff]
    %v2891 = vld [vmem:[#allocation9 + $0xa0] sm:$0xff]
    %v2892 = vld [vmem:[#allocation9 + $0xa8] sm:$0xff]
    %v2893 = vld [vmem:[#allocation9 + $0xb0] sm:$0xff]
    %v2894 = vld [vmem:[#allocation9 + $0xb8] sm:$0xff]
    %v2895 = vld [vmem:[#allocation9 + $0xc0] sm:$0xff]
    %v2896 = vld [vmem:[#allocation9 + $0xc8] sm:$0xff]
    %v2897 = vld [vmem:[#allocation9 + $0xd0] sm:$0xff]
    %v2898 = vld [vmem:[#allocation9 + $0xd8] sm:$0xff]
    %v2899 = vld [vmem:[#allocation9 + $0xe0] sm:$0xff]
    %v2900 = vld [vmem:[#allocation9 + $0xe8] sm:$0xff]
    %v2901 = vld [vmem:[#allocation9 + $0xf0] sm:$0xff]
    %v2902 = vld [vmem:[#allocation9 + $0xf8] sm:$0xff]
    %v2903 = vld [vmem:[#allocation9 + $0x100] sm:$0xff]
    %v2904 = vld [vmem:[#allocation9 + $0x108] sm:$0xff]
    %v2905 = vld [vmem:[#allocation9 + $0x110] sm:$0xff]
    %v2906 = vld [vmem:[#allocation9 + $0x118] sm:$0xff]
    %v2907 = vld [vmem:[#allocation9 + $0x120] sm:$0xff]
    %v2908 = vld [vmem:[#allocation9 + $0x128] sm:$0xff]
    %v2909 = vld [vmem:[#allocation9 + $0x130] sm:$0xff]
    %v2910 = vld [vmem:[#allocation9 + $0x138] sm:$0xff]
    %v2911 = vld [vmem:[#allocation9 + $0x140] sm:$0xff]
    %v2912 = vld [vmem:[#allocation9 + $0x148] sm:$0xff]
    %v2913 = vld [vmem:[#allocation9 + $0x150] sm:$0xff]
    %v2914 = vld [vmem:[#allocation9 + $0x158] sm:$0xff]
    %v2915 = vld [vmem:[#allocation9 + $0x160] sm:$0xff]
    %v2916 = vld [vmem:[#allocation9 + $0x168] sm:$0xff]
    %v2917 = vld [vmem:[#allocation9 + $0x170] sm:$0xff]
    %v2918 = vld [vmem:[#allocation9 + $0x178] sm:$0xff]
    %v2919 = vld [vmem:[#allocation9 + $0x180] sm:$0xff]
    %v2920 = vld [vmem:[#allocation9 + $0x188] sm:$0xff]
    %v2921 = vld [vmem:[#allocation9 + $0x190] sm:$0xff]
    %v2922 = vld [vmem:[#allocation9 + $0x198] sm:$0xff]
    %v2923 = vld [vmem:[#allocation9 + $0x1a0] sm:$0xff]
    %v2924 = vld [vmem:[#allocation9 + $0x1a8] sm:$0xff]
    %v2925 = vld [vmem:[#allocation9 + $0x1b0] sm:$0xff]
    %v2926 = vld [vmem:[#allocation9 + $0x1b8] sm:$0xff]
    %v2927 = vld [vmem:[#allocation9 + $0x1c0] sm:$0xff]
    %v2928 = vld [vmem:[#allocation9 + $0x1c8] sm:$0xff]
    %v2929 = vld [vmem:[#allocation9 + $0x1d0] sm:$0xff]
    %v2930 = vld [vmem:[#allocation9 + $0x1d8] sm:$0xff]
    %v2931 = vld [vmem:[#allocation9 + $0x1e0] sm:$0xff]
    %v2932 = vld [vmem:[#allocation9 + $0x1e8] sm:$0xff]
    %v2933 = vld [vmem:[#allocation9 + $0x1f0] sm:$0xff]
    %v2934 = vld [vmem:[#allocation9 + $0x1f8] sm:$0xff]
    %v2935 = vld [vmem:[#allocation9 + $0x200] sm:$0xff]
    %v2936 = vld [vmem:[#allocation9 + $0x208] sm:$0xff]
    %v2937 = vld [vmem:[#allocation9 + $0x210] sm:$0xff]
    %v2938 = vld [vmem:[#allocation9 + $0x218] sm:$0xff]
    %v2939 = vld [vmem:[#allocation9 + $0x220] sm:$0xff]
    %v2940 = vld [vmem:[#allocation9 + $0x228] sm:$0xff]
    %v2941 = vld [vmem:[#allocation9 + $0x230] sm:$0xff]
    %v2942 = vld [vmem:[#allocation9 + $0x238] sm:$0xff]
    %v2943 = vld [vmem:[#allocation9 + $0x240] sm:$0xff]
    %v2944 = vld [vmem:[#allocation9 + $0x248] sm:$0xff]
    %v2945 = vld [vmem:[#allocation9 + $0x250] sm:$0xff]
    %v2946 = vld [vmem:[#allocation9 + $0x258] sm:$0xff]
    %v2947 = vld [vmem:[#allocation9 + $0x260] sm:$0xff]
    %v2948 = vld [vmem:[#allocation9 + $0x268] sm:$0xff]
    %v2949 = vld [vmem:[#allocation9 + $0x270] sm:$0xff]
    %v2950 = vld [vmem:[#allocation9 + $0x278] sm:$0xff]
    %v2951 = vld [vmem:[#allocation9 + $0x280] sm:$0xff]
    %v2952 = vld [vmem:[#allocation9 + $0x288] sm:$0xff]
    %v2953 = vld [vmem:[#allocation9 + $0x290] sm:$0xff]
    %v2954 = vld [vmem:[#allocation9 + $0x298] sm:$0xff]
    %v2955 = vld [vmem:[#allocation9 + $0x2a0] sm:$0xff]
    %v2956 = vld [vmem:[#allocation9 + $0x2a8] sm:$0xff]
    %v2957 = vld [vmem:[#allocation9 + $0x2b0] sm:$0xff]
    %v2958 = vld [vmem:[#allocation9 + $0x2b8] sm:$0xff]
    %v2959 = vld [vmem:[#allocation9 + $0x2c0] sm:$0xff]
    %v2960 = vld [vmem:[#allocation9 + $0x2c8] sm:$0xff]
    %v2961 = vld [vmem:[#allocation9 + $0x2d0] sm:$0xff]
    %v2962 = vld [vmem:[#allocation9 + $0x2d8] sm:$0xff]
    %v2963 = vld [vmem:[#allocation9 + $0x2e0] sm:$0xff]
    %v2964 = vld [vmem:[#allocation9 + $0x2e8] sm:$0xff]
    %v2965 = vld [vmem:[#allocation9 + $0x2f0] sm:$0xff]
    %v2966 = vld [vmem:[#allocation9 + $0x2f8] sm:$0xff]
    %v2967 = vld [vmem:[#allocation9 + $0x300] sm:$0xff]
    %v2968 = vld [vmem:[#allocation9 + $0x308] sm:$0xff]
    %v2969 = vld [vmem:[#allocation9 + $0x310] sm:$0xff]
    %v2970 = vld [vmem:[#allocation9 + $0x318] sm:$0xff]
    %v2971 = vld [vmem:[#allocation9 + $0x320] sm:$0xff]
    %v2972 = vld [vmem:[#allocation9 + $0x328] sm:$0xff]
    %v2973 = vld [vmem:[#allocation9 + $0x330] sm:$0xff]
    %v2974 = vld [vmem:[#allocation9 + $0x338] sm:$0xff]
    %v2975 = vld [vmem:[#allocation9 + $0x340] sm:$0xff]
    %v2976 = vld [vmem:[#allocation9 + $0x348] sm:$0xff]
    %v2977 = vld [vmem:[#allocation9 + $0x350] sm:$0xff]
    %v2978 = vld [vmem:[#allocation9 + $0x358] sm:$0xff]
    %v2979 = vld [vmem:[#allocation9 + $0x360] sm:$0xff]
    %v2980 = vld [vmem:[#allocation9 + $0x368] sm:$0xff]
    %v2981 = vld [vmem:[#allocation9 + $0x370] sm:$0xff]
    %v2982 = vld [vmem:[#allocation9 + $0x378] sm:$0xff]
    %v2983 = vld [vmem:[#allocation9 + $0x380] sm:$0xff]
    %v2984 = vld [vmem:[#allocation9 + $0x388] sm:$0xff]
    %v2985 = vld [vmem:[#allocation9 + $0x390] sm:$0xff]
    %v2986 = vld [vmem:[#allocation9 + $0x398] sm:$0xff]
    %v2987 = vld [vmem:[#allocation9 + $0x3a0] sm:$0xff]
    %v2988 = vld [vmem:[#allocation9 + $0x3a8] sm:$0xff]
    %v2989 = vld [vmem:[#allocation9 + $0x3b0] sm:$0xff]
    %v2990 = vld [vmem:[#allocation9 + $0x3b8] sm:$0xff]
    %v2991 = vld [vmem:[#allocation9 + $0x3c0] sm:$0xff]
    %v2992 = vld [vmem:[#allocation9 + $0x3c8] sm:$0xff]
    %v2993 = vld [vmem:[#allocation9 + $0x3d0] sm:$0xff]
    %v2994 = vld [vmem:[#allocation9 + $0x3d8] sm:$0xff]
    %v2995 = vld [vmem:[#allocation9 + $0x3e0] sm:$0xff]
    %v2996 = vld [vmem:[#allocation9 + $0x3e8] sm:$0xff]
    %v2997 = vld [vmem:[#allocation9 + $0x3f0] sm:$0xff]
    %v2998 = vld [vmem:[#allocation9 + $0x3f8] sm:$0xff]
    %v2999 = vld [vmem:[#allocation10] sm:$0x1]
    %v3001 = vperm.slane %v2999, 0
    %3003 = vmatpush.msra.mxu0 %v2886
    %3004 = vmatpush.msra.mxu0 %v2885
    %3005 = vmatpush.msra.mxu0 %v2884
    %3006 = vmatpush.msra.mxu0 %v2883
    %3007 = vmatpush.msra.mxu0 %v2882
    %3008 = vmatpush.msra.mxu0 %v2881
    %3009 = vmatpush.msra.mxu0 %v2880
    %3010 = vmatpush.msra.mxu0 %v2879
    %3011 = vmatpush.msra.mxu0 %v2878
    %3012 = vmatpush.msra.mxu0 %v2877
    %3013 = vmatpush.msra.mxu0 %v2876
    %3014 = vmatpush.msra.mxu0 %v2875
    %3015 = vmatpush.msra.mxu0 %v2874
    %3016 = vmatpush.msra.mxu0 %v2873
    %3017 = vmatpush.msra.mxu0 %v2872
    %3018 = vmatpush.msra.mxu0 %v2871
    %3019 = vmatmul.f32.gmra.mxu0 %v2863
    %v3020 = vpop.f32.mrf.mxu0
    %v3021 = vadd.f32 %v3001, %v3020
    %3022 = vdwg.mxu0
    %3023 = vmatpush.msra.mxu0 %v2902
    %3024 = vmatpush.msra.mxu0 %v2901
    %3025 = vmatpush.msra.mxu0 %v2900
    %3026 = vmatpush.msra.mxu0 %v2899
    %3027 = vmatpush.msra.mxu0 %v2898
    %3028 = vmatpush.msra.mxu0 %v2897
    %3029 = vmatpush.msra.mxu0 %v2896
    %3030 = vmatpush.msra.mxu0 %v2895
    %3031 = vmatpush.msra.mxu0 %v2894
    %3032 = vmatpush.msra.mxu0 %v2893
    %3033 = vmatpush.msra.mxu0 %v2892
    %3034 = vmatpush.msra.mxu0 %v2891
    %3035 = vmatpush.msra.mxu0 %v2890
    %3036 = vmatpush.msra.mxu0 %v2889
    %3037 = vmatpush.msra.mxu0 %v2888
    %3038 = vmatpush.msra.mxu0 %v2887
    %3039 = vmatmul.f32.gmra.mxu0 %v2864
    %v3040 = vpop.f32.mrf.mxu0
    %v3041 = vadd.f32 %v3021, %v3040
    %3042 = vdwg.mxu0
    %3043 = vmatpush.msra.mxu0 %v2918
    %3044 = vmatpush.msra.mxu0 %v2917
    %3045 = vmatpush.msra.mxu0 %v2916
    %3046 = vmatpush.msra.mxu0 %v2915
    %3047 = vmatpush.msra.mxu0 %v2914
    %3048 = vmatpush.msra.mxu0 %v2913
    %3049 = vmatpush.msra.mxu0 %v2912
    %3050 = vmatpush.msra.mxu0 %v2911
    %3051 = vmatpush.msra.mxu0 %v2910
    %3052 = vmatpush.msra.mxu0 %v2909
    %3053 = vmatpush.msra.mxu0 %v2908
    %3054 = vmatpush.msra.mxu0 %v2907
    %3055 = vmatpush.msra.mxu0 %v2906
    %3056 = vmatpush.msra.mxu0 %v2905
    %3057 = vmatpush.msra.mxu0 %v2904
    %3058 = vmatpush.msra.mxu0 %v2903
    %3059 = vmatmul.f32.gmra.mxu0 %v2865
    %v3060 = vpop.f32.mrf.mxu0
    %v3061 = vadd.f32 %v3041, %v3060
    %3062 = vdwg.mxu0
    %3063 = vmatpush.msra.mxu0 %v2934
    %3064 = vmatpush.msra.mxu0 %v2933
    %3065 = vmatpush.msra.mxu0 %v2932
    %3066 = vmatpush.msra.mxu0 %v2931
    %3067 = vmatpush.msra.mxu0 %v2930
    %3068 = vmatpush.msra.mxu0 %v2929
    %3069 = vmatpush.msra.mxu0 %v2928
    %3070 = vmatpush.msra.mxu0 %v2927
    %3071 = vmatpush.msra.mxu0 %v2926
    %3072 = vmatpush.msra.mxu0 %v2925
    %3073 = vmatpush.msra.mxu0 %v2924
    %3074 = vmatpush.msra.mxu0 %v2923
    %3075 = vmatpush.msra.mxu0 %v2922
    %3076 = vmatpush.msra.mxu0 %v2921
    %3077 = vmatpush.msra.mxu0 %v2920
    %3078 = vmatpush.msra.mxu0 %v2919
    %3079 = vmatmul.f32.gmra.mxu0 %v2866
    %v3080 = vpop.f32.mrf.mxu0
    %v3081 = vadd.f32 %v3061, %v3080
    %3082 = vdwg.mxu0
    %3083 = vmatpush.msra.mxu0 %v2950
    %3084 = vmatpush.msra.mxu0 %v2949
    %3085 = vmatpush.msra.mxu0 %v2948
    %3086 = vmatpush.msra.mxu0 %v2947
    %3087 = vmatpush.msra.mxu0 %v2946
    %3088 = vmatpush.msra.mxu0 %v2945
    %3089 = vmatpush.msra.mxu0 %v2944
    %3090 = vmatpush.msra.mxu0 %v2943
    %3091 = vmatpush.msra.mxu0 %v2942
    %3092 = vmatpush.msra.mxu0 %v2941
    %3093 = vmatpush.msra.mxu0 %v2940
    %3094 = vmatpush.msra.mxu0 %v2939
    %3095 = vmatpush.msra.mxu0 %v2938
    %3096 = vmatpush.msra.mxu0 %v2937
    %3097 = vmatpush.msra.mxu0 %v2936
    %3098 = vmatpush.msra.mxu0 %v2935
    %3099 = vmatmul.f32.gmra.mxu0 %v2867
    %v3100 = vpop.f32.mrf.mxu0
    %v3101 = vadd.f32 %v3081, %v3100
    %3102 = vdwg.mxu0
    %3103 = vmatpush.msra.mxu0 %v2966
    %3104 = vmatpush.msra.mxu0 %v2965
    %3105 = vmatpush.msra.mxu0 %v2964
    %3106 = vmatpush.msra.mxu0 %v2963
    %3107 = vmatpush.msra.mxu0 %v2962
    %3108 = vmatpush.msra.mxu0 %v2961
    %3109 = vmatpush.msra.mxu0 %v2960
    %3110 = vmatpush.msra.mxu0 %v2959
    %3111 = vmatpush.msra.mxu0 %v2958
    %3112 = vmatpush.msra.mxu0 %v2957
    %3113 = vmatpush.msra.mxu0 %v2956
    %3114 = vmatpush.msra.mxu0 %v2955
    %3115 = vmatpush.msra.mxu0 %v2954
    %3116 = vmatpush.msra.mxu0 %v2953
    %3117 = vmatpush.msra.mxu0 %v2952
    %3118 = vmatpush.msra.mxu0 %v2951
    %3119 = vmatmul.f32.gmra.mxu0 %v2868
    %v3120 = vpop.f32.mrf.mxu0
    %v3121 = vadd.f32 %v3101, %v3120
    %3122 = vdwg.mxu0
    %3123 = vmatpush.msra.mxu0 %v2982
    %3124 = vmatpush.msra.mxu0 %v2981
    %3125 = vmatpush.msra.mxu0 %v2980
    %3126 = vmatpush.msra.mxu0 %v2979
    %3127 = vmatpush.msra.mxu0 %v2978
    %3128 = vmatpush.msra.mxu0 %v2977
    %3129 = vmatpush.msra.mxu0 %v2976
    %3130 = vmatpush.msra.mxu0 %v2975
    %3131 = vmatpush.msra.mxu0 %v2974
    %3132 = vmatpush.msra.mxu0 %v2973
    %3133 = vmatpush.msra.mxu0 %v2972
    %3134 = vmatpush.msra.mxu0 %v2971
    %3135 = vmatpush.msra.mxu0 %v2970
    %3136 = vmatpush.msra.mxu0 %v2969
    %3137 = vmatpush.msra.mxu0 %v2968
    %3138 = vmatpush.msra.mxu0 %v2967
    %3139 = vmatmul.f32.gmra.mxu0 %v2869
    %v3140 = vpop.f32.mrf.mxu0
    %v3141 = vadd.f32 %v3121, %v3140
    %3142 = vdwg.mxu0
    %3143 = vmatpush.msra.mxu0 %v2998
    %3144 = vmatpush.msra.mxu0 %v2997
    %3145 = vmatpush.msra.mxu0 %v2996
    %3146 = vmatpush.msra.mxu0 %v2995
    %3147 = vmatpush.msra.mxu0 %v2994
    %3148 = vmatpush.msra.mxu0 %v2993
    %3149 = vmatpush.msra.mxu0 %v2992
    %3150 = vmatpush.msra.mxu0 %v2991
    %3151 = vmatpush.msra.mxu0 %v2990
    %3152 = vmatpush.msra.mxu0 %v2989
    %3153 = vmatpush.msra.mxu0 %v2988
    %3154 = vmatpush.msra.mxu0 %v2987
    %3155 = vmatpush.msra.mxu0 %v2986
    %3156 = vmatpush.msra.mxu0 %v2985
    %3157 = vmatpush.msra.mxu0 %v2984
    %3158 = vmatpush.msra.mxu0 %v2983
    %3159 = vmatmul.f32.gmra.mxu0 %v2870
    %v3160 = vpop.f32.mrf.mxu0
    %v3161 = vadd.f32 %v3141, %v3160
    %3162 = vdwg.mxu0
    %v3163 = vxor.u32 %v3161, 2147483648
    %v3164 = vmul.f32 %v3163, 1.442695
    %v3165 = vpow.pop %v3164
    %v3166 = vadd.f32 %v3165, 1.0
    %v3167 = vrcp.pop %v3166
    %v3168 = vmul.f32 %v3166, %v3167
    %v3169 = vsub.f32 1.0, %v3168
    %v3170 = vmul.f32 %v3167, %v3169
    %v3171 = vadd.f32 %v3167, %v3170
    %vm3172 = vweird.f32 %v3166
    %vm3173 = vweird.f32 %v3167
    %vm3174 = vmor %vm3172, %vm3173
    %v3175 = vsel %vm3174, %v3167, %v3171
    %v3176 = vand.u32 2147483647, %v3166
    %vm3177 = vcmp.eq.f32.partialorder %v3176, 8.507059e+37
    %v3178 = vand.u32 %v3166, 2147483648
    %v3179 = vor.u32 1.1754944e-38, %v3178
    %v3180 = vsel %vm3177, %v3179, %v3175
    %v3181 = vmul.f32 1.0, %v3180
    %3182 = vst [vmem:[%s7] sm:$0xff] %v3181
    // Predicated region
    $region54: #{width_mlp_forward.1} parent=1 // pred_check
      _
    $region55: #{width_mlp_forward.1} parent=1 // pred_check_branch
      %3184 = sbr.rel (0) target = $region57
    $region56: #{width_mlp_forward.1} parent=1 // pred_region
      _
    $region57: #{width_mlp_forward.1} parent=1 // pred_fallthru
      _
    // Predicated region
    $region58: #{width_mlp_forward.1} parent=1 // pred_check
      _
    $region59: #{width_mlp_forward.1} parent=1 // pred_check_branch
      %3186 = sbr.rel (0) target = $region61
    $region60: #{width_mlp_forward.1} parent=1 // pred_region
      _
    $region61: #{width_mlp_forward.1} parent=1 // pred_fallthru
      _
    %3187 = vsyncpa [#allocation3], 1
    %3188 = vsyncpa [#allocation5], 1
    %3189 = vsyncpa [#allocation8], 1
    %3190 = vsyncpa [#allocation11], 1

</llo_original>
